<compile_context>
chip_gen: v6e
topology: v6e:2x2x1
jax: 0.10.0
libtpu: 0.0.40
codegen_flags: <defaults>
</compile_context>

<pallas_src>
import jax
import jax.numpy as jnp
from jax.experimental import pallas as pl
from jax.experimental.pallas import tpu as pltpu

EPS = 1e-5  # matches nn.InstanceNorm2d default


def _resnet_block_kernel(x_ref, w1_ref, w2_ref, o_ref, slab_ref):
    # x_ref:   (1, H, W, C)  f32 VMEM tile (one batch element)
    # w*_ref:  (3, 3C, C)    bf16 weight slabs; row dy, contraction [dx*C + cin]
    # o_ref:   (1, H, W, C)  f32 output tile
    # slab_ref:(H+2, W, 3C)  bf16 scratch — W-shifted im2col slab, reused twice
    _, H, W, C = x_ref.shape

    def build_slab(y):
        # y: (H, W, C) f32. Produces slab[r, w, dx*C + c] = xp[r+0, w+dx, c]
        # where xp is the ReflectionPad2d(1)-padded image; slab rows 1..H hold
        # the interior rows, rows 0 / H+1 hold the reflected rows.
        # NOTE: rolls stay f32 (safe on v5e, XLU slot); cast happens at the
        # store into the bf16 slab.  TODO(synk): on v6e/v7x casting y to bf16
        # *before* the rolls would halve XLU/store bytes further.
        # dx = 1 chunk: the row itself.
        slab_ref[1:H + 1, :, C:2 * C] = y.astype(jnp.bfloat16)
        # dx = 0 chunk: xp[:, w] = y[:, w-1] for w >= 1 (column 0 patched below).
        slab_ref[1:H + 1, :, 0:C] = pltpu.roll(y, 1, axis=1).astype(jnp.bfloat16)
        # dx = 2 chunk: xp[:, w+2] = y[:, w+1] for w <= W-2 (col W-1 patched below).
        slab_ref[1:H + 1, :, 2 * C:3 * C] = (
            pltpu.roll(y, W - 1, axis=1).astype(jnp.bfloat16))
        # Reflection boundary columns (narrow single-column stores):
        #   xp[:, 0]   = y[:, 1]    -> left chunk, w = 0
        #   xp[:, W+1] = y[:, W-2]  -> right chunk, w = W-1
        slab_ref[1:H + 1, 0:1, 0:C] = y[:, 1:2, :].astype(jnp.bfloat16)
        slab_ref[1:H + 1, W - 1:W, 2 * C:3 * C] = (
            y[:, W - 2:W - 1, :].astype(jnp.bfloat16))
        # Reflection along H: padded row 0 = interior row 1 (slab row 2),
        # padded row H+1 = interior row H-2 (slab row H-1). Copying the
        # already-horizontally-reflected rows also handles the corners.
        slab_ref[0:1] = slab_ref[2:3]
        slab_ref[H + 1:H + 2] = slab_ref[H - 1:H]

    def conv3x3(w_ref):
        # 3 MXU matmuls of (H*W, 3C) x (3C, C); dy handled by leading-dim slices.
        # No bias: it is mathematically cancelled by the affine-free InstanceNorm.
        acc = jnp.einsum('hwk,kd->hwd', slab_ref[0:H], w_ref[0],
                         preferred_element_type=jnp.float32)
        acc = acc + jnp.einsum('hwk,kd->hwd', slab_ref[1:H + 1], w_ref[1],
                               preferred_element_type=jnp.float32)
        acc = acc + jnp.einsum('hwk,kd->hwd', slab_ref[2:H + 2], w_ref[2],
                               preferred_element_type=jnp.float32)
        return acc

    def instance_norm(y):
        # Single-pass stats: E[x], E[x^2]; rsqrt goes to the EUP slot.
        # (Variance clamped at 0; post-conv activations are well-conditioned
        #  enough for the f32 single-pass form at the target tolerance.)
        inv_n = 1.0 / (H * W)
        s = jnp.sum(y, axis=(0, 1), keepdims=True)
        ss = jnp.sum(y * y, axis=(0, 1), keepdims=True)
        mean = s * inv_n
        var = jnp.maximum(ss * inv_n - mean * mean, 0.0)
        return (y - mean) * jax.lax.rsqrt(var + EPS)

    # --- conv block ---
    build_slab(x_ref[0])
    h = jnp.maximum(instance_norm(conv3x3(w1_ref)), 0.0)   # ReLU
    # TODO(synk): use_dropout=False here; training-mode Dropout(0.5) not implemented.
    build_slab(h)
    h = instance_norm(conv3x3(w2_ref))

    # --- skip connection (re-read x from VMEM; not kept live across the convs) ---
    o_ref[0] = x_ref[0] + h


def _physical_vmem_bytes():
    # Generation-aware VMEM capacity (v5e/v6e: 128 MiB, v7x: 64 MiB per TC).
    try:
        cap = getattr(pltpu.get_tpu_info(), "vmem_capacity_bytes", None)
        if cap:
            return int(cap)
    except Exception:
        pass
    return 64 * 1024 * 1024  # conservative fallback (v7x per-TC VMEM)


def _vmem_limit_bytes(C, H, W):
    f32, bf16 = 4, 2
    io = 2 * (H * W * C * f32) * 2                       # x + out, double-buffered
    slab = (H + 2) * W * 3 * C * bf16                    # im2col scratch
    wts = 2 * 2 * (3 * 3 * C * C * bf16)                 # weight slabs, double-buffered
    live = 6 * H * W * C * f32                           # headroom for f32 intermediates
    need = io + slab + wts + live
    cap = _physical_vmem_bytes()
    # at least 32 MiB, and keep ~12% headroom under the physical capacity
    return int(min(max(2 * need, 32 * 1024 * 1024), int(cap * 0.875)))


def resnet_block_nhwc(x_nhwc, w1_oihw, b1, w2_oihw, b2):
    """NHWC entry point — use this to keep a stack of blocks NHWC end-to-end.

    b1/b2 are accepted for API parity but are NOT used: conv bias followed by
    an affine-free InstanceNorm is a mathematical no-op.
    """
    del b1, b2
    N, H, W, C = x_nhwc.shape
    # TODO(synk): this layout puts C in the lane dim; for C < 128 (like the
    # demo) lane/MXU utilization is poor — repack with H*W in lanes for small C.

    def prep_w(w_oihw):
        # OIHW -> HWIO -> (dy, dx*C + cin, cout) bf16 slab for the 3C-contraction matmul.
        w_hwio = jnp.transpose(w_oihw, (2, 3, 1, 0))               # (3, 3, Cin, Cout)
        return w_hwio.reshape(3, 3 * C, C).astype(jnp.bfloat16)

    w1 = prep_w(w1_oihw)
    w2 = prep_w(w2_oihw)

    # TODO(synk): for v7x (2 TensorCores) with N=1, add an H-stripe 'parallel'
    # grid axis with a two-pass instance norm to use both cores and keep tiles
    # under the 64 MiB VMEM cap at large H*W*C.
    # TODO(synk): weight slabs could use pipeline_mode=pl.Buffered(1) (constant
    # index_map) to reclaim their double-buffer VMEM on v7x.
    out = pl.pallas_call(
        _resnet_block_kernel,
        out_shape=jax.ShapeDtypeStruct((N, H, W, C), jnp.float32),
        grid_spec=pltpu.PrefetchScalarGridSpec(
            num_scalar_prefetch=0,
            grid=(N,),
            in_specs=[
                pl.BlockSpec((1, H, W, C), lambda n: (n, 0, 0, 0)),
                pl.BlockSpec((3, 3 * C, C), lambda n: (0, 0, 0)),
                pl.BlockSpec((3, 3 * C, C), lambda n: (0, 0, 0)),
            ],
            out_specs=pl.BlockSpec((1, H, W, C), lambda n: (n, 0, 0, 0)),
            scratch_shapes=[pltpu.VMEM((H + 2, W, 3 * C), jnp.bfloat16)],
        ),
        compiler_params=pltpu.CompilerParams(
            dimension_semantics=("parallel",),
            vmem_limit_bytes=_vmem_limit_bytes(C, H, W)),
    )(x_nhwc, w1, w2)
    return out


def resnet_block(x_nchw, w1_oihw, b1, w2_oihw, b2):
    """PyTorch-layout wrapper: (N, C, H, W) f32 in/out, OIHW weights, (C,) bias.

    Note: when stacking many blocks, prefer resnet_block_nhwc and transpose
    only at the model boundary (the NCHW<->NHWC transposes are full HBM passes).
    """
    x = jnp.transpose(x_nchw, (0, 2, 3, 1))                        # NHWC, f32
    out = resnet_block_nhwc(x, w1_oihw, b1, w2_oihw, b2)
    return jnp.transpose(out, (0, 3, 1, 2))                        # back to NCHW


def resnet_block_reference(x_nchw, w1_oihw, b1, w2_oihw, b2):
    """Pure-JAX f32 reference (same semantics as the PyTorch module, bias included)."""
    x = jnp.transpose(x_nchw, (0, 2, 3, 1))

    def conv(y, w_oihw, b):
        yp = jnp.pad(y, ((0, 0), (1, 1), (1, 1), (0, 0)), mode='reflect')
        out = jax.lax.conv_general_dilated(
            yp, jnp.transpose(w_oihw, (2, 3, 1, 0)), (1, 1), 'VALID',
            dimension_numbers=('NHWC', 'HWIO', 'NHWC'))
        return out + b.reshape(1, 1, 1, -1)

    def inorm(y):
        m = jnp.mean(y, axis=(1, 2), keepdims=True)
        v = jnp.mean((y - m) ** 2, axis=(1, 2), keepdims=True)
        return (y - m) * jax.lax.rsqrt(v + EPS)

    h = jnp.maximum(inorm(conv(x, w1_oihw, b1)), 0.0)
    h = inorm(conv(h, w2_oihw, b2))
    return jnp.transpose(x + h, (0, 3, 1, 2))


if __name__ == "__main__":
    key = jax.random.PRNGKey(0)
    k_x, k_w1, k_b1, k_w2, k_b2 = jax.random.split(key, 5)

    N, C, H, W = 2, 4, 16, 16
    x = jax.random.normal(k_x, (N, C, H, W), dtype=jnp.float32)
    # Conv2d(dim, dim, kernel_size=3, bias=True) -> weight (C, C, 3, 3), bias (C,)
    w1 = 0.1 * jax.random.normal(k_w1, (C, C, 3, 3), dtype=jnp.float32)
    b1 = 0.1 * jax.random.normal(k_b1, (C,), dtype=jnp.float32)
    w2 = 0.1 * jax.random.normal(k_w2, (C, C, 3, 3), dtype=jnp.float32)
    b2 = 0.1 * jax.random.normal(k_b2, (C,), dtype=jnp.float32)

    out = resnet_block(x, w1, b1, w2, b2)
    out = jax.block_until_ready(out)

    ref = resnet_block_reference(x, w1, b1, w2, b2)
    assert out.shape == (N, C, H, W)
    # Conv inputs/weights are bf16 on the MXU; tolerance loosened accordingly.
    assert jnp.allclose(out, ref, atol=3e-2, rtol=3e-2), (
        f"max abs err = {jnp.max(jnp.abs(out - ref))}")

    print("KERNEL_OK")
</pallas_src>

<mosaic_0001>
module attributes {stable_mosaic.version = 11 : i64} {
  func.func @_resnet_block_kernel(%arg0: i32, %arg1: memref<1x16x16x4xf32, #tpu.memory_space<vmem>>, %arg2: memref<3x12x4xbf16, #tpu.memory_space<vmem>>, %arg3: memref<3x12x4xbf16, #tpu.memory_space<vmem>>, %arg4: memref<1x16x16x4xf32, #tpu.memory_space<vmem>>, %arg5: memref<18x16x12xbf16, #tpu.memory_space<vmem>>) attributes {dimension_semantics = [#tpu.dimension_semantics<parallel>], iteration_bounds = array<i64: 2>, scalar_prefetch = 0 : i64, scratch_operands = 1 : i64, tpu.core_type = #tpu.core_type<tc>, window_params = [{transform_indices = @transform_0, window_bounds = array<i64: 1, 16, 16, 4>}, {pipeline_mode = #tpu.pipeline_mode<synchronous>, transform_indices = @transform_1, window_bounds = array<i64: 3, 12, 4>}, {pipeline_mode = #tpu.pipeline_mode<synchronous>, transform_indices = @transform_2, window_bounds = array<i64: 3, 12, 4>}, {transform_indices = @transform_3, window_bounds = array<i64: 1, 16, 16, 4>}]} {
    %c0 = arith.constant 0 : index
    %c0_0 = arith.constant 0 : index
    %c0_1 = arith.constant 0 : index
    %c0_2 = arith.constant 0 : index
    %0 = vector.load %arg1[%c0, %c0_0, %c0_1, %c0_2] : memref<1x16x16x4xf32, #tpu.memory_space<vmem>>, vector<1x16x16x4xf32>
    %1 = vector.shape_cast %0 : vector<1x16x16x4xf32> to vector<16x16x4xf32>
    %2 = arith.truncf %1 : vector<16x16x4xf32> to vector<16x16x4xbf16>
    %c1 = arith.constant 1 : index
    %c0_3 = arith.constant 0 : index
    %c4 = arith.constant 4 : index
    %3 = vector.load %arg5[%c1, %c0_3, %c4] : memref<18x16x12xbf16, #tpu.memory_space<vmem>>, vector<16x16x4xbf16>
    tpu.vector_store %arg5[%c1, %c0_3, %c4], %2 {strides = array<i32>} : memref<18x16x12xbf16, #tpu.memory_space<vmem>>, vector<16x16x4xbf16>,
    %c1_i32 = arith.constant 1 : i32
    %4 = tpu.dynamic_rotate %1 by %c1_i32 dim 1 : vector<16x16x4xf32>, i32 -> vector<16x16x4xf32>
    %5 = arith.truncf %4 : vector<16x16x4xf32> to vector<16x16x4xbf16>
    %c1_4 = arith.constant 1 : index
    %c0_5 = arith.constant 0 : index
    %c0_6 = arith.constant 0 : index
    %6 = vector.load %arg5[%c1_4, %c0_5, %c0_6] : memref<18x16x12xbf16, #tpu.memory_space<vmem>>, vector<16x16x4xbf16>
    tpu.vector_store %arg5[%c1_4, %c0_5, %c0_6], %5 {strides = array<i32>} : memref<18x16x12xbf16, #tpu.memory_space<vmem>>, vector<16x16x4xbf16>,
    %c15_i32 = arith.constant 15 : i32
    %7 = tpu.dynamic_rotate %1 by %c15_i32 dim 1 : vector<16x16x4xf32>, i32 -> vector<16x16x4xf32>
    %8 = arith.truncf %7 : vector<16x16x4xf32> to vector<16x16x4xbf16>
    %c1_7 = arith.constant 1 : index
    %c0_8 = arith.constant 0 : index
    %c8 = arith.constant 8 : index
    %9 = vector.load %arg5[%c1_7, %c0_8, %c8] : memref<18x16x12xbf16, #tpu.memory_space<vmem>>, vector<16x16x4xbf16>
    tpu.vector_store %arg5[%c1_7, %c0_8, %c8], %8 {strides = array<i32>} : memref<18x16x12xbf16, #tpu.memory_space<vmem>>, vector<16x16x4xbf16>,
    %10 = vector.extract_strided_slice %1 {offsets = [0, 1, 0], sizes = [16, 1, 4], strides = [1, 1, 1]} : vector<16x16x4xf32> to vector<16x1x4xf32>
    %11 = arith.truncf %10 : vector<16x1x4xf32> to vector<16x1x4xbf16>
    %c1_9 = arith.constant 1 : index
    %c0_10 = arith.constant 0 : index
    %c0_11 = arith.constant 0 : index
    %12 = vector.load %arg5[%c1_9, %c0_10, %c0_11] : memref<18x16x12xbf16, #tpu.memory_space<vmem>>, vector<16x1x4xbf16>
    tpu.vector_store %arg5[%c1_9, %c0_10, %c0_11], %11 {strides = array<i32>} : memref<18x16x12xbf16, #tpu.memory_space<vmem>>, vector<16x1x4xbf16>,
    %13 = vector.extract_strided_slice %1 {offsets = [0, 14, 0], sizes = [16, 1, 4], strides = [1, 1, 1]} : vector<16x16x4xf32> to vector<16x1x4xf32>
    %14 = arith.truncf %13 : vector<16x1x4xf32> to vector<16x1x4xbf16>
    %c1_12 = arith.constant 1 : index
    %c15 = arith.constant 15 : index
    %c8_13 = arith.constant 8 : index
    %15 = vector.load %arg5[%c1_12, %c15, %c8_13] : memref<18x16x12xbf16, #tpu.memory_space<vmem>>, vector<16x1x4xbf16>
    tpu.vector_store %arg5[%c1_12, %c15, %c8_13], %14 {strides = array<i32>} : memref<18x16x12xbf16, #tpu.memory_space<vmem>>, vector<16x1x4xbf16>,
    %c2 = arith.constant 2 : index
    %c0_14 = arith.constant 0 : index
    %c0_15 = arith.constant 0 : index
    %16 = vector.load %arg5[%c2, %c0_14, %c0_15] : memref<18x16x12xbf16, #tpu.memory_space<vmem>>, vector<1x16x12xbf16>
    %c0_16 = arith.constant 0 : index
    %c0_17 = arith.constant 0 : index
    %c0_18 = arith.constant 0 : index
    %17 = vector.load %arg5[%c0_16, %c0_17, %c0_18] : memref<18x16x12xbf16, #tpu.memory_space<vmem>>, vector<1x16x12xbf16>
    tpu.vector_store %arg5[%c0_16, %c0_17, %c0_18], %16 {strides = array<i32>} : memref<18x16x12xbf16, #tpu.memory_space<vmem>>, vector<1x16x12xbf16>,
    %c15_19 = arith.constant 15 : index
    %c0_20 = arith.constant 0 : index
    %c0_21 = arith.constant 0 : index
    %18 = vector.load %arg5[%c15_19, %c0_20, %c0_21] : memref<18x16x12xbf16, #tpu.memory_space<vmem>>, vector<1x16x12xbf16>
    %c17 = arith.constant 17 : index
    %c0_22 = arith.constant 0 : index
    %c0_23 = arith.constant 0 : index
    %19 = vector.load %arg5[%c17, %c0_22, %c0_23] : memref<18x16x12xbf16, #tpu.memory_space<vmem>>, vector<1x16x12xbf16>
    tpu.vector_store %arg5[%c17, %c0_22, %c0_23], %18 {strides = array<i32>} : memref<18x16x12xbf16, #tpu.memory_space<vmem>>, vector<1x16x12xbf16>,
    %c0_24 = arith.constant 0 : index
    %c0_25 = arith.constant 0 : index
    %c0_26 = arith.constant 0 : index
    %20 = vector.load %arg5[%c0_24, %c0_25, %c0_26] : memref<18x16x12xbf16, #tpu.memory_space<vmem>>, vector<16x16x12xbf16>
    %c0_27 = arith.constant 0 : index
    %c0_28 = arith.constant 0 : index
    %c0_29 = arith.constant 0 : index
    %21 = vector.load %arg2[%c0_27, %c0_28, %c0_29] : memref<3x12x4xbf16, #tpu.memory_space<vmem>>, vector<1x12x4xbf16>
    %22 = vector.shape_cast %21 : vector<1x12x4xbf16> to vector<12x4xbf16>
    "tpu.trace_start"() <{level = 10 : i32, message = "hwk,kd->hwd"}> : () -> ()
    %cst = arith.constant dense<0.000000e+00> : vector<16x16x4xf32>
    %23 = tpu.matmul %20, %22, %cst {dimension_numbers = #tpu.dot_dimension_numbers<[2], [0], [0, 1], [1], [0, 0, 0, 1, 1, 1], [], []>} : vector<16x16x12xbf16>, vector<12x4xbf16>, vector<16x16x4xf32> -> vector<16x16x4xf32>
    "tpu.trace_stop"() : () -> ()
    %c1_30 = arith.constant 1 : index
    %c0_31 = arith.constant 0 : index
    %c0_32 = arith.constant 0 : index
    %24 = vector.load %arg5[%c1_30, %c0_31, %c0_32] : memref<18x16x12xbf16, #tpu.memory_space<vmem>>, vector<16x16x12xbf16>
    %c1_33 = arith.constant 1 : index
    %c0_34 = arith.constant 0 : index
    %c0_35 = arith.constant 0 : index
    %25 = vector.load %arg2[%c1_33, %c0_34, %c0_35] : memref<3x12x4xbf16, #tpu.memory_space<vmem>>, vector<1x12x4xbf16>
    %26 = vector.shape_cast %25 : vector<1x12x4xbf16> to vector<12x4xbf16>
    "tpu.trace_start"() <{level = 10 : i32, message = "hwk,kd->hwd"}> : () -> ()
    %cst_36 = arith.constant dense<0.000000e+00> : vector<16x16x4xf32>
    %27 = tpu.matmul %24, %26, %cst_36 {dimension_numbers = #tpu.dot_dimension_numbers<[2], [0], [0, 1], [1], [0, 0, 0, 1, 1, 1], [], []>} : vector<16x16x12xbf16>, vector<12x4xbf16>, vector<16x16x4xf32> -> vector<16x16x4xf32>
    "tpu.trace_stop"() : () -> ()
    %28 = arith.addf %23, %27 : vector<16x16x4xf32>
    %c2_37 = arith.constant 2 : index
    %c0_38 = arith.constant 0 : index
    %c0_39 = arith.constant 0 : index
    %29 = vector.load %arg5[%c2_37, %c0_38, %c0_39] : memref<18x16x12xbf16, #tpu.memory_space<vmem>>, vector<16x16x12xbf16>
    %c2_40 = arith.constant 2 : index
    %c0_41 = arith.constant 0 : index
    %c0_42 = arith.constant 0 : index
    %30 = vector.load %arg2[%c2_40, %c0_41, %c0_42] : memref<3x12x4xbf16, #tpu.memory_space<vmem>>, vector<1x12x4xbf16>
    %31 = vector.shape_cast %30 : vector<1x12x4xbf16> to vector<12x4xbf16>
    "tpu.trace_start"() <{level = 10 : i32, message = "hwk,kd->hwd"}> : () -> ()
    %cst_43 = arith.constant dense<0.000000e+00> : vector<16x16x4xf32>
    %32 = tpu.matmul %29, %31, %cst_43 {dimension_numbers = #tpu.dot_dimension_numbers<[2], [0], [0, 1], [1], [0, 0, 0, 1, 1, 1], [], []>} : vector<16x16x12xbf16>, vector<12x4xbf16>, vector<16x16x4xf32> -> vector<16x16x4xf32>
    "tpu.trace_stop"() : () -> ()
    %33 = arith.addf %28, %32 : vector<16x16x4xf32>
    %cst_44 = arith.constant dense<0.000000e+00> : vector<4xf32>
    %34 = vector.multi_reduction <add>, %33, %cst_44 [0, 1] : vector<16x16x4xf32> to vector<4xf32>
    %35 = vector.shape_cast %34 : vector<4xf32> to vector<1x1x4xf32>
    %36 = arith.mulf %33, %33 : vector<16x16x4xf32>
    %cst_45 = arith.constant dense<0.000000e+00> : vector<4xf32>
    %37 = vector.multi_reduction <add>, %36, %cst_45 [0, 1] : vector<16x16x4xf32> to vector<4xf32>
    %38 = vector.shape_cast %37 : vector<4xf32> to vector<1x1x4xf32>
    %cst_46 = arith.constant 3.906250e-03 : f32
    %39 = vector.broadcast %cst_46 : f32 to vector<1x1x4xf32>
    %40 = arith.mulf %35, %39 : vector<1x1x4xf32>
    %cst_47 = arith.constant 3.906250e-03 : f32
    %41 = vector.broadcast %cst_47 : f32 to vector<1x1x4xf32>
    %42 = arith.mulf %38, %41 : vector<1x1x4xf32>
    %43 = arith.mulf %40, %40 : vector<1x1x4xf32>
    %44 = arith.subf %42, %43 : vector<1x1x4xf32>
    %cst_48 = arith.constant 0.000000e+00 : f32
    %45 = vector.broadcast %cst_48 : f32 to vector<1x1x4xf32>
    %46 = arith.maximumf %44, %45 : vector<1x1x4xf32>
    %47 = vector.broadcast %40 : vector<1x1x4xf32> to vector<16x16x4xf32>
    %48 = arith.subf %33, %47 : vector<16x16x4xf32>
    %cst_49 = arith.constant 9.99999974E-6 : f32
    %49 = vector.broadcast %cst_49 : f32 to vector<1x1x4xf32>
    %50 = arith.addf %46, %49 : vector<1x1x4xf32>
    %51 = math.rsqrt %50 : vector<1x1x4xf32>
    %52 = vector.broadcast %51 : vector<1x1x4xf32> to vector<16x16x4xf32>
    %53 = arith.mulf %48, %52 : vector<16x16x4xf32>
    %cst_50 = arith.constant 0.000000e+00 : f32
    %54 = vector.broadcast %cst_50 : f32 to vector<16x16x4xf32>
    %55 = arith.maximumf %53, %54 : vector<16x16x4xf32>
    %56 = arith.truncf %55 : vector<16x16x4xf32> to vector<16x16x4xbf16>
    %c1_51 = arith.constant 1 : index
    %c0_52 = arith.constant 0 : index
    %c4_53 = arith.constant 4 : index
    %57 = vector.load %arg5[%c1_51, %c0_52, %c4_53] : memref<18x16x12xbf16, #tpu.memory_space<vmem>>, vector<16x16x4xbf16>
    tpu.vector_store %arg5[%c1_51, %c0_52, %c4_53], %56 {strides = array<i32>} : memref<18x16x12xbf16, #tpu.memory_space<vmem>>, vector<16x16x4xbf16>,
    %c1_i32_54 = arith.constant 1 : i32
    %58 = tpu.dynamic_rotate %55 by %c1_i32_54 dim 1 : vector<16x16x4xf32>, i32 -> vector<16x16x4xf32>
    %59 = arith.truncf %58 : vector<16x16x4xf32> to vector<16x16x4xbf16>
    %c1_55 = arith.constant 1 : index
    %c0_56 = arith.constant 0 : index
    %c0_57 = arith.constant 0 : index
    %60 = vector.load %arg5[%c1_55, %c0_56, %c0_57] : memref<18x16x12xbf16, #tpu.memory_space<vmem>>, vector<16x16x4xbf16>
    tpu.vector_store %arg5[%c1_55, %c0_56, %c0_57], %59 {strides = array<i32>} : memref<18x16x12xbf16, #tpu.memory_space<vmem>>, vector<16x16x4xbf16>,
    %c15_i32_58 = arith.constant 15 : i32
    %61 = tpu.dynamic_rotate %55 by %c15_i32_58 dim 1 : vector<16x16x4xf32>, i32 -> vector<16x16x4xf32>
    %62 = arith.truncf %61 : vector<16x16x4xf32> to vector<16x16x4xbf16>
    %c1_59 = arith.constant 1 : index
    %c0_60 = arith.constant 0 : index
    %c8_61 = arith.constant 8 : index
    %63 = vector.load %arg5[%c1_59, %c0_60, %c8_61] : memref<18x16x12xbf16, #tpu.memory_space<vmem>>, vector<16x16x4xbf16>
    tpu.vector_store %arg5[%c1_59, %c0_60, %c8_61], %62 {strides = array<i32>} : memref<18x16x12xbf16, #tpu.memory_space<vmem>>, vector<16x16x4xbf16>,
    %64 = vector.extract_strided_slice %55 {offsets = [0, 1, 0], sizes = [16, 1, 4], strides = [1, 1, 1]} : vector<16x16x4xf32> to vector<16x1x4xf32>
    %65 = arith.truncf %64 : vector<16x1x4xf32> to vector<16x1x4xbf16>
    %c1_62 = arith.constant 1 : index
    %c0_63 = arith.constant 0 : index
    %c0_64 = arith.constant 0 : index
    %66 = vector.load %arg5[%c1_62, %c0_63, %c0_64] : memref<18x16x12xbf16, #tpu.memory_space<vmem>>, vector<16x1x4xbf16>
    tpu.vector_store %arg5[%c1_62, %c0_63, %c0_64], %65 {strides = array<i32>} : memref<18x16x12xbf16, #tpu.memory_space<vmem>>, vector<16x1x4xbf16>,
    %67 = vector.extract_strided_slice %55 {offsets = [0, 14, 0], sizes = [16, 1, 4], strides = [1, 1, 1]} : vector<16x16x4xf32> to vector<16x1x4xf32>
    %68 = arith.truncf %67 : vector<16x1x4xf32> to vector<16x1x4xbf16>
    %c1_65 = arith.constant 1 : index
    %c15_66 = arith.constant 15 : index
    %c8_67 = arith.constant 8 : index
    %69 = vector.load %arg5[%c1_65, %c15_66, %c8_67] : memref<18x16x12xbf16, #tpu.memory_space<vmem>>, vector<16x1x4xbf16>
    tpu.vector_store %arg5[%c1_65, %c15_66, %c8_67], %68 {strides = array<i32>} : memref<18x16x12xbf16, #tpu.memory_space<vmem>>, vector<16x1x4xbf16>,
    %c2_68 = arith.constant 2 : index
    %c0_69 = arith.constant 0 : index
    %c0_70 = arith.constant 0 : index
    %70 = vector.load %arg5[%c2_68, %c0_69, %c0_70] : memref<18x16x12xbf16, #tpu.memory_space<vmem>>, vector<1x16x12xbf16>
    %c0_71 = arith.constant 0 : index
    %c0_72 = arith.constant 0 : index
    %c0_73 = arith.constant 0 : index
    %71 = vector.load %arg5[%c0_71, %c0_72, %c0_73] : memref<18x16x12xbf16, #tpu.memory_space<vmem>>, vector<1x16x12xbf16>
    tpu.vector_store %arg5[%c0_71, %c0_72, %c0_73], %70 {strides = array<i32>} : memref<18x16x12xbf16, #tpu.memory_space<vmem>>, vector<1x16x12xbf16>,
    %c15_74 = arith.constant 15 : index
    %c0_75 = arith.constant 0 : index
    %c0_76 = arith.constant 0 : index
    %72 = vector.load %arg5[%c15_74, %c0_75, %c0_76] : memref<18x16x12xbf16, #tpu.memory_space<vmem>>, vector<1x16x12xbf16>
    %c17_77 = arith.constant 17 : index
    %c0_78 = arith.constant 0 : index
    %c0_79 = arith.constant 0 : index
    %73 = vector.load %arg5[%c17_77, %c0_78, %c0_79] : memref<18x16x12xbf16, #tpu.memory_space<vmem>>, vector<1x16x12xbf16>
    tpu.vector_store %arg5[%c17_77, %c0_78, %c0_79], %72 {strides = array<i32>} : memref<18x16x12xbf16, #tpu.memory_space<vmem>>, vector<1x16x12xbf16>,
    %c0_80 = arith.constant 0 : index
    %c0_81 = arith.constant 0 : index
    %c0_82 = arith.constant 0 : index
    %74 = vector.load %arg5[%c0_80, %c0_81, %c0_82] : memref<18x16x12xbf16, #tpu.memory_space<vmem>>, vector<16x16x12xbf16>
    %c0_83 = arith.constant 0 : index
    %c0_84 = arith.constant 0 : index
    %c0_85 = arith.constant 0 : index
    %75 = vector.load %arg3[%c0_83, %c0_84, %c0_85] : memref<3x12x4xbf16, #tpu.memory_space<vmem>>, vector<1x12x4xbf16>
    %76 = vector.shape_cast %75 : vector<1x12x4xbf16> to vector<12x4xbf16>
    "tpu.trace_start"() <{level = 10 : i32, message = "hwk,kd->hwd"}> : () -> ()
    %cst_86 = arith.constant dense<0.000000e+00> : vector<16x16x4xf32>
    %77 = tpu.matmul %74, %76, %cst_86 {dimension_numbers = #tpu.dot_dimension_numbers<[2], [0], [0, 1], [1], [0, 0, 0, 1, 1, 1], [], []>} : vector<16x16x12xbf16>, vector<12x4xbf16>, vector<16x16x4xf32> -> vector<16x16x4xf32>
    "tpu.trace_stop"() : () -> ()
    %c1_87 = arith.constant 1 : index
    %c0_88 = arith.constant 0 : index
    %c0_89 = arith.constant 0 : index
    %78 = vector.load %arg5[%c1_87, %c0_88, %c0_89] : memref<18x16x12xbf16, #tpu.memory_space<vmem>>, vector<16x16x12xbf16>
    %c1_90 = arith.constant 1 : index
    %c0_91 = arith.constant 0 : index
    %c0_92 = arith.constant 0 : index
    %79 = vector.load %arg3[%c1_90, %c0_91, %c0_92] : memref<3x12x4xbf16, #tpu.memory_space<vmem>>, vector<1x12x4xbf16>
    %80 = vector.shape_cast %79 : vector<1x12x4xbf16> to vector<12x4xbf16>
    "tpu.trace_start"() <{level = 10 : i32, message = "hwk,kd->hwd"}> : () -> ()
    %cst_93 = arith.constant dense<0.000000e+00> : vector<16x16x4xf32>
    %81 = tpu.matmul %78, %80, %cst_93 {dimension_numbers = #tpu.dot_dimension_numbers<[2], [0], [0, 1], [1], [0, 0, 0, 1, 1, 1], [], []>} : vector<16x16x12xbf16>, vector<12x4xbf16>, vector<16x16x4xf32> -> vector<16x16x4xf32>
    "tpu.trace_stop"() : () -> ()
    %82 = arith.addf %77, %81 : vector<16x16x4xf32>
    %c2_94 = arith.constant 2 : index
    %c0_95 = arith.constant 0 : index
    %c0_96 = arith.constant 0 : index
    %83 = vector.load %arg5[%c2_94, %c0_95, %c0_96] : memref<18x16x12xbf16, #tpu.memory_space<vmem>>, vector<16x16x12xbf16>
    %c2_97 = arith.constant 2 : index
    %c0_98 = arith.constant 0 : index
    %c0_99 = arith.constant 0 : index
    %84 = vector.load %arg3[%c2_97, %c0_98, %c0_99] : memref<3x12x4xbf16, #tpu.memory_space<vmem>>, vector<1x12x4xbf16>
    %85 = vector.shape_cast %84 : vector<1x12x4xbf16> to vector<12x4xbf16>
    "tpu.trace_start"() <{level = 10 : i32, message = "hwk,kd->hwd"}> : () -> ()
    %cst_100 = arith.constant dense<0.000000e+00> : vector<16x16x4xf32>
    %86 = tpu.matmul %83, %85, %cst_100 {dimension_numbers = #tpu.dot_dimension_numbers<[2], [0], [0, 1], [1], [0, 0, 0, 1, 1, 1], [], []>} : vector<16x16x12xbf16>, vector<12x4xbf16>, vector<16x16x4xf32> -> vector<16x16x4xf32>
    "tpu.trace_stop"() : () -> ()
    %87 = arith.addf %82, %86 : vector<16x16x4xf32>
    %cst_101 = arith.constant dense<0.000000e+00> : vector<4xf32>
    %88 = vector.multi_reduction <add>, %87, %cst_101 [0, 1] : vector<16x16x4xf32> to vector<4xf32>
    %89 = vector.shape_cast %88 : vector<4xf32> to vector<1x1x4xf32>
    %90 = arith.mulf %87, %87 : vector<16x16x4xf32>
    %cst_102 = arith.constant dense<0.000000e+00> : vector<4xf32>
    %91 = vector.multi_reduction <add>, %90, %cst_102 [0, 1] : vector<16x16x4xf32> to vector<4xf32>
    %92 = vector.shape_cast %91 : vector<4xf32> to vector<1x1x4xf32>
    %cst_103 = arith.constant 3.906250e-03 : f32
    %93 = vector.broadcast %cst_103 : f32 to vector<1x1x4xf32>
    %94 = arith.mulf %89, %93 : vector<1x1x4xf32>
    %cst_104 = arith.constant 3.906250e-03 : f32
    %95 = vector.broadcast %cst_104 : f32 to vector<1x1x4xf32>
    %96 = arith.mulf %92, %95 : vector<1x1x4xf32>
    %97 = arith.mulf %94, %94 : vector<1x1x4xf32>
    %98 = arith.subf %96, %97 : vector<1x1x4xf32>
    %cst_105 = arith.constant 0.000000e+00 : f32
    %99 = vector.broadcast %cst_105 : f32 to vector<1x1x4xf32>
    %100 = arith.maximumf %98, %99 : vector<1x1x4xf32>
    %101 = vector.broadcast %94 : vector<1x1x4xf32> to vector<16x16x4xf32>
    %102 = arith.subf %87, %101 : vector<16x16x4xf32>
    %cst_106 = arith.constant 9.99999974E-6 : f32
    %103 = vector.broadcast %cst_106 : f32 to vector<1x1x4xf32>
    %104 = arith.addf %100, %103 : vector<1x1x4xf32>
    %105 = math.rsqrt %104 : vector<1x1x4xf32>
    %106 = vector.broadcast %105 : vector<1x1x4xf32> to vector<16x16x4xf32>
    %107 = arith.mulf %102, %106 : vector<16x16x4xf32>
    %c0_107 = arith.constant 0 : index
    %c0_108 = arith.constant 0 : index
    %c0_109 = arith.constant 0 : index
    %c0_110 = arith.constant 0 : index
    %108 = vector.load %arg1[%c0_107, %c0_108, %c0_109, %c0_110] : memref<1x16x16x4xf32, #tpu.memory_space<vmem>>, vector<1x16x16x4xf32>
    %109 = vector.shape_cast %108 : vector<1x16x16x4xf32> to vector<16x16x4xf32>
    %110 = arith.addf %109, %107 : vector<16x16x4xf32>
    %c0_111 = arith.constant 0 : index
    %c0_112 = arith.constant 0 : index
    %c0_113 = arith.constant 0 : index
    %c0_114 = arith.constant 0 : index
    %111 = vector.load %arg4[%c0_111, %c0_112, %c0_113, %c0_114] : memref<1x16x16x4xf32, #tpu.memory_space<vmem>>, vector<1x16x16x4xf32>
    %112 = vector.shape_cast %111 : vector<1x16x16x4xf32> to vector<16x16x4xf32>
    %113 = vector.shape_cast %110 : vector<16x16x4xf32> to vector<1x16x16x4xf32>
    tpu.vector_store %arg4[%c0_111, %c0_112, %c0_113, %c0_114], %113 {strides = array<i32>} : memref<1x16x16x4xf32, #tpu.memory_space<vmem>>, vector<1x16x16x4xf32>,
    return
  }
  func.func @transform_0(%arg0: i32) -> (i32, i32, i32, i32) {
    %c0_i32 = arith.constant 0 : i32
    %c0_i32_0 = arith.constant 0 : i32
    %c0_i32_1 = arith.constant 0 : i32
    %c0_i32_2 = arith.constant 0 : i32
    return %arg0, %c0_i32, %c0_i32_0, %c0_i32_1 : i32, i32, i32, i32
  }
  func.func @transform_1(%arg0: i32) -> (i32, i32, i32) {
    %c0_i32 = arith.constant 0 : i32
    %c0_i32_0 = arith.constant 0 : i32
    %c0_i32_1 = arith.constant 0 : i32
    %c0_i32_2 = arith.constant 0 : i32
    return %c0_i32, %c0_i32_0, %c0_i32_1 : i32, i32, i32
  }
  func.func @transform_2(%arg0: i32) -> (i32, i32, i32) {
    %c0_i32 = arith.constant 0 : i32
    %c0_i32_0 = arith.constant 0 : i32
    %c0_i32_1 = arith.constant 0 : i32
    %c0_i32_2 = arith.constant 0 : i32
    return %c0_i32, %c0_i32_0, %c0_i32_1 : i32, i32, i32
  }
  func.func @transform_3(%arg0: i32) -> (i32, i32, i32, i32) {
    %c0_i32 = arith.constant 0 : i32
    %c0_i32_0 = arith.constant 0 : i32
    %c0_i32_1 = arith.constant 0 : i32
    %c0_i32_2 = arith.constant 0 : i32
    return %arg0, %c0_i32, %c0_i32_0, %c0_i32_1 : i32, i32, i32, i32
  }
}

</mosaic_0001>

<llo_original>
// kernel: tpu_custom_call.1
$region0: #{tpu_custom_call.1}
  #allocation0 [shape = 'u32[]', space=smem, size = 0x4, offset = 0x4, fixed_abs, tag = 'smem constant byte address 0x4 - core index']
  #allocation1 [shape = 'u32[144,128]{1,0:T(1,128)}', space=vmem, size = 0x12000, scoped, tag = 'internal scratch']
  #allocation2 [shape = 'bf16[18,16,12]{2,1,0:T(8,128)(2,1)}', space=vmem, size = 0x12000, scoped, tag = 'scratch operand']
  %s0 = inlined_call_operand.vmem [shape: f32[2,16,16,4], index: 0, kind: input, shape index: {}]
  %s1 = inlined_call_operand.vmem [shape: bf16[3,12,4], index: 1, kind: input, shape index: {}]
  %s2 = inlined_call_operand.vmem [shape: bf16[3,12,4], index: 2, kind: input, shape index: {}]
  %s3 = inlined_call_operand.vmem [shape: f32[2,16,16,4], index: 3, kind: output, shape index: {}]
  %s4 = sld [smem:[#allocation0]]
  $region45: #{tpu_custom_call.1} parent=0
    _
  %s6 = ssub.s32 1, %s4
  %s7 = scalar_select 0, %s6, %s4
  loop: start=0, step=1, limit=4
  $region2: #{tpu_custom_call.1} parent=0 // loop_pre_header
    _
  $region3: #{tpu_custom_call.1} parent=0 // loop_header
    %s9 = sphi 0, %s13
    %p10 = scmp.ge.s32.totalorder %s9, 4
    %s19 = sphi 0, %s21
    %s22 = sphi 0, %s19
    %s23 = sphi 0, %s22
    %s39 = sphi 0, %s23
    %s43 = sphi 0, %s43
    %s45 = sphi 0, %s43
    %s46 = sphi 0, %s45
    %s60 = sphi 0, %s46
    %s64 = sphi 0, %s64
    %s66 = sphi 0, %s64
    %s67 = sphi 0, %s66
    %s81 = sphi 0, %s67
    %s87 = sphi 0, %s89
    %s90 = sphi 0, %s87
    %s91 = sphi 0, %s90
    %s107 = sphi 0, %s91
  $region4: #{tpu_custom_call.1} parent=0 // loop_header_branch
    %12 = sbr.rel (%p10) target = $region8
  $region5: #{tpu_custom_call.1} parent=0 // loop_body
    %s14 = ssub.s32 %s9, 1
    %s15 = ssub.s32 %s9, 2
    %s16 = sadd.s32 %s9, 1
    %s17 = ssub.s32 %s9, %s16
    %p18 = scmp.eq.s32.totalorder %s17, 0
    %s20 = sadd.s32 %s19, 1
    %s21 = scalar_select %p18, %s19, %s20
    %p24 = pneg %p18
    %p25 = scmp.eq.s32.totalorder %s9, 1
    %p26 = por %p24, %p25
    %p27 = scmp.ne.s32.totalorder %s19, %s22
    %p28 = scmp.eq.s32.totalorder %s9, 0
    %p29 = por %p27, %p28
    %p30 = scmp.ne.s32.totalorder %s19, %s22
    %p31 = scmp.eq.s32.totalorder %s14, 1
    %p32 = por %p30, %p31
    %p33 = scmp.ne.s32.totalorder %s22, %s23
    %p34 = scmp.eq.s32.totalorder %s14, 0
    %p35 = por %p33, %p34
    %p36 = scmp.ne.s32.totalorder %s22, %s23
    %p37 = scmp.eq.s32.totalorder %s15, 1
    %p38 = por %p36, %p37
    %p40 = scmp.ne.s32.totalorder %s23, %s39
    %p41 = scmp.eq.s32.totalorder %s15, 0
    %p42 = por %p40, %p41
    %s44 = sadd.s32 %s43, 1
    %p47 = scmp.eq.s32.totalorder %s9, 1
    %p48 = scmp.ne.s32.totalorder %s43, %s45
    %p49 = scmp.eq.s32.totalorder %s9, 0
    %p50 = por %p48, %p49
    %p51 = scmp.ne.s32.totalorder %s43, %s45
    %p52 = scmp.eq.s32.totalorder %s14, 1
    %p53 = por %p51, %p52
    %p54 = scmp.ne.s32.totalorder %s45, %s46
    %p55 = scmp.eq.s32.totalorder %s14, 0
    %p56 = por %p54, %p55
    %p57 = scmp.ne.s32.totalorder %s45, %s46
    %p58 = scmp.eq.s32.totalorder %s15, 1
    %p59 = por %p57, %p58
    %p61 = scmp.ne.s32.totalorder %s46, %s60
    %p62 = scmp.eq.s32.totalorder %s15, 0
    %p63 = por %p61, %p62
    %s65 = sadd.s32 %s64, 1
    %p68 = scmp.eq.s32.totalorder %s9, 1
    %p69 = scmp.ne.s32.totalorder %s64, %s66
    %p70 = scmp.eq.s32.totalorder %s9, 0
    %p71 = por %p69, %p70
    %p72 = scmp.ne.s32.totalorder %s64, %s66
    %p73 = scmp.eq.s32.totalorder %s14, 1
    %p74 = por %p72, %p73
    %p75 = scmp.ne.s32.totalorder %s66, %s67
    %p76 = scmp.eq.s32.totalorder %s14, 0
    %p77 = por %p75, %p76
    %p78 = scmp.ne.s32.totalorder %s66, %s67
    %p79 = scmp.eq.s32.totalorder %s15, 1
    %p80 = por %p78, %p79
    %p82 = scmp.ne.s32.totalorder %s67, %s81
    %p83 = scmp.eq.s32.totalorder %s15, 0
    %p84 = por %p82, %p83
    %s85 = ssub.s32 %s9, %s16
    %p86 = scmp.eq.s32.totalorder %s85, 0
    %s88 = sadd.s32 %s87, 1
    %s89 = scalar_select %p86, %s87, %s88
    %p92 = pneg %p86
    %p93 = scmp.eq.s32.totalorder %s9, 1
    %p94 = por %p92, %p93
    %p95 = scmp.ne.s32.totalorder %s87, %s90
    %p96 = scmp.eq.s32.totalorder %s9, 0
    %p97 = por %p95, %p96
    %p98 = scmp.ne.s32.totalorder %s87, %s90
    %p99 = scmp.eq.s32.totalorder %s14, 1
    %p100 = por %p98, %p99
    %p101 = scmp.ne.s32.totalorder %s90, %s91
    %p102 = scmp.eq.s32.totalorder %s14, 0
    %p103 = por %p101, %p102
    %p104 = scmp.ne.s32.totalorder %s90, %s91
    %p105 = scmp.eq.s32.totalorder %s15, 1
    %p106 = por %p104, %p105
    %p108 = scmp.ne.s32.totalorder %s91, %s107
    %p109 = scmp.eq.s32.totalorder %s15, 0
    %p110 = por %p108, %p109
    %p111 = scmp.le.s32.totalorder 1, %s9
    %p112 = scmp.lt.s32.totalorder %s9, 3
    %p113 = pnand %p111, %p112
    %p114 = pneg %p113
    // Predicated region
    $region9: #{tpu_custom_call.1} parent=5 // pred_check
      _
    $region10: #{tpu_custom_call.1} parent=5 // pred_check_branch
      %116 = sbr.rel (%p113) target = $region12
    $region11: #{tpu_custom_call.1} parent=5 // pred_region
      %s117 = ssub.s32 %s9, 1
      // Predicated region
      $region13: #{tpu_custom_call.1} parent=11 // pred_check
        %p118 = pneg %p56
      $region14: #{tpu_custom_call.1} parent=11 // pred_check_branch
        %120 = sbr.rel (%p118) target = $region16
      $region15: #{tpu_custom_call.1} parent=11 // pred_region
        _
      $region16: #{tpu_custom_call.1} parent=11 // pred_fallthru
        _
      // Predicated region
      $region17: #{tpu_custom_call.1} parent=11 // pred_check
        %p121 = pneg %p77
      $region18: #{tpu_custom_call.1} parent=11 // pred_check_branch
        %123 = sbr.rel (%p121) target = $region20
      $region19: #{tpu_custom_call.1} parent=11 // pred_region
        _
      $region20: #{tpu_custom_call.1} parent=11 // pred_fallthru
        _
    $region12: #{tpu_custom_call.1} parent=5 // pred_fallthru
      _
    %p124 = scmp.lt.s32.totalorder %s9, 2
    // Predicated region
    $region21: #{tpu_custom_call.1} parent=5 // pred_check
      %p125 = pneg %p124
    $region22: #{tpu_custom_call.1} parent=5 // pred_check_branch
      %127 = sbr.rel (%p125) target = $region24
    $region23: #{tpu_custom_call.1} parent=5 // pred_region
      // Predicated region
      $region25: #{tpu_custom_call.1} parent=23 // pred_check
        %p128 = pneg %p29
      $region26: #{tpu_custom_call.1} parent=23 // pred_check_branch
        %130 = sbr.rel (%p128) target = $region28
      $region27: #{tpu_custom_call.1} parent=23 // pred_region
        %p131 = scmp.lt.s32.totalorder %s9, 1
        %s132 = scalar_select %p131, %s9, 1
        %s133 = smul.addr %s132, 32
        %s134 = smul.addr %s133, 8
        %s135 = scalar_lea.vmem %s0, %s134
      $region28: #{tpu_custom_call.1} parent=23 // pred_fallthru
        _
    $region24: #{tpu_custom_call.1} parent=5 // pred_fallthru
      _
    %p136 = scmp.le.s32.totalorder 1, %s9
    %p137 = scmp.lt.s32.totalorder %s9, 3
    %p138 = pnand %p136, %p137
    %p139 = pneg %p138
    // Predicated region
    $region29: #{tpu_custom_call.1} parent=5 // pred_check
      _
    $region30: #{tpu_custom_call.1} parent=5 // pred_check_branch
      %141 = sbr.rel (%p138) target = $region32
    $region31: #{tpu_custom_call.1} parent=5 // pred_region
      %s142 = ssub.s32 %s9, 1
      %p143 = scmp.lt.s32.totalorder %s14, 1
      %s144 = scalar_select %p143, %s14, 1
      %s145 = smul.addr %s144, 32
      %s146 = smul.addr %s145, 8
      %s147 = scalar_lea.vmem %s0, %s146
      %p148 = pneg %p35
      %p149 = pneg %p32
      %p150 = pneg %p56
      %p151 = pneg %p53
      %p152 = pneg %p77
      %p153 = pneg %p74
      %p154 = pneg %p103
      %p155 = pneg %p100
      %p156 = scmp.lt.s32.totalorder %s14, 1
      %s157 = scalar_select %p156, %s14, 1
      %s158 = smul.addr %s157, 32
      %s159 = smul.addr %s158, 8
      %s160 = scalar_lea.vmem %s3, %s159
      %p161 = scmp.lt.s32.totalorder %s14, 1
      %s162 = scalar_select %p161, %s14, 1
      %s163 = smul.addr %s162, 32
      %s164 = smul.addr %s163, 8
      %s165 = scalar_lea.vmem %s0, %s164
      %p166 = scmp.lt.s32.totalorder %s14, 1
      %s167 = scalar_select %p166, %s14, 1
      %s168 = smul.addr %s167, 32
      %s169 = smul.addr %s168, 8
      %s170 = scalar_lea.vmem %s3, %s169
      %v172 = vld [vmem:[%s165] sm:$0xff]
      %v173 = vld [vmem:[%s165 + $0x8] sm:$0xff]
      %v174 = vld [vmem:[%s165 + $0x10] sm:$0xff]
      %v175 = vld [vmem:[%s165 + $0x18] sm:$0xff]
      %v176 = vld [vmem:[%s165 + $0x20] sm:$0xff]
      %v177 = vld [vmem:[%s165 + $0x28] sm:$0xff]
      %v178 = vld [vmem:[%s165 + $0x30] sm:$0xff]
      %v179 = vld [vmem:[%s165 + $0x38] sm:$0xff]
      %v180 = vld [vmem:[%s165 + $0x40] sm:$0xff]
      %v181 = vld [vmem:[%s165 + $0x48] sm:$0xff]
      %v182 = vld [vmem:[%s165 + $0x50] sm:$0xff]
      %v183 = vld [vmem:[%s165 + $0x58] sm:$0xff]
      %v184 = vld [vmem:[%s165 + $0x60] sm:$0xff]
      %v185 = vld [vmem:[%s165 + $0x68] sm:$0xff]
      %v186 = vld [vmem:[%s165 + $0x70] sm:$0xff]
      %v187 = vld [vmem:[%s165 + $0x78] sm:$0xff]
      %v188 = vld [vmem:[%s165 + $0x80] sm:$0xff]
      %v189 = vld [vmem:[%s165 + $0x88] sm:$0xff]
      %v190 = vld [vmem:[%s165 + $0x90] sm:$0xff]
      %v191 = vld [vmem:[%s165 + $0x98] sm:$0xff]
      %v192 = vld [vmem:[%s165 + $0xa0] sm:$0xff]
      %v193 = vld [vmem:[%s165 + $0xa8] sm:$0xff]
      %v194 = vld [vmem:[%s165 + $0xb0] sm:$0xff]
      %v195 = vld [vmem:[%s165 + $0xb8] sm:$0xff]
      %v196 = vld [vmem:[%s165 + $0xc0] sm:$0xff]
      %v197 = vld [vmem:[%s165 + $0xc8] sm:$0xff]
      %v198 = vld [vmem:[%s165 + $0xd0] sm:$0xff]
      %v199 = vld [vmem:[%s165 + $0xd8] sm:$0xff]
      %v200 = vld [vmem:[%s165 + $0xe0] sm:$0xff]
      %v201 = vld [vmem:[%s165 + $0xe8] sm:$0xff]
      %v202 = vld [vmem:[%s165 + $0xf0] sm:$0xff]
      %v203 = vld [vmem:[%s165 + $0xf8] sm:$0xff]
      %v204 = vpack.c.bf16 %v173, %v172
      %v205 = vpack.c.bf16 %v175, %v174
      %v206 = vpack.c.bf16 %v177, %v176
      %v207 = vpack.c.bf16 %v179, %v178
      %v208 = vpack.c.bf16 %v181, %v180
      %v209 = vpack.c.bf16 %v183, %v182
      %v210 = vpack.c.bf16 %v185, %v184
      %v211 = vpack.c.bf16 %v187, %v186
      %v212 = vpack.c.bf16 %v189, %v188
      %v213 = vpack.c.bf16 %v191, %v190
      %v214 = vpack.c.bf16 %v193, %v192
      %v215 = vpack.c.bf16 %v195, %v194
      %v216 = vpack.c.bf16 %v197, %v196
      %v217 = vpack.c.bf16 %v199, %v198
      %v218 = vpack.c.bf16 %v201, %v200
      %v219 = vpack.c.bf16 %v203, %v202
      %v236 = vunpack.c.l.b16 %v204
      %v237 = vunpack.c.h.b16 %v204
      %v238 = vunpack.c.l.b16 %v205
      %v239 = vunpack.c.h.b16 %v205
      %v240 = vunpack.c.l.b16 %v206
      %v241 = vunpack.c.h.b16 %v206
      %v242 = vunpack.c.l.b16 %v207
      %v243 = vunpack.c.h.b16 %v207
      %v244 = vunpack.c.l.b16 %v208
      %v245 = vunpack.c.h.b16 %v208
      %v246 = vunpack.c.l.b16 %v209
      %v247 = vunpack.c.h.b16 %v209
      %v248 = vunpack.c.l.b16 %v210
      %v249 = vunpack.c.h.b16 %v210
      %v250 = vunpack.c.l.b16 %v211
      %v251 = vunpack.c.h.b16 %v211
      %v252 = vunpack.c.l.b16 %v212
      %v253 = vunpack.c.h.b16 %v212
      %v254 = vunpack.c.l.b16 %v213
      %v255 = vunpack.c.h.b16 %v213
      %v256 = vunpack.c.l.b16 %v214
      %v257 = vunpack.c.h.b16 %v214
      %v258 = vunpack.c.l.b16 %v215
      %v259 = vunpack.c.h.b16 %v215
      %v260 = vunpack.c.l.b16 %v216
      %v261 = vunpack.c.h.b16 %v216
      %v262 = vunpack.c.l.b16 %v217
      %v263 = vunpack.c.h.b16 %v217
      %v264 = vunpack.c.l.b16 %v218
      %v265 = vunpack.c.h.b16 %v218
      %v266 = vunpack.c.l.b16 %v219
      %v267 = vunpack.c.h.b16 %v219
      %v268 = vpack.c.b16 %v236, %v236
      %v269 = vpack.c.b16 %v237, %v237
      %v270 = vpack.c.b16 %v238, %v238
      %v271 = vpack.c.b16 %v239, %v239
      %v272 = vpack.c.b16 %v240, %v240
      %v273 = vpack.c.b16 %v241, %v241
      %v274 = vpack.c.b16 %v242, %v242
      %v275 = vpack.c.b16 %v243, %v243
      %v276 = vpack.c.b16 %v244, %v244
      %v277 = vpack.c.b16 %v245, %v245
      %v278 = vpack.c.b16 %v246, %v246
      %v279 = vpack.c.b16 %v247, %v247
      %v280 = vpack.c.b16 %v248, %v248
      %v281 = vpack.c.b16 %v249, %v249
      %v282 = vpack.c.b16 %v250, %v250
      %v283 = vpack.c.b16 %v251, %v251
      %v284 = vpack.c.b16 %v252, %v252
      %v285 = vpack.c.b16 %v253, %v253
      %v286 = vpack.c.b16 %v254, %v254
      %v287 = vpack.c.b16 %v255, %v255
      %v288 = vpack.c.b16 %v256, %v256
      %v289 = vpack.c.b16 %v257, %v257
      %v290 = vpack.c.b16 %v258, %v258
      %v291 = vpack.c.b16 %v259, %v259
      %v292 = vpack.c.b16 %v260, %v260
      %v293 = vpack.c.b16 %v261, %v261
      %v294 = vpack.c.b16 %v262, %v262
      %v295 = vpack.c.b16 %v263, %v263
      %v296 = vpack.c.b16 %v264, %v264
      %v297 = vpack.c.b16 %v265, %v265
      %v298 = vpack.c.b16 %v266, %v266
      %v299 = vpack.c.b16 %v267, %v267
      %300 = vrot.lane.b32.xlu0 %v268, 4
      %v301 = vpop.permute.xlu0 %300
      %302 = vrot.lane.b32.xlu0 %v269, 4
      %v303 = vpop.permute.xlu0 %302
      %304 = vrot.lane.b32.xlu0 %v270, 4
      %v305 = vpop.permute.xlu0 %304
      %306 = vrot.lane.b32.xlu0 %v271, 4
      %v307 = vpop.permute.xlu0 %306
      %308 = vrot.lane.b32.xlu0 %v272, 4
      %v309 = vpop.permute.xlu0 %308
      %310 = vrot.lane.b32.xlu0 %v273, 4
      %v311 = vpop.permute.xlu0 %310
      %312 = vrot.lane.b32.xlu0 %v274, 4
      %v313 = vpop.permute.xlu0 %312
      %314 = vrot.lane.b32.xlu0 %v275, 4
      %v315 = vpop.permute.xlu0 %314
      %316 = vrot.lane.b32.xlu0 %v276, 4
      %v317 = vpop.permute.xlu0 %316
      %318 = vrot.lane.b32.xlu0 %v277, 4
      %v319 = vpop.permute.xlu0 %318
      %320 = vrot.lane.b32.xlu0 %v278, 4
      %v321 = vpop.permute.xlu0 %320
      %322 = vrot.lane.b32.xlu0 %v279, 4
      %v323 = vpop.permute.xlu0 %322
      %324 = vrot.lane.b32.xlu0 %v280, 4
      %v325 = vpop.permute.xlu0 %324
      %326 = vrot.lane.b32.xlu0 %v281, 4
      %v327 = vpop.permute.xlu0 %326
      %328 = vrot.lane.b32.xlu0 %v282, 4
      %v329 = vpop.permute.xlu0 %328
      %330 = vrot.lane.b32.xlu0 %v283, 4
      %v331 = vpop.permute.xlu0 %330
      %332 = vrot.lane.b32.xlu0 %v284, 4
      %v333 = vpop.permute.xlu0 %332
      %334 = vrot.lane.b32.xlu0 %v285, 4
      %v335 = vpop.permute.xlu0 %334
      %336 = vrot.lane.b32.xlu0 %v286, 4
      %v337 = vpop.permute.xlu0 %336
      %338 = vrot.lane.b32.xlu0 %v287, 4
      %v339 = vpop.permute.xlu0 %338
      %340 = vrot.lane.b32.xlu0 %v288, 4
      %v341 = vpop.permute.xlu0 %340
      %342 = vrot.lane.b32.xlu0 %v289, 4
      %v343 = vpop.permute.xlu0 %342
      %344 = vrot.lane.b32.xlu0 %v290, 4
      %v345 = vpop.permute.xlu0 %344
      %346 = vrot.lane.b32.xlu0 %v291, 4
      %v347 = vpop.permute.xlu0 %346
      %348 = vrot.lane.b32.xlu0 %v292, 4
      %v349 = vpop.permute.xlu0 %348
      %350 = vrot.lane.b32.xlu0 %v293, 4
      %v351 = vpop.permute.xlu0 %350
      %352 = vrot.lane.b32.xlu0 %v294, 4
      %v353 = vpop.permute.xlu0 %352
      %354 = vrot.lane.b32.xlu0 %v295, 4
      %v355 = vpop.permute.xlu0 %354
      %356 = vrot.lane.b32.xlu0 %v296, 4
      %v357 = vpop.permute.xlu0 %356
      %358 = vrot.lane.b32.xlu0 %v297, 4
      %v359 = vpop.permute.xlu0 %358
      %360 = vrot.lane.b32.xlu0 %v298, 4
      %v361 = vpop.permute.xlu0 %360
      %362 = vrot.lane.b32.xlu0 %v299, 4
      %v363 = vpop.permute.xlu0 %362
      %s396 = scalar_lea.vmem [#allocation2], 8
      %vm397 = vcmask 60448
      %398 = vst.msk [vmem:[%s396] sm:$0xf] %vm397, %v301
      %399 = vst.msk [vmem:[%s396 + $0x4] sm:$0xf] %vm397, %v303
      %400 = vst.msk [vmem:[%s396 + $0x8] sm:$0xf] %vm397, %v305
      %401 = vst.msk [vmem:[%s396 + $0xc] sm:$0xf] %vm397, %v307
      %402 = vst.msk [vmem:[%s396 + $0x10] sm:$0xf] %vm397, %v309
      %403 = vst.msk [vmem:[%s396 + $0x14] sm:$0xf] %vm397, %v311
      %404 = vst.msk [vmem:[%s396 + $0x18] sm:$0xf] %vm397, %v313
      %405 = vst.msk [vmem:[%s396 + $0x1c] sm:$0xf] %vm397, %v315
      %406 = vst.msk [vmem:[%s396 + $0x20] sm:$0xf] %vm397, %v317
      %407 = vst.msk [vmem:[%s396 + $0x24] sm:$0xf] %vm397, %v319
      %408 = vst.msk [vmem:[%s396 + $0x28] sm:$0xf] %vm397, %v321
      %409 = vst.msk [vmem:[%s396 + $0x2c] sm:$0xf] %vm397, %v323
      %410 = vst.msk [vmem:[%s396 + $0x30] sm:$0xf] %vm397, %v325
      %411 = vst.msk [vmem:[%s396 + $0x34] sm:$0xf] %vm397, %v327
      %412 = vst.msk [vmem:[%s396 + $0x38] sm:$0xf] %vm397, %v329
      %413 = vst.msk [vmem:[%s396 + $0x3c] sm:$0xf] %vm397, %v331
      %414 = vst.msk [vmem:[%s396 + $0x40] sm:$0xf] %vm397, %v333
      %415 = vst.msk [vmem:[%s396 + $0x44] sm:$0xf] %vm397, %v335
      %416 = vst.msk [vmem:[%s396 + $0x48] sm:$0xf] %vm397, %v337
      %417 = vst.msk [vmem:[%s396 + $0x4c] sm:$0xf] %vm397, %v339
      %418 = vst.msk [vmem:[%s396 + $0x50] sm:$0xf] %vm397, %v341
      %419 = vst.msk [vmem:[%s396 + $0x54] sm:$0xf] %vm397, %v343
      %420 = vst.msk [vmem:[%s396 + $0x58] sm:$0xf] %vm397, %v345
      %421 = vst.msk [vmem:[%s396 + $0x5c] sm:$0xf] %vm397, %v347
      %422 = vst.msk [vmem:[%s396 + $0x60] sm:$0xf] %vm397, %v349
      %423 = vst.msk [vmem:[%s396 + $0x64] sm:$0xf] %vm397, %v351
      %424 = vst.msk [vmem:[%s396 + $0x68] sm:$0xf] %vm397, %v353
      %425 = vst.msk [vmem:[%s396 + $0x6c] sm:$0xf] %vm397, %v355
      %426 = vst.msk [vmem:[%s396 + $0x70] sm:$0xf] %vm397, %v357
      %427 = vst.msk [vmem:[%s396 + $0x74] sm:$0xf] %vm397, %v359
      %428 = vst.msk [vmem:[%s396 + $0x78] sm:$0xf] %vm397, %v361
      %429 = vst.msk [vmem:[%s396 + $0x7c] sm:$0xf] %vm397, %v363
      %v430 = vrot.slane %v172, 7
      %v431 = vrot.slane %v174, 7
      %v432 = vrot.slane %v176, 7
      %v433 = vrot.slane %v178, 7
      %v434 = vrot.slane %v180, 7
      %v435 = vrot.slane %v182, 7
      %v436 = vrot.slane %v184, 7
      %v437 = vrot.slane %v186, 7
      %v438 = vrot.slane %v188, 7
      %v439 = vrot.slane %v190, 7
      %v440 = vrot.slane %v192, 7
      %v441 = vrot.slane %v194, 7
      %v442 = vrot.slane %v196, 7
      %v443 = vrot.slane %v198, 7
      %v444 = vrot.slane %v200, 7
      %v445 = vrot.slane %v202, 7
      %v446 = vrot.slane %v173, 7
      %v447 = vrot.slane %v175, 7
      %v448 = vrot.slane %v177, 7
      %v449 = vrot.slane %v179, 7
      %v450 = vrot.slane %v181, 7
      %v451 = vrot.slane %v183, 7
      %v452 = vrot.slane %v185, 7
      %v453 = vrot.slane %v187, 7
      %v454 = vrot.slane %v189, 7
      %v455 = vrot.slane %v191, 7
      %v456 = vrot.slane %v193, 7
      %v457 = vrot.slane %v195, 7
      %v458 = vrot.slane %v197, 7
      %v459 = vrot.slane %v199, 7
      %v460 = vrot.slane %v201, 7
      %v461 = vrot.slane %v203, 7
      %v462 = vlaneseq
      %v463 = vshrl.u32 %v462, 7
      %vm464 = vcmp.lt.s32.totalorder %v463, 1
      %v465 = vsel %vm464, %v430, %v446
      %v466 = vsel %vm464, %v431, %v447
      %v467 = vsel %vm464, %v432, %v448
      %v468 = vsel %vm464, %v433, %v449
      %v469 = vsel %vm464, %v434, %v450
      %v470 = vsel %vm464, %v435, %v451
      %v471 = vsel %vm464, %v436, %v452
      %v472 = vsel %vm464, %v437, %v453
      %v473 = vsel %vm464, %v438, %v454
      %v474 = vsel %vm464, %v439, %v455
      %v475 = vsel %vm464, %v440, %v456
      %v476 = vsel %vm464, %v441, %v457
      %v477 = vsel %vm464, %v442, %v458
      %v478 = vsel %vm464, %v443, %v459
      %v479 = vsel %vm464, %v444, %v460
      %v480 = vsel %vm464, %v445, %v461
      %v481 = vsel %vm464, %v446, %v430
      %v482 = vsel %vm464, %v447, %v431
      %v483 = vsel %vm464, %v448, %v432
      %v484 = vsel %vm464, %v449, %v433
      %v485 = vsel %vm464, %v450, %v434
      %v486 = vsel %vm464, %v451, %v435
      %v487 = vsel %vm464, %v452, %v436
      %v488 = vsel %vm464, %v453, %v437
      %v489 = vsel %vm464, %v454, %v438
      %v490 = vsel %vm464, %v455, %v439
      %v491 = vsel %vm464, %v456, %v440
      %v492 = vsel %vm464, %v457, %v441
      %v493 = vsel %vm464, %v458, %v442
      %v494 = vsel %vm464, %v459, %v443
      %v495 = vsel %vm464, %v460, %v444
      %v496 = vsel %vm464, %v461, %v445
      %v497 = vpack.c.bf16 %v465, %v481
      %v498 = vpack.c.bf16 %v466, %v482
      %v499 = vpack.c.bf16 %v467, %v483
      %v500 = vpack.c.bf16 %v468, %v484
      %v501 = vpack.c.bf16 %v469, %v485
      %v502 = vpack.c.bf16 %v470, %v486
      %v503 = vpack.c.bf16 %v471, %v487
      %v504 = vpack.c.bf16 %v472, %v488
      %v505 = vpack.c.bf16 %v473, %v489
      %v506 = vpack.c.bf16 %v474, %v490
      %v507 = vpack.c.bf16 %v475, %v491
      %v508 = vpack.c.bf16 %v476, %v492
      %v509 = vpack.c.bf16 %v477, %v493
      %v510 = vpack.c.bf16 %v478, %v494
      %v511 = vpack.c.bf16 %v479, %v495
      %v512 = vpack.c.bf16 %v480, %v496
      %v529 = vunpack.c.l.b16 %v497
      %v530 = vunpack.c.h.b16 %v497
      %v531 = vunpack.c.l.b16 %v498
      %v532 = vunpack.c.h.b16 %v498
      %v533 = vunpack.c.l.b16 %v499
      %v534 = vunpack.c.h.b16 %v499
      %v535 = vunpack.c.l.b16 %v500
      %v536 = vunpack.c.h.b16 %v500
      %v537 = vunpack.c.l.b16 %v501
      %v538 = vunpack.c.h.b16 %v501
      %v539 = vunpack.c.l.b16 %v502
      %v540 = vunpack.c.h.b16 %v502
      %v541 = vunpack.c.l.b16 %v503
      %v542 = vunpack.c.h.b16 %v503
      %v543 = vunpack.c.l.b16 %v504
      %v544 = vunpack.c.h.b16 %v504
      %v545 = vunpack.c.l.b16 %v505
      %v546 = vunpack.c.h.b16 %v505
      %v547 = vunpack.c.l.b16 %v506
      %v548 = vunpack.c.h.b16 %v506
      %v549 = vunpack.c.l.b16 %v507
      %v550 = vunpack.c.h.b16 %v507
      %v551 = vunpack.c.l.b16 %v508
      %v552 = vunpack.c.h.b16 %v508
      %v553 = vunpack.c.l.b16 %v509
      %v554 = vunpack.c.h.b16 %v509
      %v555 = vunpack.c.l.b16 %v510
      %v556 = vunpack.c.h.b16 %v510
      %v557 = vunpack.c.l.b16 %v511
      %v558 = vunpack.c.h.b16 %v511
      %v559 = vunpack.c.l.b16 %v512
      %v560 = vunpack.c.h.b16 %v512
      %v561 = vpack.c.b16 %v529, %v529
      %v562 = vpack.c.b16 %v530, %v530
      %v563 = vpack.c.b16 %v531, %v531
      %v564 = vpack.c.b16 %v532, %v532
      %v565 = vpack.c.b16 %v533, %v533
      %v566 = vpack.c.b16 %v534, %v534
      %v567 = vpack.c.b16 %v535, %v535
      %v568 = vpack.c.b16 %v536, %v536
      %v569 = vpack.c.b16 %v537, %v537
      %v570 = vpack.c.b16 %v538, %v538
      %v571 = vpack.c.b16 %v539, %v539
      %v572 = vpack.c.b16 %v540, %v540
      %v573 = vpack.c.b16 %v541, %v541
      %v574 = vpack.c.b16 %v542, %v542
      %v575 = vpack.c.b16 %v543, %v543
      %v576 = vpack.c.b16 %v544, %v544
      %v577 = vpack.c.b16 %v545, %v545
      %v578 = vpack.c.b16 %v546, %v546
      %v579 = vpack.c.b16 %v547, %v547
      %v580 = vpack.c.b16 %v548, %v548
      %v581 = vpack.c.b16 %v549, %v549
      %v582 = vpack.c.b16 %v550, %v550
      %v583 = vpack.c.b16 %v551, %v551
      %v584 = vpack.c.b16 %v552, %v552
      %v585 = vpack.c.b16 %v553, %v553
      %v586 = vpack.c.b16 %v554, %v554
      %v587 = vpack.c.b16 %v555, %v555
      %v588 = vpack.c.b16 %v556, %v556
      %v589 = vpack.c.b16 %v557, %v557
      %v590 = vpack.c.b16 %v558, %v558
      %v591 = vpack.c.b16 %v559, %v559
      %v592 = vpack.c.b16 %v560, %v560
      %vm625 = vcmask 27648
      %626 = vst.msk [vmem:[%s396] sm:$0xf] %vm625, %v561
      %627 = vst.msk [vmem:[%s396 + $0x4] sm:$0xf] %vm625, %v562
      %628 = vst.msk [vmem:[%s396 + $0x8] sm:$0xf] %vm625, %v563
      %629 = vst.msk [vmem:[%s396 + $0xc] sm:$0xf] %vm625, %v564
      %630 = vst.msk [vmem:[%s396 + $0x10] sm:$0xf] %vm625, %v565
      %631 = vst.msk [vmem:[%s396 + $0x14] sm:$0xf] %vm625, %v566
      %632 = vst.msk [vmem:[%s396 + $0x18] sm:$0xf] %vm625, %v567
      %633 = vst.msk [vmem:[%s396 + $0x1c] sm:$0xf] %vm625, %v568
      %634 = vst.msk [vmem:[%s396 + $0x20] sm:$0xf] %vm625, %v569
      %635 = vst.msk [vmem:[%s396 + $0x24] sm:$0xf] %vm625, %v570
      %636 = vst.msk [vmem:[%s396 + $0x28] sm:$0xf] %vm625, %v571
      %637 = vst.msk [vmem:[%s396 + $0x2c] sm:$0xf] %vm625, %v572
      %638 = vst.msk [vmem:[%s396 + $0x30] sm:$0xf] %vm625, %v573
      %639 = vst.msk [vmem:[%s396 + $0x34] sm:$0xf] %vm625, %v574
      %640 = vst.msk [vmem:[%s396 + $0x38] sm:$0xf] %vm625, %v575
      %641 = vst.msk [vmem:[%s396 + $0x3c] sm:$0xf] %vm625, %v576
      %642 = vst.msk [vmem:[%s396 + $0x40] sm:$0xf] %vm625, %v577
      %643 = vst.msk [vmem:[%s396 + $0x44] sm:$0xf] %vm625, %v578
      %644 = vst.msk [vmem:[%s396 + $0x48] sm:$0xf] %vm625, %v579
      %645 = vst.msk [vmem:[%s396 + $0x4c] sm:$0xf] %vm625, %v580
      %646 = vst.msk [vmem:[%s396 + $0x50] sm:$0xf] %vm625, %v581
      %647 = vst.msk [vmem:[%s396 + $0x54] sm:$0xf] %vm625, %v582
      %648 = vst.msk [vmem:[%s396 + $0x58] sm:$0xf] %vm625, %v583
      %649 = vst.msk [vmem:[%s396 + $0x5c] sm:$0xf] %vm625, %v584
      %650 = vst.msk [vmem:[%s396 + $0x60] sm:$0xf] %vm625, %v585
      %651 = vst.msk [vmem:[%s396 + $0x64] sm:$0xf] %vm625, %v586
      %652 = vst.msk [vmem:[%s396 + $0x68] sm:$0xf] %vm625, %v587
      %653 = vst.msk [vmem:[%s396 + $0x6c] sm:$0xf] %vm625, %v588
      %654 = vst.msk [vmem:[%s396 + $0x70] sm:$0xf] %vm625, %v589
      %655 = vst.msk [vmem:[%s396 + $0x74] sm:$0xf] %vm625, %v590
      %656 = vst.msk [vmem:[%s396 + $0x78] sm:$0xf] %vm625, %v591
      %657 = vst.msk [vmem:[%s396 + $0x7c] sm:$0xf] %vm625, %v592
      %v658 = vrot.slane %v172, 1
      %v659 = vrot.slane %v174, 1
      %v660 = vrot.slane %v176, 1
      %v661 = vrot.slane %v178, 1
      %v662 = vrot.slane %v180, 1
      %v663 = vrot.slane %v182, 1
      %v664 = vrot.slane %v184, 1
      %v665 = vrot.slane %v186, 1
      %v666 = vrot.slane %v188, 1
      %v667 = vrot.slane %v190, 1
      %v668 = vrot.slane %v192, 1
      %v669 = vrot.slane %v194, 1
      %v670 = vrot.slane %v196, 1
      %v671 = vrot.slane %v198, 1
      %v672 = vrot.slane %v200, 1
      %v673 = vrot.slane %v202, 1
      %v674 = vrot.slane %v173, 1
      %v675 = vrot.slane %v175, 1
      %v676 = vrot.slane %v177, 1
      %v677 = vrot.slane %v179, 1
      %v678 = vrot.slane %v181, 1
      %v679 = vrot.slane %v183, 1
      %v680 = vrot.slane %v185, 1
      %v681 = vrot.slane %v187, 1
      %v682 = vrot.slane %v189, 1
      %v683 = vrot.slane %v191, 1
      %v684 = vrot.slane %v193, 1
      %v685 = vrot.slane %v195, 1
      %v686 = vrot.slane %v197, 1
      %v687 = vrot.slane %v199, 1
      %v688 = vrot.slane %v201, 1
      %v689 = vrot.slane %v203, 1
      %vm690 = vcmp.lt.s32.totalorder %v463, 7
      %v691 = vsel %vm690, %v658, %v674
      %v692 = vsel %vm690, %v659, %v675
      %v693 = vsel %vm690, %v660, %v676
      %v694 = vsel %vm690, %v661, %v677
      %v695 = vsel %vm690, %v662, %v678
      %v696 = vsel %vm690, %v663, %v679
      %v697 = vsel %vm690, %v664, %v680
      %v698 = vsel %vm690, %v665, %v681
      %v699 = vsel %vm690, %v666, %v682
      %v700 = vsel %vm690, %v667, %v683
      %v701 = vsel %vm690, %v668, %v684
      %v702 = vsel %vm690, %v669, %v685
      %v703 = vsel %vm690, %v670, %v686
      %v704 = vsel %vm690, %v671, %v687
      %v705 = vsel %vm690, %v672, %v688
      %v706 = vsel %vm690, %v673, %v689
      %v707 = vsel %vm690, %v674, %v658
      %v708 = vsel %vm690, %v675, %v659
      %v709 = vsel %vm690, %v676, %v660
      %v710 = vsel %vm690, %v677, %v661
      %v711 = vsel %vm690, %v678, %v662
      %v712 = vsel %vm690, %v679, %v663
      %v713 = vsel %vm690, %v680, %v664
      %v714 = vsel %vm690, %v681, %v665
      %v715 = vsel %vm690, %v682, %v666
      %v716 = vsel %vm690, %v683, %v667
      %v717 = vsel %vm690, %v684, %v668
      %v718 = vsel %vm690, %v685, %v669
      %v719 = vsel %vm690, %v686, %v670
      %v720 = vsel %vm690, %v687, %v671
      %v721 = vsel %vm690, %v688, %v672
      %v722 = vsel %vm690, %v689, %v673
      %v723 = vpack.c.bf16 %v707, %v691
      %v724 = vpack.c.bf16 %v708, %v692
      %v725 = vpack.c.bf16 %v709, %v693
      %v726 = vpack.c.bf16 %v710, %v694
      %v727 = vpack.c.bf16 %v711, %v695
      %v728 = vpack.c.bf16 %v712, %v696
      %v729 = vpack.c.bf16 %v713, %v697
      %v730 = vpack.c.bf16 %v714, %v698
      %v731 = vpack.c.bf16 %v715, %v699
      %v732 = vpack.c.bf16 %v716, %v700
      %v733 = vpack.c.bf16 %v717, %v701
      %v734 = vpack.c.bf16 %v718, %v702
      %v735 = vpack.c.bf16 %v719, %v703
      %v736 = vpack.c.bf16 %v720, %v704
      %v737 = vpack.c.bf16 %v721, %v705
      %v738 = vpack.c.bf16 %v722, %v706
      %v755 = vunpack.c.l.b16 %v723
      %v756 = vunpack.c.h.b16 %v723
      %v757 = vunpack.c.l.b16 %v724
      %v758 = vunpack.c.h.b16 %v724
      %v759 = vunpack.c.l.b16 %v725
      %v760 = vunpack.c.h.b16 %v725
      %v761 = vunpack.c.l.b16 %v726
      %v762 = vunpack.c.h.b16 %v726
      %v763 = vunpack.c.l.b16 %v727
      %v764 = vunpack.c.h.b16 %v727
      %v765 = vunpack.c.l.b16 %v728
      %v766 = vunpack.c.h.b16 %v728
      %v767 = vunpack.c.l.b16 %v729
      %v768 = vunpack.c.h.b16 %v729
      %v769 = vunpack.c.l.b16 %v730
      %v770 = vunpack.c.h.b16 %v730
      %v771 = vunpack.c.l.b16 %v731
      %v772 = vunpack.c.h.b16 %v731
      %v773 = vunpack.c.l.b16 %v732
      %v774 = vunpack.c.h.b16 %v732
      %v775 = vunpack.c.l.b16 %v733
      %v776 = vunpack.c.h.b16 %v733
      %v777 = vunpack.c.l.b16 %v734
      %v778 = vunpack.c.h.b16 %v734
      %v779 = vunpack.c.l.b16 %v735
      %v780 = vunpack.c.h.b16 %v735
      %v781 = vunpack.c.l.b16 %v736
      %v782 = vunpack.c.h.b16 %v736
      %v783 = vunpack.c.l.b16 %v737
      %v784 = vunpack.c.h.b16 %v737
      %v785 = vunpack.c.l.b16 %v738
      %v786 = vunpack.c.h.b16 %v738
      %v787 = vpack.c.b16 %v755, %v755
      %v788 = vpack.c.b16 %v756, %v756
      %v789 = vpack.c.b16 %v757, %v757
      %v790 = vpack.c.b16 %v758, %v758
      %v791 = vpack.c.b16 %v759, %v759
      %v792 = vpack.c.b16 %v760, %v760
      %v793 = vpack.c.b16 %v761, %v761
      %v794 = vpack.c.b16 %v762, %v762
      %v795 = vpack.c.b16 %v763, %v763
      %v796 = vpack.c.b16 %v764, %v764
      %v797 = vpack.c.b16 %v765, %v765
      %v798 = vpack.c.b16 %v766, %v766
      %v799 = vpack.c.b16 %v767, %v767
      %v800 = vpack.c.b16 %v768, %v768
      %v801 = vpack.c.b16 %v769, %v769
      %v802 = vpack.c.b16 %v770, %v770
      %v803 = vpack.c.b16 %v771, %v771
      %v804 = vpack.c.b16 %v772, %v772
      %v805 = vpack.c.b16 %v773, %v773
      %v806 = vpack.c.b16 %v774, %v774
      %v807 = vpack.c.b16 %v775, %v775
      %v808 = vpack.c.b16 %v776, %v776
      %v809 = vpack.c.b16 %v777, %v777
      %v810 = vpack.c.b16 %v778, %v778
      %v811 = vpack.c.b16 %v779, %v779
      %v812 = vpack.c.b16 %v780, %v780
      %v813 = vpack.c.b16 %v781, %v781
      %v814 = vpack.c.b16 %v782, %v782
      %v815 = vpack.c.b16 %v783, %v783
      %v816 = vpack.c.b16 %v784, %v784
      %v817 = vpack.c.b16 %v785, %v785
      %v818 = vpack.c.b16 %v786, %v786
      %819 = vrot.lane.b32.xlu0 %v787, 8
      %v820 = vpop.permute.xlu0 %819
      %821 = vrot.lane.b32.xlu0 %v788, 8
      %v822 = vpop.permute.xlu0 %821
      %823 = vrot.lane.b32.xlu0 %v789, 8
      %v824 = vpop.permute.xlu0 %823
      %825 = vrot.lane.b32.xlu0 %v790, 8
      %v826 = vpop.permute.xlu0 %825
      %827 = vrot.lane.b32.xlu0 %v791, 8
      %v828 = vpop.permute.xlu0 %827
      %829 = vrot.lane.b32.xlu0 %v792, 8
      %v830 = vpop.permute.xlu0 %829
      %831 = vrot.lane.b32.xlu0 %v793, 8
      %v832 = vpop.permute.xlu0 %831
      %833 = vrot.lane.b32.xlu0 %v794, 8
      %v834 = vpop.permute.xlu0 %833
      %835 = vrot.lane.b32.xlu0 %v795, 8
      %v836 = vpop.permute.xlu0 %835
      %837 = vrot.lane.b32.xlu0 %v796, 8
      %v838 = vpop.permute.xlu0 %837
      %839 = vrot.lane.b32.xlu0 %v797, 8
      %v840 = vpop.permute.xlu0 %839
      %841 = vrot.lane.b32.xlu0 %v798, 8
      %v842 = vpop.permute.xlu0 %841
      %843 = vrot.lane.b32.xlu0 %v799, 8
      %v844 = vpop.permute.xlu0 %843
      %845 = vrot.lane.b32.xlu0 %v800, 8
      %v846 = vpop.permute.xlu0 %845
      %847 = vrot.lane.b32.xlu0 %v801, 8
      %v848 = vpop.permute.xlu0 %847
      %849 = vrot.lane.b32.xlu0 %v802, 8
      %v850 = vpop.permute.xlu0 %849
      %851 = vrot.lane.b32.xlu0 %v803, 8
      %v852 = vpop.permute.xlu0 %851
      %853 = vrot.lane.b32.xlu0 %v804, 8
      %v854 = vpop.permute.xlu0 %853
      %855 = vrot.lane.b32.xlu0 %v805, 8
      %v856 = vpop.permute.xlu0 %855
      %857 = vrot.lane.b32.xlu0 %v806, 8
      %v858 = vpop.permute.xlu0 %857
      %859 = vrot.lane.b32.xlu0 %v807, 8
      %v860 = vpop.permute.xlu0 %859
      %861 = vrot.lane.b32.xlu0 %v808, 8
      %v862 = vpop.permute.xlu0 %861
      %863 = vrot.lane.b32.xlu0 %v809, 8
      %v864 = vpop.permute.xlu0 %863
      %865 = vrot.lane.b32.xlu0 %v810, 8
      %v866 = vpop.permute.xlu0 %865
      %867 = vrot.lane.b32.xlu0 %v811, 8
      %v868 = vpop.permute.xlu0 %867
      %869 = vrot.lane.b32.xlu0 %v812, 8
      %v870 = vpop.permute.xlu0 %869
      %871 = vrot.lane.b32.xlu0 %v813, 8
      %v872 = vpop.permute.xlu0 %871
      %873 = vrot.lane.b32.xlu0 %v814, 8
      %v874 = vpop.permute.xlu0 %873
      %875 = vrot.lane.b32.xlu0 %v815, 8
      %v876 = vpop.permute.xlu0 %875
      %877 = vrot.lane.b32.xlu0 %v816, 8
      %v878 = vpop.permute.xlu0 %877
      %879 = vrot.lane.b32.xlu0 %v817, 8
      %v880 = vpop.permute.xlu0 %879
      %881 = vrot.lane.b32.xlu0 %v818, 8
      %v882 = vpop.permute.xlu0 %881
      %vm915 = vcmask 93248
      %916 = vst.msk [vmem:[%s396] sm:$0xf] %vm915, %v820
      %917 = vst.msk [vmem:[%s396 + $0x4] sm:$0xf] %vm915, %v822
      %918 = vst.msk [vmem:[%s396 + $0x8] sm:$0xf] %vm915, %v824
      %919 = vst.msk [vmem:[%s396 + $0xc] sm:$0xf] %vm915, %v826
      %920 = vst.msk [vmem:[%s396 + $0x10] sm:$0xf] %vm915, %v828
      %921 = vst.msk [vmem:[%s396 + $0x14] sm:$0xf] %vm915, %v830
      %922 = vst.msk [vmem:[%s396 + $0x18] sm:$0xf] %vm915, %v832
      %923 = vst.msk [vmem:[%s396 + $0x1c] sm:$0xf] %vm915, %v834
      %924 = vst.msk [vmem:[%s396 + $0x20] sm:$0xf] %vm915, %v836
      %925 = vst.msk [vmem:[%s396 + $0x24] sm:$0xf] %vm915, %v838
      %926 = vst.msk [vmem:[%s396 + $0x28] sm:$0xf] %vm915, %v840
      %927 = vst.msk [vmem:[%s396 + $0x2c] sm:$0xf] %vm915, %v842
      %928 = vst.msk [vmem:[%s396 + $0x30] sm:$0xf] %vm915, %v844
      %929 = vst.msk [vmem:[%s396 + $0x34] sm:$0xf] %vm915, %v846
      %930 = vst.msk [vmem:[%s396 + $0x38] sm:$0xf] %vm915, %v848
      %931 = vst.msk [vmem:[%s396 + $0x3c] sm:$0xf] %vm915, %v850
      %932 = vst.msk [vmem:[%s396 + $0x40] sm:$0xf] %vm915, %v852
      %933 = vst.msk [vmem:[%s396 + $0x44] sm:$0xf] %vm915, %v854
      %934 = vst.msk [vmem:[%s396 + $0x48] sm:$0xf] %vm915, %v856
      %935 = vst.msk [vmem:[%s396 + $0x4c] sm:$0xf] %vm915, %v858
      %936 = vst.msk [vmem:[%s396 + $0x50] sm:$0xf] %vm915, %v860
      %937 = vst.msk [vmem:[%s396 + $0x54] sm:$0xf] %vm915, %v862
      %938 = vst.msk [vmem:[%s396 + $0x58] sm:$0xf] %vm915, %v864
      %939 = vst.msk [vmem:[%s396 + $0x5c] sm:$0xf] %vm915, %v866
      %940 = vst.msk [vmem:[%s396 + $0x60] sm:$0xf] %vm915, %v868
      %941 = vst.msk [vmem:[%s396 + $0x64] sm:$0xf] %vm915, %v870
      %942 = vst.msk [vmem:[%s396 + $0x68] sm:$0xf] %vm915, %v872
      %943 = vst.msk [vmem:[%s396 + $0x6c] sm:$0xf] %vm915, %v874
      %944 = vst.msk [vmem:[%s396 + $0x70] sm:$0xf] %vm915, %v876
      %945 = vst.msk [vmem:[%s396 + $0x74] sm:$0xf] %vm915, %v878
      %946 = vst.msk [vmem:[%s396 + $0x78] sm:$0xf] %vm915, %v880
      %947 = vst.msk [vmem:[%s396 + $0x7c] sm:$0xf] %vm915, %v882
      %v948 = vpack.c.bf16 %v172, %v172
      %v949 = vpack.c.bf16 %v174, %v174
      %v950 = vpack.c.bf16 %v176, %v176
      %v951 = vpack.c.bf16 %v178, %v178
      %v952 = vpack.c.bf16 %v180, %v180
      %v953 = vpack.c.bf16 %v182, %v182
      %v954 = vpack.c.bf16 %v184, %v184
      %v955 = vpack.c.bf16 %v186, %v186
      %v956 = vpack.c.bf16 %v188, %v188
      %v957 = vpack.c.bf16 %v190, %v190
      %v958 = vpack.c.bf16 %v192, %v192
      %v959 = vpack.c.bf16 %v194, %v194
      %v960 = vpack.c.bf16 %v196, %v196
      %v961 = vpack.c.bf16 %v198, %v198
      %v962 = vpack.c.bf16 %v200, %v200
      %v963 = vpack.c.bf16 %v202, %v202
      %v980 = vunpack.c.l.b16 %v948
      %v981 = vunpack.c.l.b16 %v949
      %v982 = vunpack.c.l.b16 %v950
      %v983 = vunpack.c.l.b16 %v951
      %v984 = vunpack.c.l.b16 %v952
      %v985 = vunpack.c.l.b16 %v953
      %v986 = vunpack.c.l.b16 %v954
      %v987 = vunpack.c.l.b16 %v955
      %v988 = vunpack.c.l.b16 %v956
      %v989 = vunpack.c.l.b16 %v957
      %v990 = vunpack.c.l.b16 %v958
      %v991 = vunpack.c.l.b16 %v959
      %v992 = vunpack.c.l.b16 %v960
      %v993 = vunpack.c.l.b16 %v961
      %v994 = vunpack.c.l.b16 %v962
      %v995 = vunpack.c.l.b16 %v963
      %v996 = vpack.c.b16 %v980, %v980
      %v997 = vpack.c.b16 %v981, %v981
      %v998 = vpack.c.b16 %v982, %v982
      %v999 = vpack.c.b16 %v983, %v983
      %v1000 = vpack.c.b16 %v984, %v984
      %v1001 = vpack.c.b16 %v985, %v985
      %v1002 = vpack.c.b16 %v986, %v986
      %v1003 = vpack.c.b16 %v987, %v987
      %v1004 = vpack.c.b16 %v988, %v988
      %v1005 = vpack.c.b16 %v989, %v989
      %v1006 = vpack.c.b16 %v990, %v990
      %v1007 = vpack.c.b16 %v991, %v991
      %v1008 = vpack.c.b16 %v992, %v992
      %v1009 = vpack.c.b16 %v993, %v993
      %v1010 = vpack.c.b16 %v994, %v994
      %v1011 = vpack.c.b16 %v995, %v995
      %v1013 = vshrl.u32 %v996, 16
      %v1015 = vrot.slane %v1013, 4
      %v1016 = vrot.slane %v1015, 4
      %v1018 = vshrl.u32 %v997, 16
      %v1020 = vrot.slane %v1018, 4
      %v1021 = vrot.slane %v1020, 4
      %v1023 = vshrl.u32 %v998, 16
      %v1025 = vrot.slane %v1023, 4
      %v1026 = vrot.slane %v1025, 4
      %v1028 = vshrl.u32 %v999, 16
      %v1030 = vrot.slane %v1028, 4
      %v1031 = vrot.slane %v1030, 4
      %v1033 = vshrl.u32 %v1000, 16
      %v1035 = vrot.slane %v1033, 4
      %v1036 = vrot.slane %v1035, 4
      %v1038 = vshrl.u32 %v1001, 16
      %v1040 = vrot.slane %v1038, 4
      %v1041 = vrot.slane %v1040, 4
      %v1043 = vshrl.u32 %v1002, 16
      %v1045 = vrot.slane %v1043, 4
      %v1046 = vrot.slane %v1045, 4
      %v1048 = vshrl.u32 %v1003, 16
      %v1050 = vrot.slane %v1048, 4
      %v1051 = vrot.slane %v1050, 4
      %v1053 = vshrl.u32 %v1004, 16
      %v1055 = vrot.slane %v1053, 4
      %v1056 = vrot.slane %v1055, 4
      %v1058 = vshrl.u32 %v1005, 16
      %v1060 = vrot.slane %v1058, 4
      %v1061 = vrot.slane %v1060, 4
      %v1063 = vshrl.u32 %v1006, 16
      %v1065 = vrot.slane %v1063, 4
      %v1066 = vrot.slane %v1065, 4
      %v1068 = vshrl.u32 %v1007, 16
      %v1070 = vrot.slane %v1068, 4
      %v1071 = vrot.slane %v1070, 4
      %v1073 = vshrl.u32 %v1008, 16
      %v1075 = vrot.slane %v1073, 4
      %v1076 = vrot.slane %v1075, 4
      %v1078 = vshrl.u32 %v1009, 16
      %v1080 = vrot.slane %v1078, 4
      %v1081 = vrot.slane %v1080, 4
      %v1083 = vshrl.u32 %v1010, 16
      %v1085 = vrot.slane %v1083, 4
      %v1086 = vrot.slane %v1085, 4
      %v1088 = vshrl.u32 %v1011, 16
      %v1090 = vrot.slane %v1088, 4
      %v1091 = vrot.slane %v1090, 4
      %vm1108 = vcmask 24576
      %vm1109 = vsmask.f32 256
      %vm1110 = vmand %vm1108, %vm1109
      %v1111 = vld [vmem:[%s396] sm:$0x1]
      %v1112 = vsel %vm1110, %v1016, %v1111
      %1113 = vst [vmem:[%s396] sm:$0x1] %v1112
      %v1114 = vld [vmem:[%s396 + $0x8] sm:$0x1]
      %v1115 = vsel %vm1110, %v1021, %v1114
      %1116 = vst [vmem:[%s396 + $0x8] sm:$0x1] %v1115
      %v1117 = vld [vmem:[%s396 + $0x10] sm:$0x1]
      %v1118 = vsel %vm1110, %v1026, %v1117
      %1119 = vst [vmem:[%s396 + $0x10] sm:$0x1] %v1118
      %v1120 = vld [vmem:[%s396 + $0x18] sm:$0x1]
      %v1121 = vsel %vm1110, %v1031, %v1120
      %1122 = vst [vmem:[%s396 + $0x18] sm:$0x1] %v1121
      %v1123 = vld [vmem:[%s396 + $0x20] sm:$0x1]
      %v1124 = vsel %vm1110, %v1036, %v1123
      %1125 = vst [vmem:[%s396 + $0x20] sm:$0x1] %v1124
      %v1126 = vld [vmem:[%s396 + $0x28] sm:$0x1]
      %v1127 = vsel %vm1110, %v1041, %v1126
      %1128 = vst [vmem:[%s396 + $0x28] sm:$0x1] %v1127
      %v1129 = vld [vmem:[%s396 + $0x30] sm:$0x1]
      %v1130 = vsel %vm1110, %v1046, %v1129
      %1131 = vst [vmem:[%s396 + $0x30] sm:$0x1] %v1130
      %v1132 = vld [vmem:[%s396 + $0x38] sm:$0x1]
      %v1133 = vsel %vm1110, %v1051, %v1132
      %1134 = vst [vmem:[%s396 + $0x38] sm:$0x1] %v1133
      %v1135 = vld [vmem:[%s396 + $0x40] sm:$0x1]
      %v1136 = vsel %vm1110, %v1056, %v1135
      %1137 = vst [vmem:[%s396 + $0x40] sm:$0x1] %v1136
      %v1138 = vld [vmem:[%s396 + $0x48] sm:$0x1]
      %v1139 = vsel %vm1110, %v1061, %v1138
      %1140 = vst [vmem:[%s396 + $0x48] sm:$0x1] %v1139
      %v1141 = vld [vmem:[%s396 + $0x50] sm:$0x1]
      %v1142 = vsel %vm1110, %v1066, %v1141
      %1143 = vst [vmem:[%s396 + $0x50] sm:$0x1] %v1142
      %v1144 = vld [vmem:[%s396 + $0x58] sm:$0x1]
      %v1145 = vsel %vm1110, %v1071, %v1144
      %1146 = vst [vmem:[%s396 + $0x58] sm:$0x1] %v1145
      %v1147 = vld [vmem:[%s396 + $0x60] sm:$0x1]
      %v1148 = vsel %vm1110, %v1076, %v1147
      %1149 = vst [vmem:[%s396 + $0x60] sm:$0x1] %v1148
      %v1150 = vld [vmem:[%s396 + $0x68] sm:$0x1]
      %v1151 = vsel %vm1110, %v1081, %v1150
      %1152 = vst [vmem:[%s396 + $0x68] sm:$0x1] %v1151
      %v1153 = vld [vmem:[%s396 + $0x70] sm:$0x1]
      %v1154 = vsel %vm1110, %v1086, %v1153
      %1155 = vst [vmem:[%s396 + $0x70] sm:$0x1] %v1154
      %v1156 = vld [vmem:[%s396 + $0x78] sm:$0x1]
      %v1157 = vsel %vm1110, %v1091, %v1156
      %1158 = vst [vmem:[%s396 + $0x78] sm:$0x1] %v1157
      %v1159 = vpack.c.bf16 %v173, %v173
      %v1160 = vpack.c.bf16 %v175, %v175
      %v1161 = vpack.c.bf16 %v177, %v177
      %v1162 = vpack.c.bf16 %v179, %v179
      %v1163 = vpack.c.bf16 %v181, %v181
      %v1164 = vpack.c.bf16 %v183, %v183
      %v1165 = vpack.c.bf16 %v185, %v185
      %v1166 = vpack.c.bf16 %v187, %v187
      %v1167 = vpack.c.bf16 %v189, %v189
      %v1168 = vpack.c.bf16 %v191, %v191
      %v1169 = vpack.c.bf16 %v193, %v193
      %v1170 = vpack.c.bf16 %v195, %v195
      %v1171 = vpack.c.bf16 %v197, %v197
      %v1172 = vpack.c.bf16 %v199, %v199
      %v1173 = vpack.c.bf16 %v201, %v201
      %v1174 = vpack.c.bf16 %v203, %v203
      %v1191 = vunpack.c.l.b16 %v1159
      %v1192 = vunpack.c.l.b16 %v1160
      %v1193 = vunpack.c.l.b16 %v1161
      %v1194 = vunpack.c.l.b16 %v1162
      %v1195 = vunpack.c.l.b16 %v1163
      %v1196 = vunpack.c.l.b16 %v1164
      %v1197 = vunpack.c.l.b16 %v1165
      %v1198 = vunpack.c.l.b16 %v1166
      %v1199 = vunpack.c.l.b16 %v1167
      %v1200 = vunpack.c.l.b16 %v1168
      %v1201 = vunpack.c.l.b16 %v1169
      %v1202 = vunpack.c.l.b16 %v1170
      %v1203 = vunpack.c.l.b16 %v1171
      %v1204 = vunpack.c.l.b16 %v1172
      %v1205 = vunpack.c.l.b16 %v1173
      %v1206 = vunpack.c.l.b16 %v1174
      %v1207 = vpack.c.b16 %v1191, %v1191
      %v1208 = vpack.c.b16 %v1192, %v1192
      %v1209 = vpack.c.b16 %v1193, %v1193
      %v1210 = vpack.c.b16 %v1194, %v1194
      %v1211 = vpack.c.b16 %v1195, %v1195
      %v1212 = vpack.c.b16 %v1196, %v1196
      %v1213 = vpack.c.b16 %v1197, %v1197
      %v1214 = vpack.c.b16 %v1198, %v1198
      %v1215 = vpack.c.b16 %v1199, %v1199
      %v1216 = vpack.c.b16 %v1200, %v1200
      %v1217 = vpack.c.b16 %v1201, %v1201
      %v1218 = vpack.c.b16 %v1202, %v1202
      %v1219 = vpack.c.b16 %v1203, %v1203
      %v1220 = vpack.c.b16 %v1204, %v1204
      %v1221 = vpack.c.b16 %v1205, %v1205
      %v1222 = vpack.c.b16 %v1206, %v1206
      %v1224 = vshll.u32 %v1207, 16
      %v1227 = vshll.u32 %v1208, 16
      %v1230 = vshll.u32 %v1209, 16
      %v1233 = vshll.u32 %v1210, 16
      %v1236 = vshll.u32 %v1211, 16
      %v1239 = vshll.u32 %v1212, 16
      %v1242 = vshll.u32 %v1213, 16
      %v1245 = vshll.u32 %v1214, 16
      %v1248 = vshll.u32 %v1215, 16
      %v1251 = vshll.u32 %v1216, 16
      %v1254 = vshll.u32 %v1217, 16
      %v1257 = vshll.u32 %v1218, 16
      %v1260 = vshll.u32 %v1219, 16
      %v1263 = vshll.u32 %v1220, 16
      %v1266 = vshll.u32 %v1221, 16
      %v1269 = vshll.u32 %v1222, 16
      %1271 = vrot.lane.b32.xlu0 %v1224, 8
      %v1272 = vpop.permute.xlu0 %1271
      %1273 = vrot.lane.b32.xlu0 %v1227, 8
      %v1274 = vpop.permute.xlu0 %1273
      %1275 = vrot.lane.b32.xlu0 %v1230, 8
      %v1276 = vpop.permute.xlu0 %1275
      %1277 = vrot.lane.b32.xlu0 %v1233, 8
      %v1278 = vpop.permute.xlu0 %1277
      %1279 = vrot.lane.b32.xlu0 %v1236, 8
      %v1280 = vpop.permute.xlu0 %1279
      %1281 = vrot.lane.b32.xlu0 %v1239, 8
      %v1282 = vpop.permute.xlu0 %1281
      %1283 = vrot.lane.b32.xlu0 %v1242, 8
      %v1284 = vpop.permute.xlu0 %1283
      %1285 = vrot.lane.b32.xlu0 %v1245, 8
      %v1286 = vpop.permute.xlu0 %1285
      %1287 = vrot.lane.b32.xlu0 %v1248, 8
      %v1288 = vpop.permute.xlu0 %1287
      %1289 = vrot.lane.b32.xlu0 %v1251, 8
      %v1290 = vpop.permute.xlu0 %1289
      %1291 = vrot.lane.b32.xlu0 %v1254, 8
      %v1292 = vpop.permute.xlu0 %1291
      %1293 = vrot.lane.b32.xlu0 %v1257, 8
      %v1294 = vpop.permute.xlu0 %1293
      %1295 = vrot.lane.b32.xlu0 %v1260, 8
      %v1296 = vpop.permute.xlu0 %1295
      %1297 = vrot.lane.b32.xlu0 %v1263, 8
      %v1298 = vpop.permute.xlu0 %1297
      %1299 = vrot.lane.b32.xlu0 %v1266, 8
      %v1300 = vpop.permute.xlu0 %1299
      %1301 = vrot.lane.b32.xlu0 %v1269, 8
      %v1302 = vpop.permute.xlu0 %1301
      %vm1319 = vcmask 93251
      %vm1320 = vsmask.f32 7950
      %vm1321 = vmand %vm1319, %vm1320
      %v1322 = vld [vmem:[%s396 + $0x4] sm:$0x8]
      %v1323 = vsel %vm1321, %v1272, %v1322
      %1324 = vst [vmem:[%s396 + $0x4] sm:$0x8] %v1323
      %v1325 = vld [vmem:[%s396 + $0xc] sm:$0x8]
      %v1326 = vsel %vm1321, %v1274, %v1325
      %1327 = vst [vmem:[%s396 + $0xc] sm:$0x8] %v1326
      %v1328 = vld [vmem:[%s396 + $0x14] sm:$0x8]
      %v1329 = vsel %vm1321, %v1276, %v1328
      %1330 = vst [vmem:[%s396 + $0x14] sm:$0x8] %v1329
      %v1331 = vld [vmem:[%s396 + $0x1c] sm:$0x8]
      %v1332 = vsel %vm1321, %v1278, %v1331
      %1333 = vst [vmem:[%s396 + $0x1c] sm:$0x8] %v1332
      %v1334 = vld [vmem:[%s396 + $0x24] sm:$0x8]
      %v1335 = vsel %vm1321, %v1280, %v1334
      %1336 = vst [vmem:[%s396 + $0x24] sm:$0x8] %v1335
      %v1337 = vld [vmem:[%s396 + $0x2c] sm:$0x8]
      %v1338 = vsel %vm1321, %v1282, %v1337
      %1339 = vst [vmem:[%s396 + $0x2c] sm:$0x8] %v1338
      %v1340 = vld [vmem:[%s396 + $0x34] sm:$0x8]
      %v1341 = vsel %vm1321, %v1284, %v1340
      %1342 = vst [vmem:[%s396 + $0x34] sm:$0x8] %v1341
      %v1343 = vld [vmem:[%s396 + $0x3c] sm:$0x8]
      %v1344 = vsel %vm1321, %v1286, %v1343
      %1345 = vst [vmem:[%s396 + $0x3c] sm:$0x8] %v1344
      %v1346 = vld [vmem:[%s396 + $0x44] sm:$0x8]
      %v1347 = vsel %vm1321, %v1288, %v1346
      %1348 = vst [vmem:[%s396 + $0x44] sm:$0x8] %v1347
      %v1349 = vld [vmem:[%s396 + $0x4c] sm:$0x8]
      %v1350 = vsel %vm1321, %v1290, %v1349
      %1351 = vst [vmem:[%s396 + $0x4c] sm:$0x8] %v1350
      %v1352 = vld [vmem:[%s396 + $0x54] sm:$0x8]
      %v1353 = vsel %vm1321, %v1292, %v1352
      %1354 = vst [vmem:[%s396 + $0x54] sm:$0x8] %v1353
      %v1355 = vld [vmem:[%s396 + $0x5c] sm:$0x8]
      %v1356 = vsel %vm1321, %v1294, %v1355
      %1357 = vst [vmem:[%s396 + $0x5c] sm:$0x8] %v1356
      %v1358 = vld [vmem:[%s396 + $0x64] sm:$0x8]
      %v1359 = vsel %vm1321, %v1296, %v1358
      %1360 = vst [vmem:[%s396 + $0x64] sm:$0x8] %v1359
      %v1361 = vld [vmem:[%s396 + $0x6c] sm:$0x8]
      %v1362 = vsel %vm1321, %v1298, %v1361
      %1363 = vst [vmem:[%s396 + $0x6c] sm:$0x8] %v1362
      %v1364 = vld [vmem:[%s396 + $0x74] sm:$0x8]
      %v1365 = vsel %vm1321, %v1300, %v1364
      %1366 = vst [vmem:[%s396 + $0x74] sm:$0x8] %v1365
      %v1367 = vld [vmem:[%s396 + $0x7c] sm:$0x8]
      %v1368 = vsel %vm1321, %v1302, %v1367
      %1369 = vst [vmem:[%s396 + $0x7c] sm:$0x8] %v1368
      %s1370 = scalar_lea.vmem [#allocation2], 16
      %v1371 = vld [vmem:[%s1370] sm:$0xf]
      %v1372 = vld [vmem:[%s1370 + $0x4] sm:$0xf]
      %vm1373 = vcmask 93184
      %1374 = vst.msk [vmem:[#allocation2] sm:$0xf] %vm1373, %v1371
      %1375 = vst.msk [vmem:[#allocation2 + $0x4] sm:$0xf] %vm1373, %v1372
      %s1376 = scalar_lea.vmem [#allocation2], 120
      %v1377 = vld [vmem:[%s1376] sm:$0xf]
      %v1378 = vld [vmem:[%s1376 + $0x4] sm:$0xf]
      %s1379 = scalar_lea.vmem [#allocation2], 136
      %1380 = vst.msk [vmem:[%s1379] sm:$0xf] %vm1373, %v1377
      %1381 = vst.msk [vmem:[%s1379 + $0x4] sm:$0xf] %vm1373, %v1378
      %v1382 = vld [vmem:[#allocation2] sm:$0xf]
      %v1383 = vld [vmem:[#allocation2 + $0x4] sm:$0xf]
      %v1384 = vld [vmem:[#allocation2 + $0x8] sm:$0xf]
      %v1385 = vld [vmem:[#allocation2 + $0xc] sm:$0xf]
      %v1386 = vld [vmem:[#allocation2 + $0x10] sm:$0xf]
      %v1387 = vld [vmem:[#allocation2 + $0x14] sm:$0xf]
      %v1388 = vld [vmem:[#allocation2 + $0x18] sm:$0xf]
      %v1389 = vld [vmem:[#allocation2 + $0x1c] sm:$0xf]
      %v1390 = vld [vmem:[#allocation2 + $0x20] sm:$0xf]
      %v1391 = vld [vmem:[#allocation2 + $0x24] sm:$0xf]
      %v1392 = vld [vmem:[#allocation2 + $0x28] sm:$0xf]
      %v1393 = vld [vmem:[#allocation2 + $0x2c] sm:$0xf]
      %v1394 = vld [vmem:[#allocation2 + $0x30] sm:$0xf]
      %v1395 = vld [vmem:[#allocation2 + $0x34] sm:$0xf]
      %v1396 = vld [vmem:[#allocation2 + $0x38] sm:$0xf]
      %v1397 = vld [vmem:[#allocation2 + $0x3c] sm:$0xf]
      %v1398 = vld [vmem:[#allocation2 + $0x40] sm:$0xf]
      %v1399 = vld [vmem:[#allocation2 + $0x44] sm:$0xf]
      %v1400 = vld [vmem:[#allocation2 + $0x48] sm:$0xf]
      %v1401 = vld [vmem:[#allocation2 + $0x4c] sm:$0xf]
      %v1402 = vld [vmem:[#allocation2 + $0x50] sm:$0xf]
      %v1403 = vld [vmem:[#allocation2 + $0x54] sm:$0xf]
      %v1404 = vld [vmem:[#allocation2 + $0x58] sm:$0xf]
      %v1405 = vld [vmem:[#allocation2 + $0x5c] sm:$0xf]
      %v1406 = vld [vmem:[#allocation2 + $0x60] sm:$0xf]
      %v1407 = vld [vmem:[#allocation2 + $0x64] sm:$0xf]
      %v1408 = vld [vmem:[#allocation2 + $0x68] sm:$0xf]
      %v1409 = vld [vmem:[#allocation2 + $0x6c] sm:$0xf]
      %v1410 = vld [vmem:[#allocation2 + $0x70] sm:$0xf]
      %v1411 = vld [vmem:[#allocation2 + $0x74] sm:$0xf]
      %v1412 = vld [vmem:[#allocation2 + $0x78] sm:$0xf]
      %v1413 = vld [vmem:[#allocation2 + $0x7c] sm:$0xf]
      %v1414 = vld [vmem:[%s1] sm:$0xf]
      %v1415 = vld [vmem:[%s1 + $0x4] sm:$0x3]
      %v1416 = vld [vmem:[%s396] sm:$0xf]
      %v1417 = vld [vmem:[%s396 + $0x4] sm:$0xf]
      %v1418 = vld [vmem:[%s396 + $0x8] sm:$0xf]
      %v1419 = vld [vmem:[%s396 + $0xc] sm:$0xf]
      %v1420 = vld [vmem:[%s396 + $0x10] sm:$0xf]
      %v1421 = vld [vmem:[%s396 + $0x14] sm:$0xf]
      %v1422 = vld [vmem:[%s396 + $0x18] sm:$0xf]
      %v1423 = vld [vmem:[%s396 + $0x1c] sm:$0xf]
      %v1424 = vld [vmem:[%s396 + $0x20] sm:$0xf]
      %v1425 = vld [vmem:[%s396 + $0x24] sm:$0xf]
      %v1426 = vld [vmem:[%s396 + $0x28] sm:$0xf]
      %v1427 = vld [vmem:[%s396 + $0x2c] sm:$0xf]
      %v1428 = vld [vmem:[%s396 + $0x30] sm:$0xf]
      %v1429 = vld [vmem:[%s396 + $0x34] sm:$0xf]
      %v1430 = vld [vmem:[%s396 + $0x38] sm:$0xf]
      %v1431 = vld [vmem:[%s396 + $0x3c] sm:$0xf]
      %v1432 = vld [vmem:[%s396 + $0x40] sm:$0xf]
      %v1433 = vld [vmem:[%s396 + $0x44] sm:$0xf]
      %v1434 = vld [vmem:[%s396 + $0x48] sm:$0xf]
      %v1435 = vld [vmem:[%s396 + $0x4c] sm:$0xf]
      %v1436 = vld [vmem:[%s396 + $0x50] sm:$0xf]
      %v1437 = vld [vmem:[%s396 + $0x54] sm:$0xf]
      %v1438 = vld [vmem:[%s396 + $0x58] sm:$0xf]
      %v1439 = vld [vmem:[%s396 + $0x5c] sm:$0xf]
      %v1440 = vld [vmem:[%s396 + $0x60] sm:$0xf]
      %v1441 = vld [vmem:[%s396 + $0x64] sm:$0xf]
      %v1442 = vld [vmem:[%s396 + $0x68] sm:$0xf]
      %v1443 = vld [vmem:[%s396 + $0x6c] sm:$0xf]
      %v1444 = vld [vmem:[%s396 + $0x70] sm:$0xf]
      %v1445 = vld [vmem:[%s396 + $0x74] sm:$0xf]
      %v1446 = vld [vmem:[%s396 + $0x78] sm:$0xf]
      %v1447 = vld [vmem:[%s396 + $0x7c] sm:$0xf]
      %s1448 = scalar_lea.vmem %s1, 8
      %v1449 = vld [vmem:[%s1448] sm:$0xf]
      %v1450 = vld [vmem:[%s1448 + $0x4] sm:$0x3]
      %v1483 = vunpack.c.l.b16 %v1416
      %v1484 = vunpack.c.l.b16 %v1417
      %v1485 = vunpack.c.l.b16 %v1418
      %v1486 = vunpack.c.l.b16 %v1419
      %v1487 = vunpack.c.l.b16 %v1420
      %v1488 = vunpack.c.l.b16 %v1421
      %v1489 = vunpack.c.l.b16 %v1422
      %v1490 = vunpack.c.l.b16 %v1423
      %v1491 = vunpack.c.l.b16 %v1424
      %v1492 = vunpack.c.l.b16 %v1425
      %v1493 = vunpack.c.l.b16 %v1426
      %v1494 = vunpack.c.l.b16 %v1427
      %v1495 = vunpack.c.l.b16 %v1428
      %v1496 = vunpack.c.l.b16 %v1429
      %v1497 = vunpack.c.l.b16 %v1430
      %v1498 = vunpack.c.l.b16 %v1431
      %v1499 = vunpack.c.l.b16 %v1432
      %v1500 = vunpack.c.l.b16 %v1433
      %v1501 = vunpack.c.l.b16 %v1434
      %v1502 = vunpack.c.l.b16 %v1435
      %v1503 = vunpack.c.l.b16 %v1436
      %v1504 = vunpack.c.l.b16 %v1437
      %v1505 = vunpack.c.l.b16 %v1438
      %v1506 = vunpack.c.l.b16 %v1439
      %v1507 = vunpack.c.l.b16 %v1440
      %v1508 = vunpack.c.l.b16 %v1441
      %v1509 = vunpack.c.l.b16 %v1442
      %v1510 = vunpack.c.l.b16 %v1443
      %v1511 = vunpack.c.l.b16 %v1444
      %v1512 = vunpack.c.l.b16 %v1445
      %v1513 = vunpack.c.l.b16 %v1446
      %v1514 = vunpack.c.l.b16 %v1447
      %v1515 = vpack.c.b16 %v1484, %v1483
      %v1516 = vpack.c.b16 %v1486, %v1485
      %v1517 = vpack.c.b16 %v1488, %v1487
      %v1518 = vpack.c.b16 %v1490, %v1489
      %v1519 = vpack.c.b16 %v1492, %v1491
      %v1520 = vpack.c.b16 %v1494, %v1493
      %v1521 = vpack.c.b16 %v1496, %v1495
      %v1522 = vpack.c.b16 %v1498, %v1497
      %v1523 = vpack.c.b16 %v1500, %v1499
      %v1524 = vpack.c.b16 %v1502, %v1501
      %v1525 = vpack.c.b16 %v1504, %v1503
      %v1526 = vpack.c.b16 %v1506, %v1505
      %v1527 = vpack.c.b16 %v1508, %v1507
      %v1528 = vpack.c.b16 %v1510, %v1509
      %v1529 = vpack.c.b16 %v1512, %v1511
      %v1530 = vpack.c.b16 %v1514, %v1513
      %v1533 = vunpack.c.l.b16 %v1449
      %v1534 = vunpack.c.l.b16 %v1450
      %v1535 = vpack.c.b16 %v1534, %v1533
      %vm1536 = vcmask 97280
      %v1538 = vsel %vm1536, %v1515, 0
      %v1541 = vsel %vm1536, %v1516, 0
      %v1544 = vsel %vm1536, %v1517, 0
      %v1547 = vsel %vm1536, %v1518, 0
      %v1550 = vsel %vm1536, %v1519, 0
      %v1553 = vsel %vm1536, %v1520, 0
      %v1556 = vsel %vm1536, %v1521, 0
      %v1559 = vsel %vm1536, %v1522, 0
      %v1562 = vsel %vm1536, %v1523, 0
      %v1565 = vsel %vm1536, %v1524, 0
      %v1568 = vsel %vm1536, %v1525, 0
      %v1571 = vsel %vm1536, %v1526, 0
      %v1574 = vsel %vm1536, %v1527, 0
      %v1577 = vsel %vm1536, %v1528, 0
      %v1580 = vsel %vm1536, %v1529, 0
      %v1583 = vsel %vm1536, %v1530, 0
      %vm1585 = vcmask 1045504
      %v1587 = vsel %vm1585, %v1535, 0
      %1589 = vmatprep.subr.bf16.mxu0 0
      %1590 = vmatpush1.bf16.msra.mxu0 0
      %1591 = vmatprep.subr.bf16.mxu0 0
      %1592 = vmatpush1.bf16.msra.mxu0 0
      %1593 = vmatprep.subr.bf16.mxu0 0
      %1594 = vmatpush1.bf16.msra.mxu0 0
      %1595 = vmatprep.subr.bf16.mxu0 0
      %1596 = vmatpush1.bf16.msra.mxu0 0
      %1597 = vmatprep.subr.bf16.mxu0 0
      %1598 = vmatpush1.bf16.msra.mxu0 0
      %1599 = vmatprep.subr.bf16.mxu0 0
      %1600 = vmatpush1.bf16.msra.mxu0 0
      %1601 = vmatprep.subr.bf16.mxu0 0
      %1602 = vmatpush1.bf16.msra.mxu0 0
      %1603 = vmatprep.subr.bf16.mxu0 0
      %1604 = vmatpush1.bf16.msra.mxu0 %v1587
      %1605 = vmatprep.subr.bf16.mxu0 0
      %1606 = vmatpush2.bf16.msra.mxu0 0
      %1607 = vmatprep.subr.bf16.mxu0 0
      %1608 = vmatpush2.bf16.msra.mxu0 0
      %1609 = vmatprep.subr.bf16.mxu0 0
      %1610 = vmatpush2.bf16.msra.mxu0 0
      %1611 = vmatprep.subr.bf16.mxu0 0
      %1612 = vmatpush2.bf16.msra.mxu0 0
      %1613 = vmatprep.subr.bf16.mxu0 0
      %1614 = vmatpush2.bf16.msra.mxu0 0
      %1615 = vmatprep.subr.bf16.mxu0 0
      %1616 = vmatpush2.bf16.msra.mxu0 0
      %1617 = vmatprep.subr.bf16.mxu0 0
      %1618 = vmatpush2.bf16.msra.mxu0 0
      %1619 = vmatprep.subr.bf16.mxu0 0
      %1620 = vmatpush2.bf16.msra.mxu0 0
      %1621 = vmatprep.mubr.bf16.mxu0 0
      %1622 = vmatmul.mubr.bf16.gmra.mxu0 %v1538
      %v1623 = vpop.f32.mrf.mxu0
      %v1624 = vadd.f32 0.0, %v1623
      %v1625 = vpop.f32.mrf.mxu0
      %v1626 = vpop.f32.mrf.mxu0
      %v1627 = vadd.f32 0.0, %v1626
      %v1628 = vpop.f32.mrf.mxu0
      %1629 = vmatprep.mubr.bf16.mxu0 0
      %1630 = vmatmul.mubr.bf16.gmra.mxu0 %v1541
      %v1631 = vpop.f32.mrf.mxu0
      %v1632 = vadd.f32 0.0, %v1631
      %v1633 = vpop.f32.mrf.mxu0
      %v1634 = vpop.f32.mrf.mxu0
      %v1635 = vadd.f32 0.0, %v1634
      %v1636 = vpop.f32.mrf.mxu0
      %1637 = vmatprep.mubr.bf16.mxu0 0
      %1638 = vmatmul.mubr.bf16.gmra.mxu0 %v1544
      %v1639 = vpop.f32.mrf.mxu0
      %v1640 = vadd.f32 0.0, %v1639
      %v1641 = vpop.f32.mrf.mxu0
      %v1642 = vpop.f32.mrf.mxu0
      %v1643 = vadd.f32 0.0, %v1642
      %v1644 = vpop.f32.mrf.mxu0
      %1645 = vmatprep.mubr.bf16.mxu0 0
      %1646 = vmatmul.mubr.bf16.gmra.mxu0 %v1547
      %v1647 = vpop.f32.mrf.mxu0
      %v1648 = vadd.f32 0.0, %v1647
      %v1649 = vpop.f32.mrf.mxu0
      %v1650 = vpop.f32.mrf.mxu0
      %v1651 = vadd.f32 0.0, %v1650
      %v1652 = vpop.f32.mrf.mxu0
      %1653 = vmatprep.mubr.bf16.mxu0 0
      %1654 = vmatmul.mubr.bf16.gmra.mxu0 %v1550
      %v1655 = vpop.f32.mrf.mxu0
      %v1656 = vadd.f32 0.0, %v1655
      %v1657 = vpop.f32.mrf.mxu0
      %v1658 = vpop.f32.mrf.mxu0
      %v1659 = vadd.f32 0.0, %v1658
      %v1660 = vpop.f32.mrf.mxu0
      %1661 = vmatprep.mubr.bf16.mxu0 0
      %1662 = vmatmul.mubr.bf16.gmra.mxu0 %v1553
      %v1663 = vpop.f32.mrf.mxu0
      %v1664 = vadd.f32 0.0, %v1663
      %v1665 = vpop.f32.mrf.mxu0
      %v1666 = vpop.f32.mrf.mxu0
      %v1667 = vadd.f32 0.0, %v1666
      %v1668 = vpop.f32.mrf.mxu0
      %1669 = vmatprep.mubr.bf16.mxu0 0
      %1670 = vmatmul.mubr.bf16.gmra.mxu0 %v1556
      %v1671 = vpop.f32.mrf.mxu0
      %v1672 = vadd.f32 0.0, %v1671
      %v1673 = vpop.f32.mrf.mxu0
      %v1674 = vpop.f32.mrf.mxu0
      %v1675 = vadd.f32 0.0, %v1674
      %v1676 = vpop.f32.mrf.mxu0
      %1677 = vmatprep.mubr.bf16.mxu0 0
      %1678 = vmatmul.mubr.bf16.gmra.mxu0 %v1559
      %v1679 = vpop.f32.mrf.mxu0
      %v1680 = vadd.f32 0.0, %v1679
      %v1681 = vpop.f32.mrf.mxu0
      %v1682 = vpop.f32.mrf.mxu0
      %v1683 = vadd.f32 0.0, %v1682
      %v1684 = vpop.f32.mrf.mxu0
      %1685 = vmatprep.mubr.bf16.mxu0 0
      %1686 = vmatmul.mubr.bf16.gmra.mxu0 %v1562
      %v1687 = vpop.f32.mrf.mxu0
      %v1688 = vadd.f32 0.0, %v1687
      %v1689 = vpop.f32.mrf.mxu0
      %v1690 = vpop.f32.mrf.mxu0
      %v1691 = vadd.f32 0.0, %v1690
      %v1692 = vpop.f32.mrf.mxu0
      %1693 = vmatprep.mubr.bf16.mxu0 0
      %1694 = vmatmul.mubr.bf16.gmra.mxu0 %v1565
      %v1695 = vpop.f32.mrf.mxu0
      %v1696 = vadd.f32 0.0, %v1695
      %v1697 = vpop.f32.mrf.mxu0
      %v1698 = vpop.f32.mrf.mxu0
      %v1699 = vadd.f32 0.0, %v1698
      %v1700 = vpop.f32.mrf.mxu0
      %1701 = vmatprep.mubr.bf16.mxu0 0
      %1702 = vmatmul.mubr.bf16.gmra.mxu0 %v1568
      %v1703 = vpop.f32.mrf.mxu0
      %v1704 = vadd.f32 0.0, %v1703
      %v1705 = vpop.f32.mrf.mxu0
      %v1706 = vpop.f32.mrf.mxu0
      %v1707 = vadd.f32 0.0, %v1706
      %v1708 = vpop.f32.mrf.mxu0
      %1709 = vmatprep.mubr.bf16.mxu0 0
      %1710 = vmatmul.mubr.bf16.gmra.mxu0 %v1571
      %v1711 = vpop.f32.mrf.mxu0
      %v1712 = vadd.f32 0.0, %v1711
      %v1713 = vpop.f32.mrf.mxu0
      %v1714 = vpop.f32.mrf.mxu0
      %v1715 = vadd.f32 0.0, %v1714
      %v1716 = vpop.f32.mrf.mxu0
      %1717 = vmatprep.mubr.bf16.mxu0 0
      %1718 = vmatmul.mubr.bf16.gmra.mxu0 %v1574
      %v1719 = vpop.f32.mrf.mxu0
      %v1720 = vadd.f32 0.0, %v1719
      %v1721 = vpop.f32.mrf.mxu0
      %v1722 = vpop.f32.mrf.mxu0
      %v1723 = vadd.f32 0.0, %v1722
      %v1724 = vpop.f32.mrf.mxu0
      %1725 = vmatprep.mubr.bf16.mxu0 0
      %1726 = vmatmul.mubr.bf16.gmra.mxu0 %v1577
      %v1727 = vpop.f32.mrf.mxu0
      %v1728 = vadd.f32 0.0, %v1727
      %v1729 = vpop.f32.mrf.mxu0
      %v1730 = vpop.f32.mrf.mxu0
      %v1731 = vadd.f32 0.0, %v1730
      %v1732 = vpop.f32.mrf.mxu0
      %1733 = vmatprep.mubr.bf16.mxu0 0
      %1734 = vmatmul.mubr.bf16.gmra.mxu0 %v1580
      %v1735 = vpop.f32.mrf.mxu0
      %v1736 = vadd.f32 0.0, %v1735
      %v1737 = vpop.f32.mrf.mxu0
      %v1738 = vpop.f32.mrf.mxu0
      %v1739 = vadd.f32 0.0, %v1738
      %v1740 = vpop.f32.mrf.mxu0
      %1741 = vmatprep.mubr.bf16.mxu0 0
      %1742 = vmatmul.mubr.bf16.gmra.mxu0 %v1583
      %v1743 = vpop.f32.mrf.mxu0
      %v1744 = vadd.f32 0.0, %v1743
      %v1745 = vpop.f32.mrf.mxu0
      %v1746 = vpop.f32.mrf.mxu0
      %v1747 = vadd.f32 0.0, %v1746
      %v1748 = vpop.f32.mrf.mxu0
      %1749 = vdwg.mxu0
      %v1782 = vunpack.c.l.b16 %v1382
      %v1783 = vunpack.c.l.b16 %v1383
      %v1784 = vunpack.c.l.b16 %v1384
      %v1785 = vunpack.c.l.b16 %v1385
      %v1786 = vunpack.c.l.b16 %v1386
      %v1787 = vunpack.c.l.b16 %v1387
      %v1788 = vunpack.c.l.b16 %v1388
      %v1789 = vunpack.c.l.b16 %v1389
      %v1790 = vunpack.c.l.b16 %v1390
      %v1791 = vunpack.c.l.b16 %v1391
      %v1792 = vunpack.c.l.b16 %v1392
      %v1793 = vunpack.c.l.b16 %v1393
      %v1794 = vunpack.c.l.b16 %v1394
      %v1795 = vunpack.c.l.b16 %v1395
      %v1796 = vunpack.c.l.b16 %v1396
      %v1797 = vunpack.c.l.b16 %v1397
      %v1798 = vunpack.c.l.b16 %v1398
      %v1799 = vunpack.c.l.b16 %v1399
      %v1800 = vunpack.c.l.b16 %v1400
      %v1801 = vunpack.c.l.b16 %v1401
      %v1802 = vunpack.c.l.b16 %v1402
      %v1803 = vunpack.c.l.b16 %v1403
      %v1804 = vunpack.c.l.b16 %v1404
      %v1805 = vunpack.c.l.b16 %v1405
      %v1806 = vunpack.c.l.b16 %v1406
      %v1807 = vunpack.c.l.b16 %v1407
      %v1808 = vunpack.c.l.b16 %v1408
      %v1809 = vunpack.c.l.b16 %v1409
      %v1810 = vunpack.c.l.b16 %v1410
      %v1811 = vunpack.c.l.b16 %v1411
      %v1812 = vunpack.c.l.b16 %v1412
      %v1813 = vunpack.c.l.b16 %v1413
      %v1814 = vpack.c.b16 %v1783, %v1782
      %v1815 = vpack.c.b16 %v1785, %v1784
      %v1816 = vpack.c.b16 %v1787, %v1786
      %v1817 = vpack.c.b16 %v1789, %v1788
      %v1818 = vpack.c.b16 %v1791, %v1790
      %v1819 = vpack.c.b16 %v1793, %v1792
      %v1820 = vpack.c.b16 %v1795, %v1794
      %v1821 = vpack.c.b16 %v1797, %v1796
      %v1822 = vpack.c.b16 %v1799, %v1798
      %v1823 = vpack.c.b16 %v1801, %v1800
      %v1824 = vpack.c.b16 %v1803, %v1802
      %v1825 = vpack.c.b16 %v1805, %v1804
      %v1826 = vpack.c.b16 %v1807, %v1806
      %v1827 = vpack.c.b16 %v1809, %v1808
      %v1828 = vpack.c.b16 %v1811, %v1810
      %v1829 = vpack.c.b16 %v1813, %v1812
      %v1832 = vunpack.c.l.b16 %v1414
      %v1833 = vunpack.c.l.b16 %v1415
      %v1834 = vpack.c.b16 %v1833, %v1832
      %v1836 = vsel %vm1536, %v1814, 0
      %v1839 = vsel %vm1536, %v1815, 0
      %v1842 = vsel %vm1536, %v1816, 0
      %v1845 = vsel %vm1536, %v1817, 0
      %v1848 = vsel %vm1536, %v1818, 0
      %v1851 = vsel %vm1536, %v1819, 0
      %v1854 = vsel %vm1536, %v1820, 0
      %v1857 = vsel %vm1536, %v1821, 0
      %v1860 = vsel %vm1536, %v1822, 0
      %v1863 = vsel %vm1536, %v1823, 0
      %v1866 = vsel %vm1536, %v1824, 0
      %v1869 = vsel %vm1536, %v1825, 0
      %v1872 = vsel %vm1536, %v1826, 0
      %v1875 = vsel %vm1536, %v1827, 0
      %v1878 = vsel %vm1536, %v1828, 0
      %v1881 = vsel %vm1536, %v1829, 0
      %v1884 = vsel %vm1585, %v1834, 0
      %1886 = vmatprep.subr.bf16.mxu0 0
      %1887 = vmatpush1.bf16.msra.mxu0 0
      %1888 = vmatprep.subr.bf16.mxu0 0
      %1889 = vmatpush1.bf16.msra.mxu0 0
      %1890 = vmatprep.subr.bf16.mxu0 0
      %1891 = vmatpush1.bf16.msra.mxu0 0
      %1892 = vmatprep.subr.bf16.mxu0 0
      %1893 = vmatpush1.bf16.msra.mxu0 0
      %1894 = vmatprep.subr.bf16.mxu0 0
      %1895 = vmatpush1.bf16.msra.mxu0 0
      %1896 = vmatprep.subr.bf16.mxu0 0
      %1897 = vmatpush1.bf16.msra.mxu0 0
      %1898 = vmatprep.subr.bf16.mxu0 0
      %1899 = vmatpush1.bf16.msra.mxu0 0
      %1900 = vmatprep.subr.bf16.mxu0 0
      %1901 = vmatpush1.bf16.msra.mxu0 %v1884
      %1902 = vmatprep.subr.bf16.mxu0 0
      %1903 = vmatpush2.bf16.msra.mxu0 0
      %1904 = vmatprep.subr.bf16.mxu0 0
      %1905 = vmatpush2.bf16.msra.mxu0 0
      %1906 = vmatprep.subr.bf16.mxu0 0
      %1907 = vmatpush2.bf16.msra.mxu0 0
      %1908 = vmatprep.subr.bf16.mxu0 0
      %1909 = vmatpush2.bf16.msra.mxu0 0
      %1910 = vmatprep.subr.bf16.mxu0 0
      %1911 = vmatpush2.bf16.msra.mxu0 0
      %1912 = vmatprep.subr.bf16.mxu0 0
      %1913 = vmatpush2.bf16.msra.mxu0 0
      %1914 = vmatprep.subr.bf16.mxu0 0
      %1915 = vmatpush2.bf16.msra.mxu0 0
      %1916 = vmatprep.subr.bf16.mxu0 0
      %1917 = vmatpush2.bf16.msra.mxu0 0
      %1918 = vmatprep.mubr.bf16.mxu0 0
      %1919 = vmatmul.mubr.bf16.gmra.mxu0 %v1836
      %v1920 = vpop.f32.mrf.mxu0
      %v1921 = vadd.f32 %v1624, %v1920
      %v1922 = vpop.f32.mrf.mxu0
      %v1923 = vpop.f32.mrf.mxu0
      %v1924 = vadd.f32 %v1627, %v1923
      %v1925 = vpop.f32.mrf.mxu0
      %1926 = vmatprep.mubr.bf16.mxu0 0
      %1927 = vmatmul.mubr.bf16.gmra.mxu0 %v1839
      %v1928 = vpop.f32.mrf.mxu0
      %v1929 = vadd.f32 %v1632, %v1928
      %v1930 = vpop.f32.mrf.mxu0
      %v1931 = vpop.f32.mrf.mxu0
      %v1932 = vadd.f32 %v1635, %v1931
      %v1933 = vpop.f32.mrf.mxu0
      %1934 = vmatprep.mubr.bf16.mxu0 0
      %1935 = vmatmul.mubr.bf16.gmra.mxu0 %v1842
      %v1936 = vpop.f32.mrf.mxu0
      %v1937 = vadd.f32 %v1640, %v1936
      %v1938 = vpop.f32.mrf.mxu0
      %v1939 = vpop.f32.mrf.mxu0
      %v1940 = vadd.f32 %v1643, %v1939
      %v1941 = vpop.f32.mrf.mxu0
      %1942 = vmatprep.mubr.bf16.mxu0 0
      %1943 = vmatmul.mubr.bf16.gmra.mxu0 %v1845
      %v1944 = vpop.f32.mrf.mxu0
      %v1945 = vadd.f32 %v1648, %v1944
      %v1946 = vpop.f32.mrf.mxu0
      %v1947 = vpop.f32.mrf.mxu0
      %v1948 = vadd.f32 %v1651, %v1947
      %v1949 = vpop.f32.mrf.mxu0
      %1950 = vmatprep.mubr.bf16.mxu0 0
      %1951 = vmatmul.mubr.bf16.gmra.mxu0 %v1848
      %v1952 = vpop.f32.mrf.mxu0
      %v1953 = vadd.f32 %v1656, %v1952
      %v1954 = vpop.f32.mrf.mxu0
      %v1955 = vpop.f32.mrf.mxu0
      %v1956 = vadd.f32 %v1659, %v1955
      %v1957 = vpop.f32.mrf.mxu0
      %1958 = vmatprep.mubr.bf16.mxu0 0
      %1959 = vmatmul.mubr.bf16.gmra.mxu0 %v1851
      %v1960 = vpop.f32.mrf.mxu0
      %v1961 = vadd.f32 %v1664, %v1960
      %v1962 = vpop.f32.mrf.mxu0
      %v1963 = vpop.f32.mrf.mxu0
      %v1964 = vadd.f32 %v1667, %v1963
      %v1965 = vpop.f32.mrf.mxu0
      %1966 = vmatprep.mubr.bf16.mxu0 0
      %1967 = vmatmul.mubr.bf16.gmra.mxu0 %v1854
      %v1968 = vpop.f32.mrf.mxu0
      %v1969 = vadd.f32 %v1672, %v1968
      %v1970 = vpop.f32.mrf.mxu0
      %v1971 = vpop.f32.mrf.mxu0
      %v1972 = vadd.f32 %v1675, %v1971
      %v1973 = vpop.f32.mrf.mxu0
      %1974 = vmatprep.mubr.bf16.mxu0 0
      %1975 = vmatmul.mubr.bf16.gmra.mxu0 %v1857
      %v1976 = vpop.f32.mrf.mxu0
      %v1977 = vadd.f32 %v1680, %v1976
      %v1978 = vpop.f32.mrf.mxu0
      %v1979 = vpop.f32.mrf.mxu0
      %v1980 = vadd.f32 %v1683, %v1979
      %v1981 = vpop.f32.mrf.mxu0
      %1982 = vmatprep.mubr.bf16.mxu0 0
      %1983 = vmatmul.mubr.bf16.gmra.mxu0 %v1860
      %v1984 = vpop.f32.mrf.mxu0
      %v1985 = vadd.f32 %v1688, %v1984
      %v1986 = vpop.f32.mrf.mxu0
      %v1987 = vpop.f32.mrf.mxu0
      %v1988 = vadd.f32 %v1691, %v1987
      %v1989 = vpop.f32.mrf.mxu0
      %1990 = vmatprep.mubr.bf16.mxu0 0
      %1991 = vmatmul.mubr.bf16.gmra.mxu0 %v1863
      %v1992 = vpop.f32.mrf.mxu0
      %v1993 = vadd.f32 %v1696, %v1992
      %v1994 = vpop.f32.mrf.mxu0
      %v1995 = vpop.f32.mrf.mxu0
      %v1996 = vadd.f32 %v1699, %v1995
      %v1997 = vpop.f32.mrf.mxu0
      %1998 = vmatprep.mubr.bf16.mxu0 0
      %1999 = vmatmul.mubr.bf16.gmra.mxu0 %v1866
      %v2000 = vpop.f32.mrf.mxu0
      %v2001 = vadd.f32 %v1704, %v2000
      %v2002 = vpop.f32.mrf.mxu0
      %v2003 = vpop.f32.mrf.mxu0
      %v2004 = vadd.f32 %v1707, %v2003
      %v2005 = vpop.f32.mrf.mxu0
      %2006 = vmatprep.mubr.bf16.mxu0 0
      %2007 = vmatmul.mubr.bf16.gmra.mxu0 %v1869
      %v2008 = vpop.f32.mrf.mxu0
      %v2009 = vadd.f32 %v1712, %v2008
      %v2010 = vpop.f32.mrf.mxu0
      %v2011 = vpop.f32.mrf.mxu0
      %v2012 = vadd.f32 %v1715, %v2011
      %v2013 = vpop.f32.mrf.mxu0
      %2014 = vmatprep.mubr.bf16.mxu0 0
      %2015 = vmatmul.mubr.bf16.gmra.mxu0 %v1872
      %v2016 = vpop.f32.mrf.mxu0
      %v2017 = vadd.f32 %v1720, %v2016
      %v2018 = vpop.f32.mrf.mxu0
      %v2019 = vpop.f32.mrf.mxu0
      %v2020 = vadd.f32 %v1723, %v2019
      %v2021 = vpop.f32.mrf.mxu0
      %2022 = vmatprep.mubr.bf16.mxu0 0
      %2023 = vmatmul.mubr.bf16.gmra.mxu0 %v1875
      %v2024 = vpop.f32.mrf.mxu0
      %v2025 = vadd.f32 %v1728, %v2024
      %v2026 = vpop.f32.mrf.mxu0
      %v2027 = vpop.f32.mrf.mxu0
      %v2028 = vadd.f32 %v1731, %v2027
      %v2029 = vpop.f32.mrf.mxu0
      %2030 = vmatprep.mubr.bf16.mxu0 0
      %2031 = vmatmul.mubr.bf16.gmra.mxu0 %v1878
      %v2032 = vpop.f32.mrf.mxu0
      %v2033 = vadd.f32 %v1736, %v2032
      %v2034 = vpop.f32.mrf.mxu0
      %v2035 = vpop.f32.mrf.mxu0
      %v2036 = vadd.f32 %v1739, %v2035
      %v2037 = vpop.f32.mrf.mxu0
      %2038 = vmatprep.mubr.bf16.mxu0 0
      %2039 = vmatmul.mubr.bf16.gmra.mxu0 %v1881
      %v2040 = vpop.f32.mrf.mxu0
      %v2041 = vadd.f32 %v1744, %v2040
      %v2042 = vpop.f32.mrf.mxu0
      %v2043 = vpop.f32.mrf.mxu0
      %v2044 = vadd.f32 %v1747, %v2043
      %v2045 = vpop.f32.mrf.mxu0
      %2046 = vdwg.mxu0
      %v2047 = vld [vmem:[%s1370] sm:$0xf]
      %v2048 = vld [vmem:[%s1370 + $0x4] sm:$0xf]
      %v2049 = vld [vmem:[%s1370 + $0x8] sm:$0xf]
      %v2050 = vld [vmem:[%s1370 + $0xc] sm:$0xf]
      %v2051 = vld [vmem:[%s1370 + $0x10] sm:$0xf]
      %v2052 = vld [vmem:[%s1370 + $0x14] sm:$0xf]
      %v2053 = vld [vmem:[%s1370 + $0x18] sm:$0xf]
      %v2054 = vld [vmem:[%s1370 + $0x1c] sm:$0xf]
      %v2055 = vld [vmem:[%s1370 + $0x20] sm:$0xf]
      %v2056 = vld [vmem:[%s1370 + $0x24] sm:$0xf]
      %v2057 = vld [vmem:[%s1370 + $0x28] sm:$0xf]
      %v2058 = vld [vmem:[%s1370 + $0x2c] sm:$0xf]
      %v2059 = vld [vmem:[%s1370 + $0x30] sm:$0xf]
      %v2060 = vld [vmem:[%s1370 + $0x34] sm:$0xf]
      %v2061 = vld [vmem:[%s1370 + $0x38] sm:$0xf]
      %v2062 = vld [vmem:[%s1370 + $0x3c] sm:$0xf]
      %v2063 = vld [vmem:[%s1370 + $0x40] sm:$0xf]
      %v2064 = vld [vmem:[%s1370 + $0x44] sm:$0xf]
      %v2065 = vld [vmem:[%s1370 + $0x48] sm:$0xf]
      %v2066 = vld [vmem:[%s1370 + $0x4c] sm:$0xf]
      %v2067 = vld [vmem:[%s1370 + $0x50] sm:$0xf]
      %v2068 = vld [vmem:[%s1370 + $0x54] sm:$0xf]
      %v2069 = vld [vmem:[%s1370 + $0x58] sm:$0xf]
      %v2070 = vld [vmem:[%s1370 + $0x5c] sm:$0xf]
      %v2071 = vld [vmem:[%s1370 + $0x60] sm:$0xf]
      %v2072 = vld [vmem:[%s1370 + $0x64] sm:$0xf]
      %v2073 = vld [vmem:[%s1370 + $0x68] sm:$0xf]
      %v2074 = vld [vmem:[%s1370 + $0x6c] sm:$0xf]
      %v2075 = vld [vmem:[%s1370 + $0x70] sm:$0xf]
      %v2076 = vld [vmem:[%s1370 + $0x74] sm:$0xf]
      %v2077 = vld [vmem:[%s1370 + $0x78] sm:$0xf]
      %v2078 = vld [vmem:[%s1370 + $0x7c] sm:$0xf]
      %s2079 = scalar_lea.vmem %s1, 16
      %v2080 = vld [vmem:[%s2079] sm:$0xf]
      %v2081 = vld [vmem:[%s2079 + $0x4] sm:$0x3]
      %v2114 = vunpack.c.l.b16 %v2047
      %v2115 = vunpack.c.l.b16 %v2048
      %v2116 = vunpack.c.l.b16 %v2049
      %v2117 = vunpack.c.l.b16 %v2050
      %v2118 = vunpack.c.l.b16 %v2051
      %v2119 = vunpack.c.l.b16 %v2052
      %v2120 = vunpack.c.l.b16 %v2053
      %v2121 = vunpack.c.l.b16 %v2054
      %v2122 = vunpack.c.l.b16 %v2055
      %v2123 = vunpack.c.l.b16 %v2056
      %v2124 = vunpack.c.l.b16 %v2057
      %v2125 = vunpack.c.l.b16 %v2058
      %v2126 = vunpack.c.l.b16 %v2059
      %v2127 = vunpack.c.l.b16 %v2060
      %v2128 = vunpack.c.l.b16 %v2061
      %v2129 = vunpack.c.l.b16 %v2062
      %v2130 = vunpack.c.l.b16 %v2063
      %v2131 = vunpack.c.l.b16 %v2064
      %v2132 = vunpack.c.l.b16 %v2065
      %v2133 = vunpack.c.l.b16 %v2066
      %v2134 = vunpack.c.l.b16 %v2067
      %v2135 = vunpack.c.l.b16 %v2068
      %v2136 = vunpack.c.l.b16 %v2069
      %v2137 = vunpack.c.l.b16 %v2070
      %v2138 = vunpack.c.l.b16 %v2071
      %v2139 = vunpack.c.l.b16 %v2072
      %v2140 = vunpack.c.l.b16 %v2073
      %v2141 = vunpack.c.l.b16 %v2074
      %v2142 = vunpack.c.l.b16 %v2075
      %v2143 = vunpack.c.l.b16 %v2076
      %v2144 = vunpack.c.l.b16 %v2077
      %v2145 = vunpack.c.l.b16 %v2078
      %v2146 = vpack.c.b16 %v2115, %v2114
      %v2147 = vpack.c.b16 %v2117, %v2116
      %v2148 = vpack.c.b16 %v2119, %v2118
      %v2149 = vpack.c.b16 %v2121, %v2120
      %v2150 = vpack.c.b16 %v2123, %v2122
      %v2151 = vpack.c.b16 %v2125, %v2124
      %v2152 = vpack.c.b16 %v2127, %v2126
      %v2153 = vpack.c.b16 %v2129, %v2128
      %v2154 = vpack.c.b16 %v2131, %v2130
      %v2155 = vpack.c.b16 %v2133, %v2132
      %v2156 = vpack.c.b16 %v2135, %v2134
      %v2157 = vpack.c.b16 %v2137, %v2136
      %v2158 = vpack.c.b16 %v2139, %v2138
      %v2159 = vpack.c.b16 %v2141, %v2140
      %v2160 = vpack.c.b16 %v2143, %v2142
      %v2161 = vpack.c.b16 %v2145, %v2144
      %v2164 = vunpack.c.l.b16 %v2080
      %v2165 = vunpack.c.l.b16 %v2081
      %v2166 = vpack.c.b16 %v2165, %v2164
      %v2168 = vsel %vm1536, %v2146, 0
      %v2171 = vsel %vm1536, %v2147, 0
      %v2174 = vsel %vm1536, %v2148, 0
      %v2177 = vsel %vm1536, %v2149, 0
      %v2180 = vsel %vm1536, %v2150, 0
      %v2183 = vsel %vm1536, %v2151, 0
      %v2186 = vsel %vm1536, %v2152, 0
      %v2189 = vsel %vm1536, %v2153, 0
      %v2192 = vsel %vm1536, %v2154, 0
      %v2195 = vsel %vm1536, %v2155, 0
      %v2198 = vsel %vm1536, %v2156, 0
      %v2201 = vsel %vm1536, %v2157, 0
      %v2204 = vsel %vm1536, %v2158, 0
      %v2207 = vsel %vm1536, %v2159, 0
      %v2210 = vsel %vm1536, %v2160, 0
      %v2213 = vsel %vm1536, %v2161, 0
      %v2216 = vsel %vm1585, %v2166, 0
      %2218 = vmatprep.subr.bf16.mxu0 0
      %2219 = vmatpush1.bf16.msra.mxu0 0
      %2220 = vmatprep.subr.bf16.mxu0 0
      %2221 = vmatpush1.bf16.msra.mxu0 0
      %2222 = vmatprep.subr.bf16.mxu0 0
      %2223 = vmatpush1.bf16.msra.mxu0 0
      %2224 = vmatprep.subr.bf16.mxu0 0
      %2225 = vmatpush1.bf16.msra.mxu0 0
      %2226 = vmatprep.subr.bf16.mxu0 0
      %2227 = vmatpush1.bf16.msra.mxu0 0
      %2228 = vmatprep.subr.bf16.mxu0 0
      %2229 = vmatpush1.bf16.msra.mxu0 0
      %2230 = vmatprep.subr.bf16.mxu0 0
      %2231 = vmatpush1.bf16.msra.mxu0 0
      %2232 = vmatprep.subr.bf16.mxu0 0
      %2233 = vmatpush1.bf16.msra.mxu0 %v2216
      %2234 = vmatprep.subr.bf16.mxu0 0
      %2235 = vmatpush2.bf16.msra.mxu0 0
      %2236 = vmatprep.subr.bf16.mxu0 0
      %2237 = vmatpush2.bf16.msra.mxu0 0
      %2238 = vmatprep.subr.bf16.mxu0 0
      %2239 = vmatpush2.bf16.msra.mxu0 0
      %2240 = vmatprep.subr.bf16.mxu0 0
      %2241 = vmatpush2.bf16.msra.mxu0 0
      %2242 = vmatprep.subr.bf16.mxu0 0
      %2243 = vmatpush2.bf16.msra.mxu0 0
      %2244 = vmatprep.subr.bf16.mxu0 0
      %2245 = vmatpush2.bf16.msra.mxu0 0
      %2246 = vmatprep.subr.bf16.mxu0 0
      %2247 = vmatpush2.bf16.msra.mxu0 0
      %2248 = vmatprep.subr.bf16.mxu0 0
      %2249 = vmatpush2.bf16.msra.mxu0 0
      %2250 = vmatprep.mubr.bf16.mxu0 0
      %2251 = vmatmul.mubr.bf16.gmra.mxu0 %v2168
      %v2252 = vpop.f32.mrf.mxu0
      %v2253 = vadd.f32 0.0, %v2252
      %v2254 = vpop.f32.mrf.mxu0
      %v2255 = vpop.f32.mrf.mxu0
      %v2256 = vadd.f32 0.0, %v2255
      %v2257 = vpop.f32.mrf.mxu0
      %2258 = vmatprep.mubr.bf16.mxu0 0
      %2259 = vmatmul.mubr.bf16.gmra.mxu0 %v2171
      %v2260 = vpop.f32.mrf.mxu0
      %v2261 = vadd.f32 0.0, %v2260
      %v2262 = vpop.f32.mrf.mxu0
      %v2263 = vpop.f32.mrf.mxu0
      %v2264 = vadd.f32 0.0, %v2263
      %v2265 = vpop.f32.mrf.mxu0
      %2266 = vmatprep.mubr.bf16.mxu0 0
      %2267 = vmatmul.mubr.bf16.gmra.mxu0 %v2174
      %v2268 = vpop.f32.mrf.mxu0
      %v2269 = vadd.f32 0.0, %v2268
      %v2270 = vpop.f32.mrf.mxu0
      %v2271 = vpop.f32.mrf.mxu0
      %v2272 = vadd.f32 0.0, %v2271
      %v2273 = vpop.f32.mrf.mxu0
      %2274 = vmatprep.mubr.bf16.mxu0 0
      %2275 = vmatmul.mubr.bf16.gmra.mxu0 %v2177
      %v2276 = vpop.f32.mrf.mxu0
      %v2277 = vadd.f32 0.0, %v2276
      %v2278 = vpop.f32.mrf.mxu0
      %v2279 = vpop.f32.mrf.mxu0
      %v2280 = vadd.f32 0.0, %v2279
      %v2281 = vpop.f32.mrf.mxu0
      %2282 = vmatprep.mubr.bf16.mxu0 0
      %2283 = vmatmul.mubr.bf16.gmra.mxu0 %v2180
      %v2284 = vpop.f32.mrf.mxu0
      %v2285 = vadd.f32 0.0, %v2284
      %v2286 = vpop.f32.mrf.mxu0
      %v2287 = vpop.f32.mrf.mxu0
      %v2288 = vadd.f32 0.0, %v2287
      %v2289 = vpop.f32.mrf.mxu0
      %2290 = vmatprep.mubr.bf16.mxu0 0
      %2291 = vmatmul.mubr.bf16.gmra.mxu0 %v2183
      %v2292 = vpop.f32.mrf.mxu0
      %v2293 = vadd.f32 0.0, %v2292
      %v2294 = vpop.f32.mrf.mxu0
      %v2295 = vpop.f32.mrf.mxu0
      %v2296 = vadd.f32 0.0, %v2295
      %v2297 = vpop.f32.mrf.mxu0
      %2298 = vmatprep.mubr.bf16.mxu0 0
      %2299 = vmatmul.mubr.bf16.gmra.mxu0 %v2186
      %v2300 = vpop.f32.mrf.mxu0
      %v2301 = vadd.f32 0.0, %v2300
      %v2302 = vpop.f32.mrf.mxu0
      %v2303 = vpop.f32.mrf.mxu0
      %v2304 = vadd.f32 0.0, %v2303
      %v2305 = vpop.f32.mrf.mxu0
      %2306 = vmatprep.mubr.bf16.mxu0 0
      %2307 = vmatmul.mubr.bf16.gmra.mxu0 %v2189
      %v2308 = vpop.f32.mrf.mxu0
      %v2309 = vadd.f32 0.0, %v2308
      %v2310 = vpop.f32.mrf.mxu0
      %v2311 = vpop.f32.mrf.mxu0
      %v2312 = vadd.f32 0.0, %v2311
      %v2313 = vpop.f32.mrf.mxu0
      %2314 = vmatprep.mubr.bf16.mxu0 0
      %2315 = vmatmul.mubr.bf16.gmra.mxu0 %v2192
      %v2316 = vpop.f32.mrf.mxu0
      %v2317 = vadd.f32 0.0, %v2316
      %v2318 = vpop.f32.mrf.mxu0
      %v2319 = vpop.f32.mrf.mxu0
      %v2320 = vadd.f32 0.0, %v2319
      %v2321 = vpop.f32.mrf.mxu0
      %2322 = vmatprep.mubr.bf16.mxu0 0
      %2323 = vmatmul.mubr.bf16.gmra.mxu0 %v2195
      %v2324 = vpop.f32.mrf.mxu0
      %v2325 = vadd.f32 0.0, %v2324
      %v2326 = vpop.f32.mrf.mxu0
      %v2327 = vpop.f32.mrf.mxu0
      %v2328 = vadd.f32 0.0, %v2327
      %v2329 = vpop.f32.mrf.mxu0
      %2330 = vmatprep.mubr.bf16.mxu0 0
      %2331 = vmatmul.mubr.bf16.gmra.mxu0 %v2198
      %v2332 = vpop.f32.mrf.mxu0
      %v2333 = vadd.f32 0.0, %v2332
      %v2334 = vpop.f32.mrf.mxu0
      %v2335 = vpop.f32.mrf.mxu0
      %v2336 = vadd.f32 0.0, %v2335
      %v2337 = vpop.f32.mrf.mxu0
      %2338 = vmatprep.mubr.bf16.mxu0 0
      %2339 = vmatmul.mubr.bf16.gmra.mxu0 %v2201
      %v2340 = vpop.f32.mrf.mxu0
      %v2341 = vadd.f32 0.0, %v2340
      %v2342 = vpop.f32.mrf.mxu0
      %v2343 = vpop.f32.mrf.mxu0
      %v2344 = vadd.f32 0.0, %v2343
      %v2345 = vpop.f32.mrf.mxu0
      %2346 = vmatprep.mubr.bf16.mxu0 0
      %2347 = vmatmul.mubr.bf16.gmra.mxu0 %v2204
      %v2348 = vpop.f32.mrf.mxu0
      %v2349 = vadd.f32 0.0, %v2348
      %v2350 = vpop.f32.mrf.mxu0
      %v2351 = vpop.f32.mrf.mxu0
      %v2352 = vadd.f32 0.0, %v2351
      %v2353 = vpop.f32.mrf.mxu0
      %2354 = vmatprep.mubr.bf16.mxu0 0
      %2355 = vmatmul.mubr.bf16.gmra.mxu0 %v2207
      %v2356 = vpop.f32.mrf.mxu0
      %v2357 = vadd.f32 0.0, %v2356
      %v2358 = vpop.f32.mrf.mxu0
      %v2359 = vpop.f32.mrf.mxu0
      %v2360 = vadd.f32 0.0, %v2359
      %v2361 = vpop.f32.mrf.mxu0
      %2362 = vmatprep.mubr.bf16.mxu0 0
      %2363 = vmatmul.mubr.bf16.gmra.mxu0 %v2210
      %v2364 = vpop.f32.mrf.mxu0
      %v2365 = vadd.f32 0.0, %v2364
      %v2366 = vpop.f32.mrf.mxu0
      %v2367 = vpop.f32.mrf.mxu0
      %v2368 = vadd.f32 0.0, %v2367
      %v2369 = vpop.f32.mrf.mxu0
      %2370 = vmatprep.mubr.bf16.mxu0 0
      %2371 = vmatmul.mubr.bf16.gmra.mxu0 %v2213
      %v2372 = vpop.f32.mrf.mxu0
      %v2373 = vadd.f32 0.0, %v2372
      %v2374 = vpop.f32.mrf.mxu0
      %v2375 = vpop.f32.mrf.mxu0
      %v2376 = vadd.f32 0.0, %v2375
      %v2377 = vpop.f32.mrf.mxu0
      %2378 = vdwg.mxu0
      %v2379 = vadd.f32 %v1921, %v2253
      %v2380 = vadd.f32 %v1924, %v2256
      %v2381 = vadd.f32 %v1929, %v2261
      %v2382 = vadd.f32 %v1932, %v2264
      %v2383 = vadd.f32 %v1937, %v2269
      %v2384 = vadd.f32 %v1940, %v2272
      %v2385 = vadd.f32 %v1945, %v2277
      %v2386 = vadd.f32 %v1948, %v2280
      %v2387 = vadd.f32 %v1953, %v2285
      %v2388 = vadd.f32 %v1956, %v2288
      %v2389 = vadd.f32 %v1961, %v2293
      %v2390 = vadd.f32 %v1964, %v2296
      %v2391 = vadd.f32 %v1969, %v2301
      %v2392 = vadd.f32 %v1972, %v2304
      %v2393 = vadd.f32 %v1977, %v2309
      %v2394 = vadd.f32 %v1980, %v2312
      %v2395 = vadd.f32 %v1985, %v2317
      %v2396 = vadd.f32 %v1988, %v2320
      %v2397 = vadd.f32 %v1993, %v2325
      %v2398 = vadd.f32 %v1996, %v2328
      %v2399 = vadd.f32 %v2001, %v2333
      %v2400 = vadd.f32 %v2004, %v2336
      %v2401 = vadd.f32 %v2009, %v2341
      %v2402 = vadd.f32 %v2012, %v2344
      %v2403 = vadd.f32 %v2017, %v2349
      %v2404 = vadd.f32 %v2020, %v2352
      %v2405 = vadd.f32 %v2025, %v2357
      %v2406 = vadd.f32 %v2028, %v2360
      %v2407 = vadd.f32 %v2033, %v2365
      %v2408 = vadd.f32 %v2036, %v2368
      %v2409 = vadd.f32 %v2041, %v2373
      %v2410 = vadd.f32 %v2044, %v2376
      %vm2411 = vcmask 31744
      %v2412 = vsel %vm2411, %v2379, 0.0
      %v2413 = vsel %vm2411, %v2380, 0.0
      %v2414 = vadd.f32 %v2412, %v2413
      %v2415 = vsel %vm2411, %v2381, 0.0
      %v2416 = vadd.f32 %v2414, %v2415
      %v2417 = vsel %vm2411, %v2382, 0.0
      %v2418 = vadd.f32 %v2416, %v2417
      %v2419 = vsel %vm2411, %v2383, 0.0
      %v2420 = vadd.f32 %v2418, %v2419
      %v2421 = vsel %vm2411, %v2384, 0.0
      %v2422 = vadd.f32 %v2420, %v2421
      %v2423 = vsel %vm2411, %v2385, 0.0
      %v2424 = vadd.f32 %v2422, %v2423
      %v2425 = vsel %vm2411, %v2386, 0.0
      %v2426 = vadd.f32 %v2424, %v2425
      %v2427 = vsel %vm2411, %v2387, 0.0
      %v2428 = vadd.f32 %v2426, %v2427
      %v2429 = vsel %vm2411, %v2388, 0.0
      %v2430 = vadd.f32 %v2428, %v2429
      %v2431 = vsel %vm2411, %v2389, 0.0
      %v2432 = vadd.f32 %v2430, %v2431
      %v2433 = vsel %vm2411, %v2390, 0.0
      %v2434 = vadd.f32 %v2432, %v2433
      %v2435 = vsel %vm2411, %v2391, 0.0
      %v2436 = vadd.f32 %v2434, %v2435
      %v2437 = vsel %vm2411, %v2392, 0.0
      %v2438 = vadd.f32 %v2436, %v2437
      %v2439 = vsel %vm2411, %v2393, 0.0
      %v2440 = vadd.f32 %v2438, %v2439
      %v2441 = vsel %vm2411, %v2394, 0.0
      %v2442 = vadd.f32 %v2440, %v2441
      %v2443 = vsel %vm2411, %v2395, 0.0
      %v2444 = vadd.f32 %v2442, %v2443
      %v2445 = vsel %vm2411, %v2396, 0.0
      %v2446 = vadd.f32 %v2444, %v2445
      %v2447 = vsel %vm2411, %v2397, 0.0
      %v2448 = vadd.f32 %v2446, %v2447
      %v2449 = vsel %vm2411, %v2398, 0.0
      %v2450 = vadd.f32 %v2448, %v2449
      %v2451 = vsel %vm2411, %v2399, 0.0
      %v2452 = vadd.f32 %v2450, %v2451
      %v2453 = vsel %vm2411, %v2400, 0.0
      %v2454 = vadd.f32 %v2452, %v2453
      %v2455 = vsel %vm2411, %v2401, 0.0
      %v2456 = vadd.f32 %v2454, %v2455
      %v2457 = vsel %vm2411, %v2402, 0.0
      %v2458 = vadd.f32 %v2456, %v2457
      %v2459 = vsel %vm2411, %v2403, 0.0
      %v2460 = vadd.f32 %v2458, %v2459
      %v2461 = vsel %vm2411, %v2404, 0.0
      %v2462 = vadd.f32 %v2460, %v2461
      %v2463 = vsel %vm2411, %v2405, 0.0
      %v2464 = vadd.f32 %v2462, %v2463
      %v2465 = vsel %vm2411, %v2406, 0.0
      %v2466 = vadd.f32 %v2464, %v2465
      %v2467 = vsel %vm2411, %v2407, 0.0
      %v2468 = vadd.f32 %v2466, %v2467
      %v2469 = vsel %vm2411, %v2408, 0.0
      %v2470 = vadd.f32 %v2468, %v2469
      %v2471 = vsel %vm2411, %v2409, 0.0
      %v2472 = vadd.f32 %v2470, %v2471
      %v2473 = vsel %vm2411, %v2410, 0.0
      %v2474 = vadd.f32 %v2472, %v2473
      %v2475 = vrot.slane %v2474, 4
      %v2476 = vadd.f32 %v2474, %v2475
      %v2477 = vrot.slane %v2476, 2
      %v2478 = vadd.f32 %v2476, %v2477
      %v2479 = vrot.slane %v2478, 1
      %v2480 = vadd.f32 %v2478, %v2479
      %v2481 = vmul.f32 %v2379, %v2379
      %v2482 = vmul.f32 %v2380, %v2380
      %v2483 = vmul.f32 %v2381, %v2381
      %v2484 = vmul.f32 %v2382, %v2382
      %v2485 = vmul.f32 %v2383, %v2383
      %v2486 = vmul.f32 %v2384, %v2384
      %v2487 = vmul.f32 %v2385, %v2385
      %v2488 = vmul.f32 %v2386, %v2386
      %v2489 = vmul.f32 %v2387, %v2387
      %v2490 = vmul.f32 %v2388, %v2388
      %v2491 = vmul.f32 %v2389, %v2389
      %v2492 = vmul.f32 %v2390, %v2390
      %v2493 = vmul.f32 %v2391, %v2391
      %v2494 = vmul.f32 %v2392, %v2392
      %v2495 = vmul.f32 %v2393, %v2393
      %v2496 = vmul.f32 %v2394, %v2394
      %v2497 = vmul.f32 %v2395, %v2395
      %v2498 = vmul.f32 %v2396, %v2396
      %v2499 = vmul.f32 %v2397, %v2397
      %v2500 = vmul.f32 %v2398, %v2398
      %v2501 = vmul.f32 %v2399, %v2399
      %v2502 = vmul.f32 %v2400, %v2400
      %v2503 = vmul.f32 %v2401, %v2401
      %v2504 = vmul.f32 %v2402, %v2402
      %v2505 = vmul.f32 %v2403, %v2403
      %v2506 = vmul.f32 %v2404, %v2404
      %v2507 = vmul.f32 %v2405, %v2405
      %v2508 = vmul.f32 %v2406, %v2406
      %v2509 = vmul.f32 %v2407, %v2407
      %v2510 = vmul.f32 %v2408, %v2408
      %v2511 = vmul.f32 %v2409, %v2409
      %v2512 = vmul.f32 %v2410, %v2410
      %v2513 = vsel %vm2411, %v2481, 0.0
      %v2514 = vsel %vm2411, %v2482, 0.0
      %v2515 = vadd.f32 %v2513, %v2514
      %v2516 = vsel %vm2411, %v2483, 0.0
      %v2517 = vadd.f32 %v2515, %v2516
      %v2518 = vsel %vm2411, %v2484, 0.0
      %v2519 = vadd.f32 %v2517, %v2518
      %v2520 = vsel %vm2411, %v2485, 0.0
      %v2521 = vadd.f32 %v2519, %v2520
      %v2522 = vsel %vm2411, %v2486, 0.0
      %v2523 = vadd.f32 %v2521, %v2522
      %v2524 = vsel %vm2411, %v2487, 0.0
      %v2525 = vadd.f32 %v2523, %v2524
      %v2526 = vsel %vm2411, %v2488, 0.0
      %v2527 = vadd.f32 %v2525, %v2526
      %v2528 = vsel %vm2411, %v2489, 0.0
      %v2529 = vadd.f32 %v2527, %v2528
      %v2530 = vsel %vm2411, %v2490, 0.0
      %v2531 = vadd.f32 %v2529, %v2530
      %v2532 = vsel %vm2411, %v2491, 0.0
      %v2533 = vadd.f32 %v2531, %v2532
      %v2534 = vsel %vm2411, %v2492, 0.0
      %v2535 = vadd.f32 %v2533, %v2534
      %v2536 = vsel %vm2411, %v2493, 0.0
      %v2537 = vadd.f32 %v2535, %v2536
      %v2538 = vsel %vm2411, %v2494, 0.0
      %v2539 = vadd.f32 %v2537, %v2538
      %v2540 = vsel %vm2411, %v2495, 0.0
      %v2541 = vadd.f32 %v2539, %v2540
      %v2542 = vsel %vm2411, %v2496, 0.0
      %v2543 = vadd.f32 %v2541, %v2542
      %v2544 = vsel %vm2411, %v2497, 0.0
      %v2545 = vadd.f32 %v2543, %v2544
      %v2546 = vsel %vm2411, %v2498, 0.0
      %v2547 = vadd.f32 %v2545, %v2546
      %v2548 = vsel %vm2411, %v2499, 0.0
      %v2549 = vadd.f32 %v2547, %v2548
      %v2550 = vsel %vm2411, %v2500, 0.0
      %v2551 = vadd.f32 %v2549, %v2550
      %v2552 = vsel %vm2411, %v2501, 0.0
      %v2553 = vadd.f32 %v2551, %v2552
      %v2554 = vsel %vm2411, %v2502, 0.0
      %v2555 = vadd.f32 %v2553, %v2554
      %v2556 = vsel %vm2411, %v2503, 0.0
      %v2557 = vadd.f32 %v2555, %v2556
      %v2558 = vsel %vm2411, %v2504, 0.0
      %v2559 = vadd.f32 %v2557, %v2558
      %v2560 = vsel %vm2411, %v2505, 0.0
      %v2561 = vadd.f32 %v2559, %v2560
      %v2562 = vsel %vm2411, %v2506, 0.0
      %v2563 = vadd.f32 %v2561, %v2562
      %v2564 = vsel %vm2411, %v2507, 0.0
      %v2565 = vadd.f32 %v2563, %v2564
      %v2566 = vsel %vm2411, %v2508, 0.0
      %v2567 = vadd.f32 %v2565, %v2566
      %v2568 = vsel %vm2411, %v2509, 0.0
      %v2569 = vadd.f32 %v2567, %v2568
      %v2570 = vsel %vm2411, %v2510, 0.0
      %v2571 = vadd.f32 %v2569, %v2570
      %v2572 = vsel %vm2411, %v2511, 0.0
      %v2573 = vadd.f32 %v2571, %v2572
      %v2574 = vsel %vm2411, %v2512, 0.0
      %v2575 = vadd.f32 %v2573, %v2574
      %v2576 = vrot.slane %v2575, 4
      %v2577 = vadd.f32 %v2575, %v2576
      %v2578 = vrot.slane %v2577, 2
      %v2579 = vadd.f32 %v2577, %v2578
      %v2580 = vrot.slane %v2579, 1
      %v2581 = vadd.f32 %v2579, %v2580
      %v2582 = vmul.f32 %v2480, 0.00390625
      %v2583 = vmul.f32 %v2581, 0.00390625
      %v2584 = vmul.f32 %v2582, %v2582
      %v2585 = vsub.f32 %v2583, %v2584
      %v2586 = vmax.f32 %v2585, 0.0
      %v2587 = vsub.f32 %v2379, %v2582
      %v2588 = vsub.f32 %v2380, %v2582
      %v2589 = vsub.f32 %v2381, %v2582
      %v2590 = vsub.f32 %v2382, %v2582
      %v2591 = vsub.f32 %v2383, %v2582
      %v2592 = vsub.f32 %v2384, %v2582
      %v2593 = vsub.f32 %v2385, %v2582
      %v2594 = vsub.f32 %v2386, %v2582
      %v2595 = vsub.f32 %v2387, %v2582
      %v2596 = vsub.f32 %v2388, %v2582
      %v2597 = vsub.f32 %v2389, %v2582
      %v2598 = vsub.f32 %v2390, %v2582
      %v2599 = vsub.f32 %v2391, %v2582
      %v2600 = vsub.f32 %v2392, %v2582
      %v2601 = vsub.f32 %v2393, %v2582
      %v2602 = vsub.f32 %v2394, %v2582
      %v2603 = vsub.f32 %v2395, %v2582
      %v2604 = vsub.f32 %v2396, %v2582
      %v2605 = vsub.f32 %v2397, %v2582
      %v2606 = vsub.f32 %v2398, %v2582
      %v2607 = vsub.f32 %v2399, %v2582
      %v2608 = vsub.f32 %v2400, %v2582
      %v2609 = vsub.f32 %v2401, %v2582
      %v2610 = vsub.f32 %v2402, %v2582
      %v2611 = vsub.f32 %v2403, %v2582
      %v2612 = vsub.f32 %v2404, %v2582
      %v2613 = vsub.f32 %v2405, %v2582
      %v2614 = vsub.f32 %v2406, %v2582
      %v2615 = vsub.f32 %v2407, %v2582
      %v2616 = vsub.f32 %v2408, %v2582
      %v2617 = vsub.f32 %v2409, %v2582
      %v2618 = vsub.f32 %v2410, %v2582
      %v2619 = vadd.f32 %v2586, 1e-05
      %v2620 = vrsqrt.pop %v2619
      %v2621 = vmul.f32 %v2587, %v2620
      %v2622 = vmul.f32 %v2588, %v2620
      %v2623 = vmul.f32 %v2589, %v2620
      %v2624 = vmul.f32 %v2590, %v2620
      %v2625 = vmul.f32 %v2591, %v2620
      %v2626 = vmul.f32 %v2592, %v2620
      %v2627 = vmul.f32 %v2593, %v2620
      %v2628 = vmul.f32 %v2594, %v2620
      %v2629 = vmul.f32 %v2595, %v2620
      %v2630 = vmul.f32 %v2596, %v2620
      %v2631 = vmul.f32 %v2597, %v2620
      %v2632 = vmul.f32 %v2598, %v2620
      %v2633 = vmul.f32 %v2599, %v2620
      %v2634 = vmul.f32 %v2600, %v2620
      %v2635 = vmul.f32 %v2601, %v2620
      %v2636 = vmul.f32 %v2602, %v2620
      %v2637 = vmul.f32 %v2603, %v2620
      %v2638 = vmul.f32 %v2604, %v2620
      %v2639 = vmul.f32 %v2605, %v2620
      %v2640 = vmul.f32 %v2606, %v2620
      %v2641 = vmul.f32 %v2607, %v2620
      %v2642 = vmul.f32 %v2608, %v2620
      %v2643 = vmul.f32 %v2609, %v2620
      %v2644 = vmul.f32 %v2610, %v2620
      %v2645 = vmul.f32 %v2611, %v2620
      %v2646 = vmul.f32 %v2612, %v2620
      %v2647 = vmul.f32 %v2613, %v2620
      %v2648 = vmul.f32 %v2614, %v2620
      %v2649 = vmul.f32 %v2615, %v2620
      %v2650 = vmul.f32 %v2616, %v2620
      %v2651 = vmul.f32 %v2617, %v2620
      %v2652 = vmul.f32 %v2618, %v2620
      %v2653 = vmax.f32 %v2621, 0.0
      %v2654 = vmax.f32 %v2622, 0.0
      %v2655 = vmax.f32 %v2623, 0.0
      %v2656 = vmax.f32 %v2624, 0.0
      %v2657 = vmax.f32 %v2625, 0.0
      %v2658 = vmax.f32 %v2626, 0.0
      %v2659 = vmax.f32 %v2627, 0.0
      %v2660 = vmax.f32 %v2628, 0.0
      %v2661 = vmax.f32 %v2629, 0.0
      %v2662 = vmax.f32 %v2630, 0.0
      %v2663 = vmax.f32 %v2631, 0.0
      %v2664 = vmax.f32 %v2632, 0.0
      %v2665 = vmax.f32 %v2633, 0.0
      %v2666 = vmax.f32 %v2634, 0.0
      %v2667 = vmax.f32 %v2635, 0.0
      %v2668 = vmax.f32 %v2636, 0.0
      %v2669 = vmax.f32 %v2637, 0.0
      %v2670 = vmax.f32 %v2638, 0.0
      %v2671 = vmax.f32 %v2639, 0.0
      %v2672 = vmax.f32 %v2640, 0.0
      %v2673 = vmax.f32 %v2641, 0.0
      %v2674 = vmax.f32 %v2642, 0.0
      %v2675 = vmax.f32 %v2643, 0.0
      %v2676 = vmax.f32 %v2644, 0.0
      %v2677 = vmax.f32 %v2645, 0.0
      %v2678 = vmax.f32 %v2646, 0.0
      %v2679 = vmax.f32 %v2647, 0.0
      %v2680 = vmax.f32 %v2648, 0.0
      %v2681 = vmax.f32 %v2649, 0.0
      %v2682 = vmax.f32 %v2650, 0.0
      %v2683 = vmax.f32 %v2651, 0.0
      %v2684 = vmax.f32 %v2652, 0.0
      %v2685 = vpack.c.bf16 %v2654, %v2653
      %v2686 = vpack.c.bf16 %v2656, %v2655
      %v2687 = vpack.c.bf16 %v2658, %v2657
      %v2688 = vpack.c.bf16 %v2660, %v2659
      %v2689 = vpack.c.bf16 %v2662, %v2661
      %v2690 = vpack.c.bf16 %v2664, %v2663
      %v2691 = vpack.c.bf16 %v2666, %v2665
      %v2692 = vpack.c.bf16 %v2668, %v2667
      %v2693 = vpack.c.bf16 %v2670, %v2669
      %v2694 = vpack.c.bf16 %v2672, %v2671
      %v2695 = vpack.c.bf16 %v2674, %v2673
      %v2696 = vpack.c.bf16 %v2676, %v2675
      %v2697 = vpack.c.bf16 %v2678, %v2677
      %v2698 = vpack.c.bf16 %v2680, %v2679
      %v2699 = vpack.c.bf16 %v2682, %v2681
      %v2700 = vpack.c.bf16 %v2684, %v2683
      %v2717 = vunpack.c.l.b16 %v2685
      %v2718 = vunpack.c.h.b16 %v2685
      %v2719 = vunpack.c.l.b16 %v2686
      %v2720 = vunpack.c.h.b16 %v2686
      %v2721 = vunpack.c.l.b16 %v2687
      %v2722 = vunpack.c.h.b16 %v2687
      %v2723 = vunpack.c.l.b16 %v2688
      %v2724 = vunpack.c.h.b16 %v2688
      %v2725 = vunpack.c.l.b16 %v2689
      %v2726 = vunpack.c.h.b16 %v2689
      %v2727 = vunpack.c.l.b16 %v2690
      %v2728 = vunpack.c.h.b16 %v2690
      %v2729 = vunpack.c.l.b16 %v2691
      %v2730 = vunpack.c.h.b16 %v2691
      %v2731 = vunpack.c.l.b16 %v2692
      %v2732 = vunpack.c.h.b16 %v2692
      %v2733 = vunpack.c.l.b16 %v2693
      %v2734 = vunpack.c.h.b16 %v2693
      %v2735 = vunpack.c.l.b16 %v2694
      %v2736 = vunpack.c.h.b16 %v2694
      %v2737 = vunpack.c.l.b16 %v2695
      %v2738 = vunpack.c.h.b16 %v2695
      %v2739 = vunpack.c.l.b16 %v2696
      %v2740 = vunpack.c.h.b16 %v2696
      %v2741 = vunpack.c.l.b16 %v2697
      %v2742 = vunpack.c.h.b16 %v2697
      %v2743 = vunpack.c.l.b16 %v2698
      %v2744 = vunpack.c.h.b16 %v2698
      %v2745 = vunpack.c.l.b16 %v2699
      %v2746 = vunpack.c.h.b16 %v2699
      %v2747 = vunpack.c.l.b16 %v2700
      %v2748 = vunpack.c.h.b16 %v2700
      %v2749 = vpack.c.b16 %v2717, %v2717
      %v2750 = vpack.c.b16 %v2718, %v2718
      %v2751 = vpack.c.b16 %v2719, %v2719
      %v2752 = vpack.c.b16 %v2720, %v2720
      %v2753 = vpack.c.b16 %v2721, %v2721
      %v2754 = vpack.c.b16 %v2722, %v2722
      %v2755 = vpack.c.b16 %v2723, %v2723
      %v2756 = vpack.c.b16 %v2724, %v2724
      %v2757 = vpack.c.b16 %v2725, %v2725
      %v2758 = vpack.c.b16 %v2726, %v2726
      %v2759 = vpack.c.b16 %v2727, %v2727
      %v2760 = vpack.c.b16 %v2728, %v2728
      %v2761 = vpack.c.b16 %v2729, %v2729
      %v2762 = vpack.c.b16 %v2730, %v2730
      %v2763 = vpack.c.b16 %v2731, %v2731
      %v2764 = vpack.c.b16 %v2732, %v2732
      %v2765 = vpack.c.b16 %v2733, %v2733
      %v2766 = vpack.c.b16 %v2734, %v2734
      %v2767 = vpack.c.b16 %v2735, %v2735
      %v2768 = vpack.c.b16 %v2736, %v2736
      %v2769 = vpack.c.b16 %v2737, %v2737
      %v2770 = vpack.c.b16 %v2738, %v2738
      %v2771 = vpack.c.b16 %v2739, %v2739
      %v2772 = vpack.c.b16 %v2740, %v2740
      %v2773 = vpack.c.b16 %v2741, %v2741
      %v2774 = vpack.c.b16 %v2742, %v2742
      %v2775 = vpack.c.b16 %v2743, %v2743
      %v2776 = vpack.c.b16 %v2744, %v2744
      %v2777 = vpack.c.b16 %v2745, %v2745
      %v2778 = vpack.c.b16 %v2746, %v2746
      %v2779 = vpack.c.b16 %v2747, %v2747
      %v2780 = vpack.c.b16 %v2748, %v2748
      %2781 = vrot.lane.b32.xlu0 %v2749, 4
      %v2782 = vpop.permute.xlu0 %2781
      %2783 = vrot.lane.b32.xlu0 %v2750, 4
      %v2784 = vpop.permute.xlu0 %2783
      %2785 = vrot.lane.b32.xlu0 %v2751, 4
      %v2786 = vpop.permute.xlu0 %2785
      %2787 = vrot.lane.b32.xlu0 %v2752, 4
      %v2788 = vpop.permute.xlu0 %2787
      %2789 = vrot.lane.b32.xlu0 %v2753, 4
      %v2790 = vpop.permute.xlu0 %2789
      %2791 = vrot.lane.b32.xlu0 %v2754, 4
      %v2792 = vpop.permute.xlu0 %2791
      %2793 = vrot.lane.b32.xlu0 %v2755, 4
      %v2794 = vpop.permute.xlu0 %2793
      %2795 = vrot.lane.b32.xlu0 %v2756, 4
      %v2796 = vpop.permute.xlu0 %2795
      %2797 = vrot.lane.b32.xlu0 %v2757, 4
      %v2798 = vpop.permute.xlu0 %2797
      %2799 = vrot.lane.b32.xlu0 %v2758, 4
      %v2800 = vpop.permute.xlu0 %2799
      %2801 = vrot.lane.b32.xlu0 %v2759, 4
      %v2802 = vpop.permute.xlu0 %2801
      %2803 = vrot.lane.b32.xlu0 %v2760, 4
      %v2804 = vpop.permute.xlu0 %2803
      %2805 = vrot.lane.b32.xlu0 %v2761, 4
      %v2806 = vpop.permute.xlu0 %2805
      %2807 = vrot.lane.b32.xlu0 %v2762, 4
      %v2808 = vpop.permute.xlu0 %2807
      %2809 = vrot.lane.b32.xlu0 %v2763, 4
      %v2810 = vpop.permute.xlu0 %2809
      %2811 = vrot.lane.b32.xlu0 %v2764, 4
      %v2812 = vpop.permute.xlu0 %2811
      %2813 = vrot.lane.b32.xlu0 %v2765, 4
      %v2814 = vpop.permute.xlu0 %2813
      %2815 = vrot.lane.b32.xlu0 %v2766, 4
      %v2816 = vpop.permute.xlu0 %2815
      %2817 = vrot.lane.b32.xlu0 %v2767, 4
      %v2818 = vpop.permute.xlu0 %2817
      %2819 = vrot.lane.b32.xlu0 %v2768, 4
      %v2820 = vpop.permute.xlu0 %2819
      %2821 = vrot.lane.b32.xlu0 %v2769, 4
      %v2822 = vpop.permute.xlu0 %2821
      %2823 = vrot.lane.b32.xlu0 %v2770, 4
      %v2824 = vpop.permute.xlu0 %2823
      %2825 = vrot.lane.b32.xlu0 %v2771, 4
      %v2826 = vpop.permute.xlu0 %2825
      %2827 = vrot.lane.b32.xlu0 %v2772, 4
      %v2828 = vpop.permute.xlu0 %2827
      %2829 = vrot.lane.b32.xlu0 %v2773, 4
      %v2830 = vpop.permute.xlu0 %2829
      %2831 = vrot.lane.b32.xlu0 %v2774, 4
      %v2832 = vpop.permute.xlu0 %2831
      %2833 = vrot.lane.b32.xlu0 %v2775, 4
      %v2834 = vpop.permute.xlu0 %2833
      %2835 = vrot.lane.b32.xlu0 %v2776, 4
      %v2836 = vpop.permute.xlu0 %2835
      %2837 = vrot.lane.b32.xlu0 %v2777, 4
      %v2838 = vpop.permute.xlu0 %2837
      %2839 = vrot.lane.b32.xlu0 %v2778, 4
      %v2840 = vpop.permute.xlu0 %2839
      %2841 = vrot.lane.b32.xlu0 %v2779, 4
      %v2842 = vpop.permute.xlu0 %2841
      %2843 = vrot.lane.b32.xlu0 %v2780, 4
      %v2844 = vpop.permute.xlu0 %2843
      %2877 = vst.msk [vmem:[%s396] sm:$0xf] %vm397, %v2782
      %2878 = vst.msk [vmem:[%s396 + $0x4] sm:$0xf] %vm397, %v2784
      %2879 = vst.msk [vmem:[%s396 + $0x8] sm:$0xf] %vm397, %v2786
      %2880 = vst.msk [vmem:[%s396 + $0xc] sm:$0xf] %vm397, %v2788
      %2881 = vst.msk [vmem:[%s396 + $0x10] sm:$0xf] %vm397, %v2790
      %2882 = vst.msk [vmem:[%s396 + $0x14] sm:$0xf] %vm397, %v2792
      %2883 = vst.msk [vmem:[%s396 + $0x18] sm:$0xf] %vm397, %v2794
      %2884 = vst.msk [vmem:[%s396 + $0x1c] sm:$0xf] %vm397, %v2796
      %2885 = vst.msk [vmem:[%s396 + $0x20] sm:$0xf] %vm397, %v2798
      %2886 = vst.msk [vmem:[%s396 + $0x24] sm:$0xf] %vm397, %v2800
      %2887 = vst.msk [vmem:[%s396 + $0x28] sm:$0xf] %vm397, %v2802
      %2888 = vst.msk [vmem:[%s396 + $0x2c] sm:$0xf] %vm397, %v2804
      %2889 = vst.msk [vmem:[%s396 + $0x30] sm:$0xf] %vm397, %v2806
      %2890 = vst.msk [vmem:[%s396 + $0x34] sm:$0xf] %vm397, %v2808
      %2891 = vst.msk [vmem:[%s396 + $0x38] sm:$0xf] %vm397, %v2810
      %2892 = vst.msk [vmem:[%s396 + $0x3c] sm:$0xf] %vm397, %v2812
      %2893 = vst.msk [vmem:[%s396 + $0x40] sm:$0xf] %vm397, %v2814
      %2894 = vst.msk [vmem:[%s396 + $0x44] sm:$0xf] %vm397, %v2816
      %2895 = vst.msk [vmem:[%s396 + $0x48] sm:$0xf] %vm397, %v2818
      %2896 = vst.msk [vmem:[%s396 + $0x4c] sm:$0xf] %vm397, %v2820
      %2897 = vst.msk [vmem:[%s396 + $0x50] sm:$0xf] %vm397, %v2822
      %2898 = vst.msk [vmem:[%s396 + $0x54] sm:$0xf] %vm397, %v2824
      %2899 = vst.msk [vmem:[%s396 + $0x58] sm:$0xf] %vm397, %v2826
      %2900 = vst.msk [vmem:[%s396 + $0x5c] sm:$0xf] %vm397, %v2828
      %2901 = vst.msk [vmem:[%s396 + $0x60] sm:$0xf] %vm397, %v2830
      %2902 = vst.msk [vmem:[%s396 + $0x64] sm:$0xf] %vm397, %v2832
      %2903 = vst.msk [vmem:[%s396 + $0x68] sm:$0xf] %vm397, %v2834
      %2904 = vst.msk [vmem:[%s396 + $0x6c] sm:$0xf] %vm397, %v2836
      %2905 = vst.msk [vmem:[%s396 + $0x70] sm:$0xf] %vm397, %v2838
      %2906 = vst.msk [vmem:[%s396 + $0x74] sm:$0xf] %vm397, %v2840
      %2907 = vst.msk [vmem:[%s396 + $0x78] sm:$0xf] %vm397, %v2842
      %2908 = vst.msk [vmem:[%s396 + $0x7c] sm:$0xf] %vm397, %v2844
      %v2909 = vrot.slane %v2653, 7
      %v2910 = vrot.slane %v2655, 7
      %v2911 = vrot.slane %v2657, 7
      %v2912 = vrot.slane %v2659, 7
      %v2913 = vrot.slane %v2661, 7
      %v2914 = vrot.slane %v2663, 7
      %v2915 = vrot.slane %v2665, 7
      %v2916 = vrot.slane %v2667, 7
      %v2917 = vrot.slane %v2669, 7
      %v2918 = vrot.slane %v2671, 7
      %v2919 = vrot.slane %v2673, 7
      %v2920 = vrot.slane %v2675, 7
      %v2921 = vrot.slane %v2677, 7
      %v2922 = vrot.slane %v2679, 7
      %v2923 = vrot.slane %v2681, 7
      %v2924 = vrot.slane %v2683, 7
      %v2925 = vrot.slane %v2654, 7
      %v2926 = vrot.slane %v2656, 7
      %v2927 = vrot.slane %v2658, 7
      %v2928 = vrot.slane %v2660, 7
      %v2929 = vrot.slane %v2662, 7
      %v2930 = vrot.slane %v2664, 7
      %v2931 = vrot.slane %v2666, 7
      %v2932 = vrot.slane %v2668, 7
      %v2933 = vrot.slane %v2670, 7
      %v2934 = vrot.slane %v2672, 7
      %v2935 = vrot.slane %v2674, 7
      %v2936 = vrot.slane %v2676, 7
      %v2937 = vrot.slane %v2678, 7
      %v2938 = vrot.slane %v2680, 7
      %v2939 = vrot.slane %v2682, 7
      %v2940 = vrot.slane %v2684, 7
      %v2941 = vsel %vm464, %v2909, %v2925
      %v2942 = vsel %vm464, %v2910, %v2926
      %v2943 = vsel %vm464, %v2911, %v2927
      %v2944 = vsel %vm464, %v2912, %v2928
      %v2945 = vsel %vm464, %v2913, %v2929
      %v2946 = vsel %vm464, %v2914, %v2930
      %v2947 = vsel %vm464, %v2915, %v2931
      %v2948 = vsel %vm464, %v2916, %v2932
      %v2949 = vsel %vm464, %v2917, %v2933
      %v2950 = vsel %vm464, %v2918, %v2934
      %v2951 = vsel %vm464, %v2919, %v2935
      %v2952 = vsel %vm464, %v2920, %v2936
      %v2953 = vsel %vm464, %v2921, %v2937
      %v2954 = vsel %vm464, %v2922, %v2938
      %v2955 = vsel %vm464, %v2923, %v2939
      %v2956 = vsel %vm464, %v2924, %v2940
      %v2957 = vsel %vm464, %v2925, %v2909
      %v2958 = vsel %vm464, %v2926, %v2910
      %v2959 = vsel %vm464, %v2927, %v2911
      %v2960 = vsel %vm464, %v2928, %v2912
      %v2961 = vsel %vm464, %v2929, %v2913
      %v2962 = vsel %vm464, %v2930, %v2914
      %v2963 = vsel %vm464, %v2931, %v2915
      %v2964 = vsel %vm464, %v2932, %v2916
      %v2965 = vsel %vm464, %v2933, %v2917
      %v2966 = vsel %vm464, %v2934, %v2918
      %v2967 = vsel %vm464, %v2935, %v2919
      %v2968 = vsel %vm464, %v2936, %v2920
      %v2969 = vsel %vm464, %v2937, %v2921
      %v2970 = vsel %vm464, %v2938, %v2922
      %v2971 = vsel %vm464, %v2939, %v2923
      %v2972 = vsel %vm464, %v2940, %v2924
      %v2973 = vpack.c.bf16 %v2941, %v2957
      %v2974 = vpack.c.bf16 %v2942, %v2958
      %v2975 = vpack.c.bf16 %v2943, %v2959
      %v2976 = vpack.c.bf16 %v2944, %v2960
      %v2977 = vpack.c.bf16 %v2945, %v2961
      %v2978 = vpack.c.bf16 %v2946, %v2962
      %v2979 = vpack.c.bf16 %v2947, %v2963
      %v2980 = vpack.c.bf16 %v2948, %v2964
      %v2981 = vpack.c.bf16 %v2949, %v2965
      %v2982 = vpack.c.bf16 %v2950, %v2966
      %v2983 = vpack.c.bf16 %v2951, %v2967
      %v2984 = vpack.c.bf16 %v2952, %v2968
      %v2985 = vpack.c.bf16 %v2953, %v2969
      %v2986 = vpack.c.bf16 %v2954, %v2970
      %v2987 = vpack.c.bf16 %v2955, %v2971
      %v2988 = vpack.c.bf16 %v2956, %v2972
      %v3005 = vunpack.c.l.b16 %v2973
      %v3006 = vunpack.c.h.b16 %v2973
      %v3007 = vunpack.c.l.b16 %v2974
      %v3008 = vunpack.c.h.b16 %v2974
      %v3009 = vunpack.c.l.b16 %v2975
      %v3010 = vunpack.c.h.b16 %v2975
      %v3011 = vunpack.c.l.b16 %v2976
      %v3012 = vunpack.c.h.b16 %v2976
      %v3013 = vunpack.c.l.b16 %v2977
      %v3014 = vunpack.c.h.b16 %v2977
      %v3015 = vunpack.c.l.b16 %v2978
      %v3016 = vunpack.c.h.b16 %v2978
      %v3017 = vunpack.c.l.b16 %v2979
      %v3018 = vunpack.c.h.b16 %v2979
      %v3019 = vunpack.c.l.b16 %v2980
      %v3020 = vunpack.c.h.b16 %v2980
      %v3021 = vunpack.c.l.b16 %v2981
      %v3022 = vunpack.c.h.b16 %v2981
      %v3023 = vunpack.c.l.b16 %v2982
      %v3024 = vunpack.c.h.b16 %v2982
      %v3025 = vunpack.c.l.b16 %v2983
      %v3026 = vunpack.c.h.b16 %v2983
      %v3027 = vunpack.c.l.b16 %v2984
      %v3028 = vunpack.c.h.b16 %v2984
      %v3029 = vunpack.c.l.b16 %v2985
      %v3030 = vunpack.c.h.b16 %v2985
      %v3031 = vunpack.c.l.b16 %v2986
      %v3032 = vunpack.c.h.b16 %v2986
      %v3033 = vunpack.c.l.b16 %v2987
      %v3034 = vunpack.c.h.b16 %v2987
      %v3035 = vunpack.c.l.b16 %v2988
      %v3036 = vunpack.c.h.b16 %v2988
      %v3037 = vpack.c.b16 %v3005, %v3005
      %v3038 = vpack.c.b16 %v3006, %v3006
      %v3039 = vpack.c.b16 %v3007, %v3007
      %v3040 = vpack.c.b16 %v3008, %v3008
      %v3041 = vpack.c.b16 %v3009, %v3009
      %v3042 = vpack.c.b16 %v3010, %v3010
      %v3043 = vpack.c.b16 %v3011, %v3011
      %v3044 = vpack.c.b16 %v3012, %v3012
      %v3045 = vpack.c.b16 %v3013, %v3013
      %v3046 = vpack.c.b16 %v3014, %v3014
      %v3047 = vpack.c.b16 %v3015, %v3015
      %v3048 = vpack.c.b16 %v3016, %v3016
      %v3049 = vpack.c.b16 %v3017, %v3017
      %v3050 = vpack.c.b16 %v3018, %v3018
      %v3051 = vpack.c.b16 %v3019, %v3019
      %v3052 = vpack.c.b16 %v3020, %v3020
      %v3053 = vpack.c.b16 %v3021, %v3021
      %v3054 = vpack.c.b16 %v3022, %v3022
      %v3055 = vpack.c.b16 %v3023, %v3023
      %v3056 = vpack.c.b16 %v3024, %v3024
      %v3057 = vpack.c.b16 %v3025, %v3025
      %v3058 = vpack.c.b16 %v3026, %v3026
      %v3059 = vpack.c.b16 %v3027, %v3027
      %v3060 = vpack.c.b16 %v3028, %v3028
      %v3061 = vpack.c.b16 %v3029, %v3029
      %v3062 = vpack.c.b16 %v3030, %v3030
      %v3063 = vpack.c.b16 %v3031, %v3031
      %v3064 = vpack.c.b16 %v3032, %v3032
      %v3065 = vpack.c.b16 %v3033, %v3033
      %v3066 = vpack.c.b16 %v3034, %v3034
      %v3067 = vpack.c.b16 %v3035, %v3035
      %v3068 = vpack.c.b16 %v3036, %v3036
      %3101 = vst.msk [vmem:[%s396] sm:$0xf] %vm625, %v3037
      %3102 = vst.msk [vmem:[%s396 + $0x4] sm:$0xf] %vm625, %v3038
      %3103 = vst.msk [vmem:[%s396 + $0x8] sm:$0xf] %vm625, %v3039
      %3104 = vst.msk [vmem:[%s396 + $0xc] sm:$0xf] %vm625, %v3040
      %3105 = vst.msk [vmem:[%s396 + $0x10] sm:$0xf] %vm625, %v3041
      %3106 = vst.msk [vmem:[%s396 + $0x14] sm:$0xf] %vm625, %v3042
      %3107 = vst.msk [vmem:[%s396 + $0x18] sm:$0xf] %vm625, %v3043
      %3108 = vst.msk [vmem:[%s396 + $0x1c] sm:$0xf] %vm625, %v3044
      %3109 = vst.msk [vmem:[%s396 + $0x20] sm:$0xf] %vm625, %v3045
      %3110 = vst.msk [vmem:[%s396 + $0x24] sm:$0xf] %vm625, %v3046
      %3111 = vst.msk [vmem:[%s396 + $0x28] sm:$0xf] %vm625, %v3047
      %3112 = vst.msk [vmem:[%s396 + $0x2c] sm:$0xf] %vm625, %v3048
      %3113 = vst.msk [vmem:[%s396 + $0x30] sm:$0xf] %vm625, %v3049
      %3114 = vst.msk [vmem:[%s396 + $0x34] sm:$0xf] %vm625, %v3050
      %3115 = vst.msk [vmem:[%s396 + $0x38] sm:$0xf] %vm625, %v3051
      %3116 = vst.msk [vmem:[%s396 + $0x3c] sm:$0xf] %vm625, %v3052
      %3117 = vst.msk [vmem:[%s396 + $0x40] sm:$0xf] %vm625, %v3053
      %3118 = vst.msk [vmem:[%s396 + $0x44] sm:$0xf] %vm625, %v3054
      %3119 = vst.msk [vmem:[%s396 + $0x48] sm:$0xf] %vm625, %v3055
      %3120 = vst.msk [vmem:[%s396 + $0x4c] sm:$0xf] %vm625, %v3056
      %3121 = vst.msk [vmem:[%s396 + $0x50] sm:$0xf] %vm625, %v3057
      %3122 = vst.msk [vmem:[%s396 + $0x54] sm:$0xf] %vm625, %v3058
      %3123 = vst.msk [vmem:[%s396 + $0x58] sm:$0xf] %vm625, %v3059
      %3124 = vst.msk [vmem:[%s396 + $0x5c] sm:$0xf] %vm625, %v3060
      %3125 = vst.msk [vmem:[%s396 + $0x60] sm:$0xf] %vm625, %v3061
      %3126 = vst.msk [vmem:[%s396 + $0x64] sm:$0xf] %vm625, %v3062
      %3127 = vst.msk [vmem:[%s396 + $0x68] sm:$0xf] %vm625, %v3063
      %3128 = vst.msk [vmem:[%s396 + $0x6c] sm:$0xf] %vm625, %v3064
      %3129 = vst.msk [vmem:[%s396 + $0x70] sm:$0xf] %vm625, %v3065
      %3130 = vst.msk [vmem:[%s396 + $0x74] sm:$0xf] %vm625, %v3066
      %3131 = vst.msk [vmem:[%s396 + $0x78] sm:$0xf] %vm625, %v3067
      %3132 = vst.msk [vmem:[%s396 + $0x7c] sm:$0xf] %vm625, %v3068
      %v3133 = vrot.slane %v2653, 1
      %v3134 = vrot.slane %v2655, 1
      %v3135 = vrot.slane %v2657, 1
      %v3136 = vrot.slane %v2659, 1
      %v3137 = vrot.slane %v2661, 1
      %v3138 = vrot.slane %v2663, 1
      %v3139 = vrot.slane %v2665, 1
      %v3140 = vrot.slane %v2667, 1
      %v3141 = vrot.slane %v2669, 1
      %v3142 = vrot.slane %v2671, 1
      %v3143 = vrot.slane %v2673, 1
      %v3144 = vrot.slane %v2675, 1
      %v3145 = vrot.slane %v2677, 1
      %v3146 = vrot.slane %v2679, 1
      %v3147 = vrot.slane %v2681, 1
      %v3148 = vrot.slane %v2683, 1
      %v3149 = vrot.slane %v2654, 1
      %v3150 = vrot.slane %v2656, 1
      %v3151 = vrot.slane %v2658, 1
      %v3152 = vrot.slane %v2660, 1
      %v3153 = vrot.slane %v2662, 1
      %v3154 = vrot.slane %v2664, 1
      %v3155 = vrot.slane %v2666, 1
      %v3156 = vrot.slane %v2668, 1
      %v3157 = vrot.slane %v2670, 1
      %v3158 = vrot.slane %v2672, 1
      %v3159 = vrot.slane %v2674, 1
      %v3160 = vrot.slane %v2676, 1
      %v3161 = vrot.slane %v2678, 1
      %v3162 = vrot.slane %v2680, 1
      %v3163 = vrot.slane %v2682, 1
      %v3164 = vrot.slane %v2684, 1
      %v3165 = vsel %vm690, %v3133, %v3149
      %v3166 = vsel %vm690, %v3134, %v3150
      %v3167 = vsel %vm690, %v3135, %v3151
      %v3168 = vsel %vm690, %v3136, %v3152
      %v3169 = vsel %vm690, %v3137, %v3153
      %v3170 = vsel %vm690, %v3138, %v3154
      %v3171 = vsel %vm690, %v3139, %v3155
      %v3172 = vsel %vm690, %v3140, %v3156
      %v3173 = vsel %vm690, %v3141, %v3157
      %v3174 = vsel %vm690, %v3142, %v3158
      %v3175 = vsel %vm690, %v3143, %v3159
      %v3176 = vsel %vm690, %v3144, %v3160
      %v3177 = vsel %vm690, %v3145, %v3161
      %v3178 = vsel %vm690, %v3146, %v3162
      %v3179 = vsel %vm690, %v3147, %v3163
      %v3180 = vsel %vm690, %v3148, %v3164
      %v3181 = vsel %vm690, %v3149, %v3133
      %v3182 = vsel %vm690, %v3150, %v3134
      %v3183 = vsel %vm690, %v3151, %v3135
      %v3184 = vsel %vm690, %v3152, %v3136
      %v3185 = vsel %vm690, %v3153, %v3137
      %v3186 = vsel %vm690, %v3154, %v3138
      %v3187 = vsel %vm690, %v3155, %v3139
      %v3188 = vsel %vm690, %v3156, %v3140
      %v3189 = vsel %vm690, %v3157, %v3141
      %v3190 = vsel %vm690, %v3158, %v3142
      %v3191 = vsel %vm690, %v3159, %v3143
      %v3192 = vsel %vm690, %v3160, %v3144
      %v3193 = vsel %vm690, %v3161, %v3145
      %v3194 = vsel %vm690, %v3162, %v3146
      %v3195 = vsel %vm690, %v3163, %v3147
      %v3196 = vsel %vm690, %v3164, %v3148
      %v3197 = vpack.c.bf16 %v3181, %v3165
      %v3198 = vpack.c.bf16 %v3182, %v3166
      %v3199 = vpack.c.bf16 %v3183, %v3167
      %v3200 = vpack.c.bf16 %v3184, %v3168
      %v3201 = vpack.c.bf16 %v3185, %v3169
      %v3202 = vpack.c.bf16 %v3186, %v3170
      %v3203 = vpack.c.bf16 %v3187, %v3171
      %v3204 = vpack.c.bf16 %v3188, %v3172
      %v3205 = vpack.c.bf16 %v3189, %v3173
      %v3206 = vpack.c.bf16 %v3190, %v3174
      %v3207 = vpack.c.bf16 %v3191, %v3175
      %v3208 = vpack.c.bf16 %v3192, %v3176
      %v3209 = vpack.c.bf16 %v3193, %v3177
      %v3210 = vpack.c.bf16 %v3194, %v3178
      %v3211 = vpack.c.bf16 %v3195, %v3179
      %v3212 = vpack.c.bf16 %v3196, %v3180
      %v3229 = vunpack.c.l.b16 %v3197
      %v3230 = vunpack.c.h.b16 %v3197
      %v3231 = vunpack.c.l.b16 %v3198
      %v3232 = vunpack.c.h.b16 %v3198
      %v3233 = vunpack.c.l.b16 %v3199
      %v3234 = vunpack.c.h.b16 %v3199
      %v3235 = vunpack.c.l.b16 %v3200
      %v3236 = vunpack.c.h.b16 %v3200
      %v3237 = vunpack.c.l.b16 %v3201
      %v3238 = vunpack.c.h.b16 %v3201
      %v3239 = vunpack.c.l.b16 %v3202
      %v3240 = vunpack.c.h.b16 %v3202
      %v3241 = vunpack.c.l.b16 %v3203
      %v3242 = vunpack.c.h.b16 %v3203
      %v3243 = vunpack.c.l.b16 %v3204
      %v3244 = vunpack.c.h.b16 %v3204
      %v3245 = vunpack.c.l.b16 %v3205
      %v3246 = vunpack.c.h.b16 %v3205
      %v3247 = vunpack.c.l.b16 %v3206
      %v3248 = vunpack.c.h.b16 %v3206
      %v3249 = vunpack.c.l.b16 %v3207
      %v3250 = vunpack.c.h.b16 %v3207
      %v3251 = vunpack.c.l.b16 %v3208
      %v3252 = vunpack.c.h.b16 %v3208
      %v3253 = vunpack.c.l.b16 %v3209
      %v3254 = vunpack.c.h.b16 %v3209
      %v3255 = vunpack.c.l.b16 %v3210
      %v3256 = vunpack.c.h.b16 %v3210
      %v3257 = vunpack.c.l.b16 %v3211
      %v3258 = vunpack.c.h.b16 %v3211
      %v3259 = vunpack.c.l.b16 %v3212
      %v3260 = vunpack.c.h.b16 %v3212
      %v3261 = vpack.c.b16 %v3229, %v3229
      %v3262 = vpack.c.b16 %v3230, %v3230
      %v3263 = vpack.c.b16 %v3231, %v3231
      %v3264 = vpack.c.b16 %v3232, %v3232
      %v3265 = vpack.c.b16 %v3233, %v3233
      %v3266 = vpack.c.b16 %v3234, %v3234
      %v3267 = vpack.c.b16 %v3235, %v3235
      %v3268 = vpack.c.b16 %v3236, %v3236
      %v3269 = vpack.c.b16 %v3237, %v3237
      %v3270 = vpack.c.b16 %v3238, %v3238
      %v3271 = vpack.c.b16 %v3239, %v3239
      %v3272 = vpack.c.b16 %v3240, %v3240
      %v3273 = vpack.c.b16 %v3241, %v3241
      %v3274 = vpack.c.b16 %v3242, %v3242
      %v3275 = vpack.c.b16 %v3243, %v3243
      %v3276 = vpack.c.b16 %v3244, %v3244
      %v3277 = vpack.c.b16 %v3245, %v3245
      %v3278 = vpack.c.b16 %v3246, %v3246
      %v3279 = vpack.c.b16 %v3247, %v3247
      %v3280 = vpack.c.b16 %v3248, %v3248
      %v3281 = vpack.c.b16 %v3249, %v3249
      %v3282 = vpack.c.b16 %v3250, %v3250
      %v3283 = vpack.c.b16 %v3251, %v3251
      %v3284 = vpack.c.b16 %v3252, %v3252
      %v3285 = vpack.c.b16 %v3253, %v3253
      %v3286 = vpack.c.b16 %v3254, %v3254
      %v3287 = vpack.c.b16 %v3255, %v3255
      %v3288 = vpack.c.b16 %v3256, %v3256
      %v3289 = vpack.c.b16 %v3257, %v3257
      %v3290 = vpack.c.b16 %v3258, %v3258
      %v3291 = vpack.c.b16 %v3259, %v3259
      %v3292 = vpack.c.b16 %v3260, %v3260
      %3293 = vrot.lane.b32.xlu0 %v3261, 8
      %v3294 = vpop.permute.xlu0 %3293
      %3295 = vrot.lane.b32.xlu0 %v3262, 8
      %v3296 = vpop.permute.xlu0 %3295
      %3297 = vrot.lane.b32.xlu0 %v3263, 8
      %v3298 = vpop.permute.xlu0 %3297
      %3299 = vrot.lane.b32.xlu0 %v3264, 8
      %v3300 = vpop.permute.xlu0 %3299
      %3301 = vrot.lane.b32.xlu0 %v3265, 8
      %v3302 = vpop.permute.xlu0 %3301
      %3303 = vrot.lane.b32.xlu0 %v3266, 8
      %v3304 = vpop.permute.xlu0 %3303
      %3305 = vrot.lane.b32.xlu0 %v3267, 8
      %v3306 = vpop.permute.xlu0 %3305
      %3307 = vrot.lane.b32.xlu0 %v3268, 8
      %v3308 = vpop.permute.xlu0 %3307
      %3309 = vrot.lane.b32.xlu0 %v3269, 8
      %v3310 = vpop.permute.xlu0 %3309
      %3311 = vrot.lane.b32.xlu0 %v3270, 8
      %v3312 = vpop.permute.xlu0 %3311
      %3313 = vrot.lane.b32.xlu0 %v3271, 8
      %v3314 = vpop.permute.xlu0 %3313
      %3315 = vrot.lane.b32.xlu0 %v3272, 8
      %v3316 = vpop.permute.xlu0 %3315
      %3317 = vrot.lane.b32.xlu0 %v3273, 8
      %v3318 = vpop.permute.xlu0 %3317
      %3319 = vrot.lane.b32.xlu0 %v3274, 8
      %v3320 = vpop.permute.xlu0 %3319
      %3321 = vrot.lane.b32.xlu0 %v3275, 8
      %v3322 = vpop.permute.xlu0 %3321
      %3323 = vrot.lane.b32.xlu0 %v3276, 8
      %v3324 = vpop.permute.xlu0 %3323
      %3325 = vrot.lane.b32.xlu0 %v3277, 8
      %v3326 = vpop.permute.xlu0 %3325
      %3327 = vrot.lane.b32.xlu0 %v3278, 8
      %v3328 = vpop.permute.xlu0 %3327
      %3329 = vrot.lane.b32.xlu0 %v3279, 8
      %v3330 = vpop.permute.xlu0 %3329
      %3331 = vrot.lane.b32.xlu0 %v3280, 8
      %v3332 = vpop.permute.xlu0 %3331
      %3333 = vrot.lane.b32.xlu0 %v3281, 8
      %v3334 = vpop.permute.xlu0 %3333
      %3335 = vrot.lane.b32.xlu0 %v3282, 8
      %v3336 = vpop.permute.xlu0 %3335
      %3337 = vrot.lane.b32.xlu0 %v3283, 8
      %v3338 = vpop.permute.xlu0 %3337
      %3339 = vrot.lane.b32.xlu0 %v3284, 8
      %v3340 = vpop.permute.xlu0 %3339
      %3341 = vrot.lane.b32.xlu0 %v3285, 8
      %v3342 = vpop.permute.xlu0 %3341
      %3343 = vrot.lane.b32.xlu0 %v3286, 8
      %v3344 = vpop.permute.xlu0 %3343
      %3345 = vrot.lane.b32.xlu0 %v3287, 8
      %v3346 = vpop.permute.xlu0 %3345
      %3347 = vrot.lane.b32.xlu0 %v3288, 8
      %v3348 = vpop.permute.xlu0 %3347
      %3349 = vrot.lane.b32.xlu0 %v3289, 8
      %v3350 = vpop.permute.xlu0 %3349
      %3351 = vrot.lane.b32.xlu0 %v3290, 8
      %v3352 = vpop.permute.xlu0 %3351
      %3353 = vrot.lane.b32.xlu0 %v3291, 8
      %v3354 = vpop.permute.xlu0 %3353
      %3355 = vrot.lane.b32.xlu0 %v3292, 8
      %v3356 = vpop.permute.xlu0 %3355
      %3389 = vst.msk [vmem:[%s396] sm:$0xf] %vm915, %v3294
      %3390 = vst.msk [vmem:[%s396 + $0x4] sm:$0xf] %vm915, %v3296
      %3391 = vst.msk [vmem:[%s396 + $0x8] sm:$0xf] %vm915, %v3298
      %3392 = vst.msk [vmem:[%s396 + $0xc] sm:$0xf] %vm915, %v3300
      %3393 = vst.msk [vmem:[%s396 + $0x10] sm:$0xf] %vm915, %v3302
      %3394 = vst.msk [vmem:[%s396 + $0x14] sm:$0xf] %vm915, %v3304
      %3395 = vst.msk [vmem:[%s396 + $0x18] sm:$0xf] %vm915, %v3306
      %3396 = vst.msk [vmem:[%s396 + $0x1c] sm:$0xf] %vm915, %v3308
      %3397 = vst.msk [vmem:[%s396 + $0x20] sm:$0xf] %vm915, %v3310
      %3398 = vst.msk [vmem:[%s396 + $0x24] sm:$0xf] %vm915, %v3312
      %3399 = vst.msk [vmem:[%s396 + $0x28] sm:$0xf] %vm915, %v3314
      %3400 = vst.msk [vmem:[%s396 + $0x2c] sm:$0xf] %vm915, %v3316
      %3401 = vst.msk [vmem:[%s396 + $0x30] sm:$0xf] %vm915, %v3318
      %3402 = vst.msk [vmem:[%s396 + $0x34] sm:$0xf] %vm915, %v3320
      %3403 = vst.msk [vmem:[%s396 + $0x38] sm:$0xf] %vm915, %v3322
      %3404 = vst.msk [vmem:[%s396 + $0x3c] sm:$0xf] %vm915, %v3324
      %3405 = vst.msk [vmem:[%s396 + $0x40] sm:$0xf] %vm915, %v3326
      %3406 = vst.msk [vmem:[%s396 + $0x44] sm:$0xf] %vm915, %v3328
      %3407 = vst.msk [vmem:[%s396 + $0x48] sm:$0xf] %vm915, %v3330
      %3408 = vst.msk [vmem:[%s396 + $0x4c] sm:$0xf] %vm915, %v3332
      %3409 = vst.msk [vmem:[%s396 + $0x50] sm:$0xf] %vm915, %v3334
      %3410 = vst.msk [vmem:[%s396 + $0x54] sm:$0xf] %vm915, %v3336
      %3411 = vst.msk [vmem:[%s396 + $0x58] sm:$0xf] %vm915, %v3338
      %3412 = vst.msk [vmem:[%s396 + $0x5c] sm:$0xf] %vm915, %v3340
      %3413 = vst.msk [vmem:[%s396 + $0x60] sm:$0xf] %vm915, %v3342
      %3414 = vst.msk [vmem:[%s396 + $0x64] sm:$0xf] %vm915, %v3344
      %3415 = vst.msk [vmem:[%s396 + $0x68] sm:$0xf] %vm915, %v3346
      %3416 = vst.msk [vmem:[%s396 + $0x6c] sm:$0xf] %vm915, %v3348
      %3417 = vst.msk [vmem:[%s396 + $0x70] sm:$0xf] %vm915, %v3350
      %3418 = vst.msk [vmem:[%s396 + $0x74] sm:$0xf] %vm915, %v3352
      %3419 = vst.msk [vmem:[%s396 + $0x78] sm:$0xf] %vm915, %v3354
      %3420 = vst.msk [vmem:[%s396 + $0x7c] sm:$0xf] %vm915, %v3356
      %v3421 = vpack.c.bf16 %v2653, %v2653
      %v3422 = vpack.c.bf16 %v2655, %v2655
      %v3423 = vpack.c.bf16 %v2657, %v2657
      %v3424 = vpack.c.bf16 %v2659, %v2659
      %v3425 = vpack.c.bf16 %v2661, %v2661
      %v3426 = vpack.c.bf16 %v2663, %v2663
      %v3427 = vpack.c.bf16 %v2665, %v2665
      %v3428 = vpack.c.bf16 %v2667, %v2667
      %v3429 = vpack.c.bf16 %v2669, %v2669
      %v3430 = vpack.c.bf16 %v2671, %v2671
      %v3431 = vpack.c.bf16 %v2673, %v2673
      %v3432 = vpack.c.bf16 %v2675, %v2675
      %v3433 = vpack.c.bf16 %v2677, %v2677
      %v3434 = vpack.c.bf16 %v2679, %v2679
      %v3435 = vpack.c.bf16 %v2681, %v2681
      %v3436 = vpack.c.bf16 %v2683, %v2683
      %v3453 = vunpack.c.l.b16 %v3421
      %v3454 = vunpack.c.l.b16 %v3422
      %v3455 = vunpack.c.l.b16 %v3423
      %v3456 = vunpack.c.l.b16 %v3424
      %v3457 = vunpack.c.l.b16 %v3425
      %v3458 = vunpack.c.l.b16 %v3426
      %v3459 = vunpack.c.l.b16 %v3427
      %v3460 = vunpack.c.l.b16 %v3428
      %v3461 = vunpack.c.l.b16 %v3429
      %v3462 = vunpack.c.l.b16 %v3430
      %v3463 = vunpack.c.l.b16 %v3431
      %v3464 = vunpack.c.l.b16 %v3432
      %v3465 = vunpack.c.l.b16 %v3433
      %v3466 = vunpack.c.l.b16 %v3434
      %v3467 = vunpack.c.l.b16 %v3435
      %v3468 = vunpack.c.l.b16 %v3436
      %v3469 = vpack.c.b16 %v3453, %v3453
      %v3470 = vpack.c.b16 %v3454, %v3454
      %v3471 = vpack.c.b16 %v3455, %v3455
      %v3472 = vpack.c.b16 %v3456, %v3456
      %v3473 = vpack.c.b16 %v3457, %v3457
      %v3474 = vpack.c.b16 %v3458, %v3458
      %v3475 = vpack.c.b16 %v3459, %v3459
      %v3476 = vpack.c.b16 %v3460, %v3460
      %v3477 = vpack.c.b16 %v3461, %v3461
      %v3478 = vpack.c.b16 %v3462, %v3462
      %v3479 = vpack.c.b16 %v3463, %v3463
      %v3480 = vpack.c.b16 %v3464, %v3464
      %v3481 = vpack.c.b16 %v3465, %v3465
      %v3482 = vpack.c.b16 %v3466, %v3466
      %v3483 = vpack.c.b16 %v3467, %v3467
      %v3484 = vpack.c.b16 %v3468, %v3468
      %v3486 = vshrl.u32 %v3469, 16
      %v3488 = vrot.slane %v3486, 4
      %v3489 = vrot.slane %v3488, 4
      %v3491 = vshrl.u32 %v3470, 16
      %v3493 = vrot.slane %v3491, 4
      %v3494 = vrot.slane %v3493, 4
      %v3496 = vshrl.u32 %v3471, 16
      %v3498 = vrot.slane %v3496, 4
      %v3499 = vrot.slane %v3498, 4
      %v3501 = vshrl.u32 %v3472, 16
      %v3503 = vrot.slane %v3501, 4
      %v3504 = vrot.slane %v3503, 4
      %v3506 = vshrl.u32 %v3473, 16
      %v3508 = vrot.slane %v3506, 4
      %v3509 = vrot.slane %v3508, 4
      %v3511 = vshrl.u32 %v3474, 16
      %v3513 = vrot.slane %v3511, 4
      %v3514 = vrot.slane %v3513, 4
      %v3516 = vshrl.u32 %v3475, 16
      %v3518 = vrot.slane %v3516, 4
      %v3519 = vrot.slane %v3518, 4
      %v3521 = vshrl.u32 %v3476, 16
      %v3523 = vrot.slane %v3521, 4
      %v3524 = vrot.slane %v3523, 4
      %v3526 = vshrl.u32 %v3477, 16
      %v3528 = vrot.slane %v3526, 4
      %v3529 = vrot.slane %v3528, 4
      %v3531 = vshrl.u32 %v3478, 16
      %v3533 = vrot.slane %v3531, 4
      %v3534 = vrot.slane %v3533, 4
      %v3536 = vshrl.u32 %v3479, 16
      %v3538 = vrot.slane %v3536, 4
      %v3539 = vrot.slane %v3538, 4
      %v3541 = vshrl.u32 %v3480, 16
      %v3543 = vrot.slane %v3541, 4
      %v3544 = vrot.slane %v3543, 4
      %v3546 = vshrl.u32 %v3481, 16
      %v3548 = vrot.slane %v3546, 4
      %v3549 = vrot.slane %v3548, 4
      %v3551 = vshrl.u32 %v3482, 16
      %v3553 = vrot.slane %v3551, 4
      %v3554 = vrot.slane %v3553, 4
      %v3556 = vshrl.u32 %v3483, 16
      %v3558 = vrot.slane %v3556, 4
      %v3559 = vrot.slane %v3558, 4
      %v3561 = vshrl.u32 %v3484, 16
      %v3563 = vrot.slane %v3561, 4
      %v3564 = vrot.slane %v3563, 4
      %v3581 = vld [vmem:[%s396] sm:$0x1]
      %v3582 = vsel %vm1110, %v3489, %v3581
      %3583 = vst [vmem:[%s396] sm:$0x1] %v3582
      %v3584 = vld [vmem:[%s396 + $0x8] sm:$0x1]
      %v3585 = vsel %vm1110, %v3494, %v3584
      %3586 = vst [vmem:[%s396 + $0x8] sm:$0x1] %v3585
      %v3587 = vld [vmem:[%s396 + $0x10] sm:$0x1]
      %v3588 = vsel %vm1110, %v3499, %v3587
      %3589 = vst [vmem:[%s396 + $0x10] sm:$0x1] %v3588
      %v3590 = vld [vmem:[%s396 + $0x18] sm:$0x1]
      %v3591 = vsel %vm1110, %v3504, %v3590
      %3592 = vst [vmem:[%s396 + $0x18] sm:$0x1] %v3591
      %v3593 = vld [vmem:[%s396 + $0x20] sm:$0x1]
      %v3594 = vsel %vm1110, %v3509, %v3593
      %3595 = vst [vmem:[%s396 + $0x20] sm:$0x1] %v3594
      %v3596 = vld [vmem:[%s396 + $0x28] sm:$0x1]
      %v3597 = vsel %vm1110, %v3514, %v3596
      %3598 = vst [vmem:[%s396 + $0x28] sm:$0x1] %v3597
      %v3599 = vld [vmem:[%s396 + $0x30] sm:$0x1]
      %v3600 = vsel %vm1110, %v3519, %v3599
      %3601 = vst [vmem:[%s396 + $0x30] sm:$0x1] %v3600
      %v3602 = vld [vmem:[%s396 + $0x38] sm:$0x1]
      %v3603 = vsel %vm1110, %v3524, %v3602
      %3604 = vst [vmem:[%s396 + $0x38] sm:$0x1] %v3603
      %v3605 = vld [vmem:[%s396 + $0x40] sm:$0x1]
      %v3606 = vsel %vm1110, %v3529, %v3605
      %3607 = vst [vmem:[%s396 + $0x40] sm:$0x1] %v3606
      %v3608 = vld [vmem:[%s396 + $0x48] sm:$0x1]
      %v3609 = vsel %vm1110, %v3534, %v3608
      %3610 = vst [vmem:[%s396 + $0x48] sm:$0x1] %v3609
      %v3611 = vld [vmem:[%s396 + $0x50] sm:$0x1]
      %v3612 = vsel %vm1110, %v3539, %v3611
      %3613 = vst [vmem:[%s396 + $0x50] sm:$0x1] %v3612
      %v3614 = vld [vmem:[%s396 + $0x58] sm:$0x1]
      %v3615 = vsel %vm1110, %v3544, %v3614
      %3616 = vst [vmem:[%s396 + $0x58] sm:$0x1] %v3615
      %v3617 = vld [vmem:[%s396 + $0x60] sm:$0x1]
      %v3618 = vsel %vm1110, %v3549, %v3617
      %3619 = vst [vmem:[%s396 + $0x60] sm:$0x1] %v3618
      %v3620 = vld [vmem:[%s396 + $0x68] sm:$0x1]
      %v3621 = vsel %vm1110, %v3554, %v3620
      %3622 = vst [vmem:[%s396 + $0x68] sm:$0x1] %v3621
      %v3623 = vld [vmem:[%s396 + $0x70] sm:$0x1]
      %v3624 = vsel %vm1110, %v3559, %v3623
      %3625 = vst [vmem:[%s396 + $0x70] sm:$0x1] %v3624
      %v3626 = vld [vmem:[%s396 + $0x78] sm:$0x1]
      %v3627 = vsel %vm1110, %v3564, %v3626
      %3628 = vst [vmem:[%s396 + $0x78] sm:$0x1] %v3627
      %v3629 = vpack.c.bf16 %v2654, %v2654
      %v3630 = vpack.c.bf16 %v2656, %v2656
      %v3631 = vpack.c.bf16 %v2658, %v2658
      %v3632 = vpack.c.bf16 %v2660, %v2660
      %v3633 = vpack.c.bf16 %v2662, %v2662
      %v3634 = vpack.c.bf16 %v2664, %v2664
      %v3635 = vpack.c.bf16 %v2666, %v2666
      %v3636 = vpack.c.bf16 %v2668, %v2668
      %v3637 = vpack.c.bf16 %v2670, %v2670
      %v3638 = vpack.c.bf16 %v2672, %v2672
      %v3639 = vpack.c.bf16 %v2674, %v2674
      %v3640 = vpack.c.bf16 %v2676, %v2676
      %v3641 = vpack.c.bf16 %v2678, %v2678
      %v3642 = vpack.c.bf16 %v2680, %v2680
      %v3643 = vpack.c.bf16 %v2682, %v2682
      %v3644 = vpack.c.bf16 %v2684, %v2684
      %v3661 = vunpack.c.l.b16 %v3629
      %v3662 = vunpack.c.l.b16 %v3630
      %v3663 = vunpack.c.l.b16 %v3631
      %v3664 = vunpack.c.l.b16 %v3632
      %v3665 = vunpack.c.l.b16 %v3633
      %v3666 = vunpack.c.l.b16 %v3634
      %v3667 = vunpack.c.l.b16 %v3635
      %v3668 = vunpack.c.l.b16 %v3636
      %v3669 = vunpack.c.l.b16 %v3637
      %v3670 = vunpack.c.l.b16 %v3638
      %v3671 = vunpack.c.l.b16 %v3639
      %v3672 = vunpack.c.l.b16 %v3640
      %v3673 = vunpack.c.l.b16 %v3641
      %v3674 = vunpack.c.l.b16 %v3642
      %v3675 = vunpack.c.l.b16 %v3643
      %v3676 = vunpack.c.l.b16 %v3644
      %v3677 = vpack.c.b16 %v3661, %v3661
      %v3678 = vpack.c.b16 %v3662, %v3662
      %v3679 = vpack.c.b16 %v3663, %v3663
      %v3680 = vpack.c.b16 %v3664, %v3664
      %v3681 = vpack.c.b16 %v3665, %v3665
      %v3682 = vpack.c.b16 %v3666, %v3666
      %v3683 = vpack.c.b16 %v3667, %v3667
      %v3684 = vpack.c.b16 %v3668, %v3668
      %v3685 = vpack.c.b16 %v3669, %v3669
      %v3686 = vpack.c.b16 %v3670, %v3670
      %v3687 = vpack.c.b16 %v3671, %v3671
      %v3688 = vpack.c.b16 %v3672, %v3672
      %v3689 = vpack.c.b16 %v3673, %v3673
      %v3690 = vpack.c.b16 %v3674, %v3674
      %v3691 = vpack.c.b16 %v3675, %v3675
      %v3692 = vpack.c.b16 %v3676, %v3676
      %v3694 = vshll.u32 %v3677, 16
      %v3697 = vshll.u32 %v3678, 16
      %v3700 = vshll.u32 %v3679, 16
      %v3703 = vshll.u32 %v3680, 16
      %v3706 = vshll.u32 %v3681, 16
      %v3709 = vshll.u32 %v3682, 16
      %v3712 = vshll.u32 %v3683, 16
      %v3715 = vshll.u32 %v3684, 16
      %v3718 = vshll.u32 %v3685, 16
      %v3721 = vshll.u32 %v3686, 16
      %v3724 = vshll.u32 %v3687, 16
      %v3727 = vshll.u32 %v3688, 16
      %v3730 = vshll.u32 %v3689, 16
      %v3733 = vshll.u32 %v3690, 16
      %v3736 = vshll.u32 %v3691, 16
      %v3739 = vshll.u32 %v3692, 16
      %3741 = vrot.lane.b32.xlu0 %v3694, 8
      %v3742 = vpop.permute.xlu0 %3741
      %3743 = vrot.lane.b32.xlu0 %v3697, 8
      %v3744 = vpop.permute.xlu0 %3743
      %3745 = vrot.lane.b32.xlu0 %v3700, 8
      %v3746 = vpop.permute.xlu0 %3745
      %3747 = vrot.lane.b32.xlu0 %v3703, 8
      %v3748 = vpop.permute.xlu0 %3747
      %3749 = vrot.lane.b32.xlu0 %v3706, 8
      %v3750 = vpop.permute.xlu0 %3749
      %3751 = vrot.lane.b32.xlu0 %v3709, 8
      %v3752 = vpop.permute.xlu0 %3751
      %3753 = vrot.lane.b32.xlu0 %v3712, 8
      %v3754 = vpop.permute.xlu0 %3753
      %3755 = vrot.lane.b32.xlu0 %v3715, 8
      %v3756 = vpop.permute.xlu0 %3755
      %3757 = vrot.lane.b32.xlu0 %v3718, 8
      %v3758 = vpop.permute.xlu0 %3757
      %3759 = vrot.lane.b32.xlu0 %v3721, 8
      %v3760 = vpop.permute.xlu0 %3759
      %3761 = vrot.lane.b32.xlu0 %v3724, 8
      %v3762 = vpop.permute.xlu0 %3761
      %3763 = vrot.lane.b32.xlu0 %v3727, 8
      %v3764 = vpop.permute.xlu0 %3763
      %3765 = vrot.lane.b32.xlu0 %v3730, 8
      %v3766 = vpop.permute.xlu0 %3765
      %3767 = vrot.lane.b32.xlu0 %v3733, 8
      %v3768 = vpop.permute.xlu0 %3767
      %3769 = vrot.lane.b32.xlu0 %v3736, 8
      %v3770 = vpop.permute.xlu0 %3769
      %3771 = vrot.lane.b32.xlu0 %v3739, 8
      %v3772 = vpop.permute.xlu0 %3771
      %v3789 = vld [vmem:[%s396 + $0x4] sm:$0x8]
      %v3790 = vsel %vm1321, %v3742, %v3789
      %3791 = vst [vmem:[%s396 + $0x4] sm:$0x8] %v3790
      %v3792 = vld [vmem:[%s396 + $0xc] sm:$0x8]
      %v3793 = vsel %vm1321, %v3744, %v3792
      %3794 = vst [vmem:[%s396 + $0xc] sm:$0x8] %v3793
      %v3795 = vld [vmem:[%s396 + $0x14] sm:$0x8]
      %v3796 = vsel %vm1321, %v3746, %v3795
      %3797 = vst [vmem:[%s396 + $0x14] sm:$0x8] %v3796
      %v3798 = vld [vmem:[%s396 + $0x1c] sm:$0x8]
      %v3799 = vsel %vm1321, %v3748, %v3798
      %3800 = vst [vmem:[%s396 + $0x1c] sm:$0x8] %v3799
      %v3801 = vld [vmem:[%s396 + $0x24] sm:$0x8]
      %v3802 = vsel %vm1321, %v3750, %v3801
      %3803 = vst [vmem:[%s396 + $0x24] sm:$0x8] %v3802
      %v3804 = vld [vmem:[%s396 + $0x2c] sm:$0x8]
      %v3805 = vsel %vm1321, %v3752, %v3804
      %3806 = vst [vmem:[%s396 + $0x2c] sm:$0x8] %v3805
      %v3807 = vld [vmem:[%s396 + $0x34] sm:$0x8]
      %v3808 = vsel %vm1321, %v3754, %v3807
      %3809 = vst [vmem:[%s396 + $0x34] sm:$0x8] %v3808
      %v3810 = vld [vmem:[%s396 + $0x3c] sm:$0x8]
      %v3811 = vsel %vm1321, %v3756, %v3810
      %3812 = vst [vmem:[%s396 + $0x3c] sm:$0x8] %v3811
      %v3813 = vld [vmem:[%s396 + $0x44] sm:$0x8]
      %v3814 = vsel %vm1321, %v3758, %v3813
      %3815 = vst [vmem:[%s396 + $0x44] sm:$0x8] %v3814
      %v3816 = vld [vmem:[%s396 + $0x4c] sm:$0x8]
      %v3817 = vsel %vm1321, %v3760, %v3816
      %3818 = vst [vmem:[%s396 + $0x4c] sm:$0x8] %v3817
      %v3819 = vld [vmem:[%s396 + $0x54] sm:$0x8]
      %v3820 = vsel %vm1321, %v3762, %v3819
      %3821 = vst [vmem:[%s396 + $0x54] sm:$0x8] %v3820
      %v3822 = vld [vmem:[%s396 + $0x5c] sm:$0x8]
      %v3823 = vsel %vm1321, %v3764, %v3822
      %3824 = vst [vmem:[%s396 + $0x5c] sm:$0x8] %v3823
      %v3825 = vld [vmem:[%s396 + $0x64] sm:$0x8]
      %v3826 = vsel %vm1321, %v3766, %v3825
      %3827 = vst [vmem:[%s396 + $0x64] sm:$0x8] %v3826
      %v3828 = vld [vmem:[%s396 + $0x6c] sm:$0x8]
      %v3829 = vsel %vm1321, %v3768, %v3828
      %3830 = vst [vmem:[%s396 + $0x6c] sm:$0x8] %v3829
      %v3831 = vld [vmem:[%s396 + $0x74] sm:$0x8]
      %v3832 = vsel %vm1321, %v3770, %v3831
      %3833 = vst [vmem:[%s396 + $0x74] sm:$0x8] %v3832
      %v3834 = vld [vmem:[%s396 + $0x7c] sm:$0x8]
      %v3835 = vsel %vm1321, %v3772, %v3834
      %3836 = vst [vmem:[%s396 + $0x7c] sm:$0x8] %v3835
      %v3837 = vld [vmem:[%s1370] sm:$0xf]
      %v3838 = vld [vmem:[%s1370 + $0x4] sm:$0xf]
      %3839 = vst.msk [vmem:[#allocation2] sm:$0xf] %vm1373, %v3837
      %3840 = vst.msk [vmem:[#allocation2 + $0x4] sm:$0xf] %vm1373, %v3838
      %v3841 = vld [vmem:[%s1376] sm:$0xf]
      %v3842 = vld [vmem:[%s1376 + $0x4] sm:$0xf]
      %3843 = vst.msk [vmem:[%s1379] sm:$0xf] %vm1373, %v3841
      %3844 = vst.msk [vmem:[%s1379 + $0x4] sm:$0xf] %vm1373, %v3842
      %v3845 = vld [vmem:[#allocation2] sm:$0xf]
      %v3846 = vld [vmem:[#allocation2 + $0x4] sm:$0xf]
      %v3847 = vld [vmem:[#allocation2 + $0x8] sm:$0xf]
      %v3848 = vld [vmem:[#allocation2 + $0xc] sm:$0xf]
      %v3849 = vld [vmem:[#allocation2 + $0x10] sm:$0xf]
      %v3850 = vld [vmem:[#allocation2 + $0x14] sm:$0xf]
      %v3851 = vld [vmem:[#allocation2 + $0x18] sm:$0xf]
      %v3852 = vld [vmem:[#allocation2 + $0x1c] sm:$0xf]
      %v3853 = vld [vmem:[#allocation2 + $0x20] sm:$0xf]
      %v3854 = vld [vmem:[#allocation2 + $0x24] sm:$0xf]
      %v3855 = vld [vmem:[#allocation2 + $0x28] sm:$0xf]
      %v3856 = vld [vmem:[#allocation2 + $0x2c] sm:$0xf]
      %v3857 = vld [vmem:[#allocation2 + $0x30] sm:$0xf]
      %v3858 = vld [vmem:[#allocation2 + $0x34] sm:$0xf]
      %v3859 = vld [vmem:[#allocation2 + $0x38] sm:$0xf]
      %v3860 = vld [vmem:[#allocation2 + $0x3c] sm:$0xf]
      %v3861 = vld [vmem:[#allocation2 + $0x40] sm:$0xf]
      %v3862 = vld [vmem:[#allocation2 + $0x44] sm:$0xf]
      %v3863 = vld [vmem:[#allocation2 + $0x48] sm:$0xf]
      %v3864 = vld [vmem:[#allocation2 + $0x4c] sm:$0xf]
      %v3865 = vld [vmem:[#allocation2 + $0x50] sm:$0xf]
      %v3866 = vld [vmem:[#allocation2 + $0x54] sm:$0xf]
      %v3867 = vld [vmem:[#allocation2 + $0x58] sm:$0xf]
      %v3868 = vld [vmem:[#allocation2 + $0x5c] sm:$0xf]
      %v3869 = vld [vmem:[#allocation2 + $0x60] sm:$0xf]
      %v3870 = vld [vmem:[#allocation2 + $0x64] sm:$0xf]
      %v3871 = vld [vmem:[#allocation2 + $0x68] sm:$0xf]
      %v3872 = vld [vmem:[#allocation2 + $0x6c] sm:$0xf]
      %v3873 = vld [vmem:[#allocation2 + $0x70] sm:$0xf]
      %v3874 = vld [vmem:[#allocation2 + $0x74] sm:$0xf]
      %v3875 = vld [vmem:[#allocation2 + $0x78] sm:$0xf]
      %v3876 = vld [vmem:[#allocation2 + $0x7c] sm:$0xf]
      %v3877 = vld [vmem:[%s2] sm:$0xf]
      %v3878 = vld [vmem:[%s2 + $0x4] sm:$0x3]
      %v3879 = vld [vmem:[%s396] sm:$0xf]
      %v3880 = vld [vmem:[%s396 + $0x4] sm:$0xf]
      %v3881 = vld [vmem:[%s396 + $0x8] sm:$0xf]
      %v3882 = vld [vmem:[%s396 + $0xc] sm:$0xf]
      %v3883 = vld [vmem:[%s396 + $0x10] sm:$0xf]
      %v3884 = vld [vmem:[%s396 + $0x14] sm:$0xf]
      %v3885 = vld [vmem:[%s396 + $0x18] sm:$0xf]
      %v3886 = vld [vmem:[%s396 + $0x1c] sm:$0xf]
      %v3887 = vld [vmem:[%s396 + $0x20] sm:$0xf]
      %v3888 = vld [vmem:[%s396 + $0x24] sm:$0xf]
      %v3889 = vld [vmem:[%s396 + $0x28] sm:$0xf]
      %v3890 = vld [vmem:[%s396 + $0x2c] sm:$0xf]
      %v3891 = vld [vmem:[%s396 + $0x30] sm:$0xf]
      %v3892 = vld [vmem:[%s396 + $0x34] sm:$0xf]
      %v3893 = vld [vmem:[%s396 + $0x38] sm:$0xf]
      %v3894 = vld [vmem:[%s396 + $0x3c] sm:$0xf]
      %v3895 = vld [vmem:[%s396 + $0x40] sm:$0xf]
      %v3896 = vld [vmem:[%s396 + $0x44] sm:$0xf]
      %v3897 = vld [vmem:[%s396 + $0x48] sm:$0xf]
      %v3898 = vld [vmem:[%s396 + $0x4c] sm:$0xf]
      %v3899 = vld [vmem:[%s396 + $0x50] sm:$0xf]
      %v3900 = vld [vmem:[%s396 + $0x54] sm:$0xf]
      %v3901 = vld [vmem:[%s396 + $0x58] sm:$0xf]
      %v3902 = vld [vmem:[%s396 + $0x5c] sm:$0xf]
      %v3903 = vld [vmem:[%s396 + $0x60] sm:$0xf]
      %v3904 = vld [vmem:[%s396 + $0x64] sm:$0xf]
      %v3905 = vld [vmem:[%s396 + $0x68] sm:$0xf]
      %v3906 = vld [vmem:[%s396 + $0x6c] sm:$0xf]
      %v3907 = vld [vmem:[%s396 + $0x70] sm:$0xf]
      %v3908 = vld [vmem:[%s396 + $0x74] sm:$0xf]
      %v3909 = vld [vmem:[%s396 + $0x78] sm:$0xf]
      %v3910 = vld [vmem:[%s396 + $0x7c] sm:$0xf]
      %s3911 = scalar_lea.vmem %s2, 8
      %v3912 = vld [vmem:[%s3911] sm:$0xf]
      %v3913 = vld [vmem:[%s3911 + $0x4] sm:$0x3]
      %v3946 = vunpack.c.l.b16 %v3879
      %v3947 = vunpack.c.l.b16 %v3880
      %v3948 = vunpack.c.l.b16 %v3881
      %v3949 = vunpack.c.l.b16 %v3882
      %v3950 = vunpack.c.l.b16 %v3883
      %v3951 = vunpack.c.l.b16 %v3884
      %v3952 = vunpack.c.l.b16 %v3885
      %v3953 = vunpack.c.l.b16 %v3886
      %v3954 = vunpack.c.l.b16 %v3887
      %v3955 = vunpack.c.l.b16 %v3888
      %v3956 = vunpack.c.l.b16 %v3889
      %v3957 = vunpack.c.l.b16 %v3890
      %v3958 = vunpack.c.l.b16 %v3891
      %v3959 = vunpack.c.l.b16 %v3892
      %v3960 = vunpack.c.l.b16 %v3893
      %v3961 = vunpack.c.l.b16 %v3894
      %v3962 = vunpack.c.l.b16 %v3895
      %v3963 = vunpack.c.l.b16 %v3896
      %v3964 = vunpack.c.l.b16 %v3897
      %v3965 = vunpack.c.l.b16 %v3898
      %v3966 = vunpack.c.l.b16 %v3899
      %v3967 = vunpack.c.l.b16 %v3900
      %v3968 = vunpack.c.l.b16 %v3901
      %v3969 = vunpack.c.l.b16 %v3902
      %v3970 = vunpack.c.l.b16 %v3903
      %v3971 = vunpack.c.l.b16 %v3904
      %v3972 = vunpack.c.l.b16 %v3905
      %v3973 = vunpack.c.l.b16 %v3906
      %v3974 = vunpack.c.l.b16 %v3907
      %v3975 = vunpack.c.l.b16 %v3908
      %v3976 = vunpack.c.l.b16 %v3909
      %v3977 = vunpack.c.l.b16 %v3910
      %v3978 = vpack.c.b16 %v3947, %v3946
      %v3979 = vpack.c.b16 %v3949, %v3948
      %v3980 = vpack.c.b16 %v3951, %v3950
      %v3981 = vpack.c.b16 %v3953, %v3952
      %v3982 = vpack.c.b16 %v3955, %v3954
      %v3983 = vpack.c.b16 %v3957, %v3956
      %v3984 = vpack.c.b16 %v3959, %v3958
      %v3985 = vpack.c.b16 %v3961, %v3960
      %v3986 = vpack.c.b16 %v3963, %v3962
      %v3987 = vpack.c.b16 %v3965, %v3964
      %v3988 = vpack.c.b16 %v3967, %v3966
      %v3989 = vpack.c.b16 %v3969, %v3968
      %v3990 = vpack.c.b16 %v3971, %v3970
      %v3991 = vpack.c.b16 %v3973, %v3972
      %v3992 = vpack.c.b16 %v3975, %v3974
      %v3993 = vpack.c.b16 %v3977, %v3976
      %v3996 = vunpack.c.l.b16 %v3912
      %v3997 = vunpack.c.l.b16 %v3913
      %v3998 = vpack.c.b16 %v3997, %v3996
      %v4000 = vsel %vm1536, %v3978, 0
      %v4003 = vsel %vm1536, %v3979, 0
      %v4006 = vsel %vm1536, %v3980, 0
      %v4009 = vsel %vm1536, %v3981, 0
      %v4012 = vsel %vm1536, %v3982, 0
      %v4015 = vsel %vm1536, %v3983, 0
      %v4018 = vsel %vm1536, %v3984, 0
      %v4021 = vsel %vm1536, %v3985, 0
      %v4024 = vsel %vm1536, %v3986, 0
      %v4027 = vsel %vm1536, %v3987, 0
      %v4030 = vsel %vm1536, %v3988, 0
      %v4033 = vsel %vm1536, %v3989, 0
      %v4036 = vsel %vm1536, %v3990, 0
      %v4039 = vsel %vm1536, %v3991, 0
      %v4042 = vsel %vm1536, %v3992, 0
      %v4045 = vsel %vm1536, %v3993, 0
      %v4048 = vsel %vm1585, %v3998, 0
      %4050 = vmatprep.subr.bf16.mxu0 0
      %4051 = vmatpush1.bf16.msra.mxu0 0
      %4052 = vmatprep.subr.bf16.mxu0 0
      %4053 = vmatpush1.bf16.msra.mxu0 0
      %4054 = vmatprep.subr.bf16.mxu0 0
      %4055 = vmatpush1.bf16.msra.mxu0 0
      %4056 = vmatprep.subr.bf16.mxu0 0
      %4057 = vmatpush1.bf16.msra.mxu0 0
      %4058 = vmatprep.subr.bf16.mxu0 0
      %4059 = vmatpush1.bf16.msra.mxu0 0
      %4060 = vmatprep.subr.bf16.mxu0 0
      %4061 = vmatpush1.bf16.msra.mxu0 0
      %4062 = vmatprep.subr.bf16.mxu0 0
      %4063 = vmatpush1.bf16.msra.mxu0 0
      %4064 = vmatprep.subr.bf16.mxu0 0
      %4065 = vmatpush1.bf16.msra.mxu0 %v4048
      %4066 = vmatprep.subr.bf16.mxu0 0
      %4067 = vmatpush2.bf16.msra.mxu0 0
      %4068 = vmatprep.subr.bf16.mxu0 0
      %4069 = vmatpush2.bf16.msra.mxu0 0
      %4070 = vmatprep.subr.bf16.mxu0 0
      %4071 = vmatpush2.bf16.msra.mxu0 0
      %4072 = vmatprep.subr.bf16.mxu0 0
      %4073 = vmatpush2.bf16.msra.mxu0 0
      %4074 = vmatprep.subr.bf16.mxu0 0
      %4075 = vmatpush2.bf16.msra.mxu0 0
      %4076 = vmatprep.subr.bf16.mxu0 0
      %4077 = vmatpush2.bf16.msra.mxu0 0
      %4078 = vmatprep.subr.bf16.mxu0 0
      %4079 = vmatpush2.bf16.msra.mxu0 0
      %4080 = vmatprep.subr.bf16.mxu0 0
      %4081 = vmatpush2.bf16.msra.mxu0 0
      %4082 = vmatprep.mubr.bf16.mxu0 0
      %4083 = vmatmul.mubr.bf16.gmra.mxu0 %v4000
      %v4084 = vpop.f32.mrf.mxu0
      %v4085 = vadd.f32 0.0, %v4084
      %v4086 = vpop.f32.mrf.mxu0
      %v4087 = vpop.f32.mrf.mxu0
      %v4088 = vadd.f32 0.0, %v4087
      %v4089 = vpop.f32.mrf.mxu0
      %4090 = vmatprep.mubr.bf16.mxu0 0
      %4091 = vmatmul.mubr.bf16.gmra.mxu0 %v4003
      %v4092 = vpop.f32.mrf.mxu0
      %v4093 = vadd.f32 0.0, %v4092
      %v4094 = vpop.f32.mrf.mxu0
      %v4095 = vpop.f32.mrf.mxu0
      %v4096 = vadd.f32 0.0, %v4095
      %v4097 = vpop.f32.mrf.mxu0
      %4098 = vmatprep.mubr.bf16.mxu0 0
      %4099 = vmatmul.mubr.bf16.gmra.mxu0 %v4006
      %v4100 = vpop.f32.mrf.mxu0
      %v4101 = vadd.f32 0.0, %v4100
      %v4102 = vpop.f32.mrf.mxu0
      %v4103 = vpop.f32.mrf.mxu0
      %v4104 = vadd.f32 0.0, %v4103
      %v4105 = vpop.f32.mrf.mxu0
      %4106 = vmatprep.mubr.bf16.mxu0 0
      %4107 = vmatmul.mubr.bf16.gmra.mxu0 %v4009
      %v4108 = vpop.f32.mrf.mxu0
      %v4109 = vadd.f32 0.0, %v4108
      %v4110 = vpop.f32.mrf.mxu0
      %v4111 = vpop.f32.mrf.mxu0
      %v4112 = vadd.f32 0.0, %v4111
      %v4113 = vpop.f32.mrf.mxu0
      %4114 = vmatprep.mubr.bf16.mxu0 0
      %4115 = vmatmul.mubr.bf16.gmra.mxu0 %v4012
      %v4116 = vpop.f32.mrf.mxu0
      %v4117 = vadd.f32 0.0, %v4116
      %v4118 = vpop.f32.mrf.mxu0
      %v4119 = vpop.f32.mrf.mxu0
      %v4120 = vadd.f32 0.0, %v4119
      %v4121 = vpop.f32.mrf.mxu0
      %4122 = vmatprep.mubr.bf16.mxu0 0
      %4123 = vmatmul.mubr.bf16.gmra.mxu0 %v4015
      %v4124 = vpop.f32.mrf.mxu0
      %v4125 = vadd.f32 0.0, %v4124
      %v4126 = vpop.f32.mrf.mxu0
      %v4127 = vpop.f32.mrf.mxu0
      %v4128 = vadd.f32 0.0, %v4127
      %v4129 = vpop.f32.mrf.mxu0
      %4130 = vmatprep.mubr.bf16.mxu0 0
      %4131 = vmatmul.mubr.bf16.gmra.mxu0 %v4018
      %v4132 = vpop.f32.mrf.mxu0
      %v4133 = vadd.f32 0.0, %v4132
      %v4134 = vpop.f32.mrf.mxu0
      %v4135 = vpop.f32.mrf.mxu0
      %v4136 = vadd.f32 0.0, %v4135
      %v4137 = vpop.f32.mrf.mxu0
      %4138 = vmatprep.mubr.bf16.mxu0 0
      %4139 = vmatmul.mubr.bf16.gmra.mxu0 %v4021
      %v4140 = vpop.f32.mrf.mxu0
      %v4141 = vadd.f32 0.0, %v4140
      %v4142 = vpop.f32.mrf.mxu0
      %v4143 = vpop.f32.mrf.mxu0
      %v4144 = vadd.f32 0.0, %v4143
      %v4145 = vpop.f32.mrf.mxu0
      %4146 = vmatprep.mubr.bf16.mxu0 0
      %4147 = vmatmul.mubr.bf16.gmra.mxu0 %v4024
      %v4148 = vpop.f32.mrf.mxu0
      %v4149 = vadd.f32 0.0, %v4148
      %v4150 = vpop.f32.mrf.mxu0
      %v4151 = vpop.f32.mrf.mxu0
      %v4152 = vadd.f32 0.0, %v4151
      %v4153 = vpop.f32.mrf.mxu0
      %4154 = vmatprep.mubr.bf16.mxu0 0
      %4155 = vmatmul.mubr.bf16.gmra.mxu0 %v4027
      %v4156 = vpop.f32.mrf.mxu0
      %v4157 = vadd.f32 0.0, %v4156
      %v4158 = vpop.f32.mrf.mxu0
      %v4159 = vpop.f32.mrf.mxu0
      %v4160 = vadd.f32 0.0, %v4159
      %v4161 = vpop.f32.mrf.mxu0
      %4162 = vmatprep.mubr.bf16.mxu0 0
      %4163 = vmatmul.mubr.bf16.gmra.mxu0 %v4030
      %v4164 = vpop.f32.mrf.mxu0
      %v4165 = vadd.f32 0.0, %v4164
      %v4166 = vpop.f32.mrf.mxu0
      %v4167 = vpop.f32.mrf.mxu0
      %v4168 = vadd.f32 0.0, %v4167
      %v4169 = vpop.f32.mrf.mxu0
      %4170 = vmatprep.mubr.bf16.mxu0 0
      %4171 = vmatmul.mubr.bf16.gmra.mxu0 %v4033
      %v4172 = vpop.f32.mrf.mxu0
      %v4173 = vadd.f32 0.0, %v4172
      %v4174 = vpop.f32.mrf.mxu0
      %v4175 = vpop.f32.mrf.mxu0
      %v4176 = vadd.f32 0.0, %v4175
      %v4177 = vpop.f32.mrf.mxu0
      %4178 = vmatprep.mubr.bf16.mxu0 0
      %4179 = vmatmul.mubr.bf16.gmra.mxu0 %v4036
      %v4180 = vpop.f32.mrf.mxu0
      %v4181 = vadd.f32 0.0, %v4180
      %v4182 = vpop.f32.mrf.mxu0
      %v4183 = vpop.f32.mrf.mxu0
      %v4184 = vadd.f32 0.0, %v4183
      %v4185 = vpop.f32.mrf.mxu0
      %4186 = vmatprep.mubr.bf16.mxu0 0
      %4187 = vmatmul.mubr.bf16.gmra.mxu0 %v4039
      %v4188 = vpop.f32.mrf.mxu0
      %v4189 = vadd.f32 0.0, %v4188
      %v4190 = vpop.f32.mrf.mxu0
      %v4191 = vpop.f32.mrf.mxu0
      %v4192 = vadd.f32 0.0, %v4191
      %v4193 = vpop.f32.mrf.mxu0
      %4194 = vmatprep.mubr.bf16.mxu0 0
      %4195 = vmatmul.mubr.bf16.gmra.mxu0 %v4042
      %v4196 = vpop.f32.mrf.mxu0
      %v4197 = vadd.f32 0.0, %v4196
      %v4198 = vpop.f32.mrf.mxu0
      %v4199 = vpop.f32.mrf.mxu0
      %v4200 = vadd.f32 0.0, %v4199
      %v4201 = vpop.f32.mrf.mxu0
      %4202 = vmatprep.mubr.bf16.mxu0 0
      %4203 = vmatmul.mubr.bf16.gmra.mxu0 %v4045
      %v4204 = vpop.f32.mrf.mxu0
      %v4205 = vadd.f32 0.0, %v4204
      %v4206 = vpop.f32.mrf.mxu0
      %v4207 = vpop.f32.mrf.mxu0
      %v4208 = vadd.f32 0.0, %v4207
      %v4209 = vpop.f32.mrf.mxu0
      %4210 = vdwg.mxu0
      %v4243 = vunpack.c.l.b16 %v3845
      %v4244 = vunpack.c.l.b16 %v3846
      %v4245 = vunpack.c.l.b16 %v3847
      %v4246 = vunpack.c.l.b16 %v3848
      %v4247 = vunpack.c.l.b16 %v3849
      %v4248 = vunpack.c.l.b16 %v3850
      %v4249 = vunpack.c.l.b16 %v3851
      %v4250 = vunpack.c.l.b16 %v3852
      %v4251 = vunpack.c.l.b16 %v3853
      %v4252 = vunpack.c.l.b16 %v3854
      %v4253 = vunpack.c.l.b16 %v3855
      %v4254 = vunpack.c.l.b16 %v3856
      %v4255 = vunpack.c.l.b16 %v3857
      %v4256 = vunpack.c.l.b16 %v3858
      %v4257 = vunpack.c.l.b16 %v3859
      %v4258 = vunpack.c.l.b16 %v3860
      %v4259 = vunpack.c.l.b16 %v3861
      %v4260 = vunpack.c.l.b16 %v3862
      %v4261 = vunpack.c.l.b16 %v3863
      %v4262 = vunpack.c.l.b16 %v3864
      %v4263 = vunpack.c.l.b16 %v3865
      %v4264 = vunpack.c.l.b16 %v3866
      %v4265 = vunpack.c.l.b16 %v3867
      %v4266 = vunpack.c.l.b16 %v3868
      %v4267 = vunpack.c.l.b16 %v3869
      %v4268 = vunpack.c.l.b16 %v3870
      %v4269 = vunpack.c.l.b16 %v3871
      %v4270 = vunpack.c.l.b16 %v3872
      %v4271 = vunpack.c.l.b16 %v3873
      %v4272 = vunpack.c.l.b16 %v3874
      %v4273 = vunpack.c.l.b16 %v3875
      %v4274 = vunpack.c.l.b16 %v3876
      %v4275 = vpack.c.b16 %v4244, %v4243
      %v4276 = vpack.c.b16 %v4246, %v4245
      %v4277 = vpack.c.b16 %v4248, %v4247
      %v4278 = vpack.c.b16 %v4250, %v4249
      %v4279 = vpack.c.b16 %v4252, %v4251
      %v4280 = vpack.c.b16 %v4254, %v4253
      %v4281 = vpack.c.b16 %v4256, %v4255
      %v4282 = vpack.c.b16 %v4258, %v4257
      %v4283 = vpack.c.b16 %v4260, %v4259
      %v4284 = vpack.c.b16 %v4262, %v4261
      %v4285 = vpack.c.b16 %v4264, %v4263
      %v4286 = vpack.c.b16 %v4266, %v4265
      %v4287 = vpack.c.b16 %v4268, %v4267
      %v4288 = vpack.c.b16 %v4270, %v4269
      %v4289 = vpack.c.b16 %v4272, %v4271
      %v4290 = vpack.c.b16 %v4274, %v4273
      %v4293 = vunpack.c.l.b16 %v3877
      %v4294 = vunpack.c.l.b16 %v3878
      %v4295 = vpack.c.b16 %v4294, %v4293
      %v4297 = vsel %vm1536, %v4275, 0
      %v4300 = vsel %vm1536, %v4276, 0
      %v4303 = vsel %vm1536, %v4277, 0
      %v4306 = vsel %vm1536, %v4278, 0
      %v4309 = vsel %vm1536, %v4279, 0
      %v4312 = vsel %vm1536, %v4280, 0
      %v4315 = vsel %vm1536, %v4281, 0
      %v4318 = vsel %vm1536, %v4282, 0
      %v4321 = vsel %vm1536, %v4283, 0
      %v4324 = vsel %vm1536, %v4284, 0
      %v4327 = vsel %vm1536, %v4285, 0
      %v4330 = vsel %vm1536, %v4286, 0
      %v4333 = vsel %vm1536, %v4287, 0
      %v4336 = vsel %vm1536, %v4288, 0
      %v4339 = vsel %vm1536, %v4289, 0
      %v4342 = vsel %vm1536, %v4290, 0
      %v4345 = vsel %vm1585, %v4295, 0
      %4347 = vmatprep.subr.bf16.mxu0 0
      %4348 = vmatpush1.bf16.msra.mxu0 0
      %4349 = vmatprep.subr.bf16.mxu0 0
      %4350 = vmatpush1.bf16.msra.mxu0 0
      %4351 = vmatprep.subr.bf16.mxu0 0
      %4352 = vmatpush1.bf16.msra.mxu0 0
      %4353 = vmatprep.subr.bf16.mxu0 0
      %4354 = vmatpush1.bf16.msra.mxu0 0
      %4355 = vmatprep.subr.bf16.mxu0 0
      %4356 = vmatpush1.bf16.msra.mxu0 0
      %4357 = vmatprep.subr.bf16.mxu0 0
      %4358 = vmatpush1.bf16.msra.mxu0 0
      %4359 = vmatprep.subr.bf16.mxu0 0
      %4360 = vmatpush1.bf16.msra.mxu0 0
      %4361 = vmatprep.subr.bf16.mxu0 0
      %4362 = vmatpush1.bf16.msra.mxu0 %v4345
      %4363 = vmatprep.subr.bf16.mxu0 0
      %4364 = vmatpush2.bf16.msra.mxu0 0
      %4365 = vmatprep.subr.bf16.mxu0 0
      %4366 = vmatpush2.bf16.msra.mxu0 0
      %4367 = vmatprep.subr.bf16.mxu0 0
      %4368 = vmatpush2.bf16.msra.mxu0 0
      %4369 = vmatprep.subr.bf16.mxu0 0
      %4370 = vmatpush2.bf16.msra.mxu0 0
      %4371 = vmatprep.subr.bf16.mxu0 0
      %4372 = vmatpush2.bf16.msra.mxu0 0
      %4373 = vmatprep.subr.bf16.mxu0 0
      %4374 = vmatpush2.bf16.msra.mxu0 0
      %4375 = vmatprep.subr.bf16.mxu0 0
      %4376 = vmatpush2.bf16.msra.mxu0 0
      %4377 = vmatprep.subr.bf16.mxu0 0
      %4378 = vmatpush2.bf16.msra.mxu0 0
      %4379 = vmatprep.mubr.bf16.mxu0 0
      %4380 = vmatmul.mubr.bf16.gmra.mxu0 %v4297
      %v4381 = vpop.f32.mrf.mxu0
      %v4382 = vadd.f32 %v4085, %v4381
      %v4383 = vpop.f32.mrf.mxu0
      %v4384 = vpop.f32.mrf.mxu0
      %v4385 = vadd.f32 %v4088, %v4384
      %v4386 = vpop.f32.mrf.mxu0
      %4387 = vmatprep.mubr.bf16.mxu0 0
      %4388 = vmatmul.mubr.bf16.gmra.mxu0 %v4300
      %v4389 = vpop.f32.mrf.mxu0
      %v4390 = vadd.f32 %v4093, %v4389
      %v4391 = vpop.f32.mrf.mxu0
      %v4392 = vpop.f32.mrf.mxu0
      %v4393 = vadd.f32 %v4096, %v4392
      %v4394 = vpop.f32.mrf.mxu0
      %4395 = vmatprep.mubr.bf16.mxu0 0
      %4396 = vmatmul.mubr.bf16.gmra.mxu0 %v4303
      %v4397 = vpop.f32.mrf.mxu0
      %v4398 = vadd.f32 %v4101, %v4397
      %v4399 = vpop.f32.mrf.mxu0
      %v4400 = vpop.f32.mrf.mxu0
      %v4401 = vadd.f32 %v4104, %v4400
      %v4402 = vpop.f32.mrf.mxu0
      %4403 = vmatprep.mubr.bf16.mxu0 0
      %4404 = vmatmul.mubr.bf16.gmra.mxu0 %v4306
      %v4405 = vpop.f32.mrf.mxu0
      %v4406 = vadd.f32 %v4109, %v4405
      %v4407 = vpop.f32.mrf.mxu0
      %v4408 = vpop.f32.mrf.mxu0
      %v4409 = vadd.f32 %v4112, %v4408
      %v4410 = vpop.f32.mrf.mxu0
      %4411 = vmatprep.mubr.bf16.mxu0 0
      %4412 = vmatmul.mubr.bf16.gmra.mxu0 %v4309
      %v4413 = vpop.f32.mrf.mxu0
      %v4414 = vadd.f32 %v4117, %v4413
      %v4415 = vpop.f32.mrf.mxu0
      %v4416 = vpop.f32.mrf.mxu0
      %v4417 = vadd.f32 %v4120, %v4416
      %v4418 = vpop.f32.mrf.mxu0
      %4419 = vmatprep.mubr.bf16.mxu0 0
      %4420 = vmatmul.mubr.bf16.gmra.mxu0 %v4312
      %v4421 = vpop.f32.mrf.mxu0
      %v4422 = vadd.f32 %v4125, %v4421
      %v4423 = vpop.f32.mrf.mxu0
      %v4424 = vpop.f32.mrf.mxu0
      %v4425 = vadd.f32 %v4128, %v4424
      %v4426 = vpop.f32.mrf.mxu0
      %4427 = vmatprep.mubr.bf16.mxu0 0
      %4428 = vmatmul.mubr.bf16.gmra.mxu0 %v4315
      %v4429 = vpop.f32.mrf.mxu0
      %v4430 = vadd.f32 %v4133, %v4429
      %v4431 = vpop.f32.mrf.mxu0
      %v4432 = vpop.f32.mrf.mxu0
      %v4433 = vadd.f32 %v4136, %v4432
      %v4434 = vpop.f32.mrf.mxu0
      %4435 = vmatprep.mubr.bf16.mxu0 0
      %4436 = vmatmul.mubr.bf16.gmra.mxu0 %v4318
      %v4437 = vpop.f32.mrf.mxu0
      %v4438 = vadd.f32 %v4141, %v4437
      %v4439 = vpop.f32.mrf.mxu0
      %v4440 = vpop.f32.mrf.mxu0
      %v4441 = vadd.f32 %v4144, %v4440
      %v4442 = vpop.f32.mrf.mxu0
      %4443 = vmatprep.mubr.bf16.mxu0 0
      %4444 = vmatmul.mubr.bf16.gmra.mxu0 %v4321
      %v4445 = vpop.f32.mrf.mxu0
      %v4446 = vadd.f32 %v4149, %v4445
      %v4447 = vpop.f32.mrf.mxu0
      %v4448 = vpop.f32.mrf.mxu0
      %v4449 = vadd.f32 %v4152, %v4448
      %v4450 = vpop.f32.mrf.mxu0
      %4451 = vmatprep.mubr.bf16.mxu0 0
      %4452 = vmatmul.mubr.bf16.gmra.mxu0 %v4324
      %v4453 = vpop.f32.mrf.mxu0
      %v4454 = vadd.f32 %v4157, %v4453
      %v4455 = vpop.f32.mrf.mxu0
      %v4456 = vpop.f32.mrf.mxu0
      %v4457 = vadd.f32 %v4160, %v4456
      %v4458 = vpop.f32.mrf.mxu0
      %4459 = vmatprep.mubr.bf16.mxu0 0
      %4460 = vmatmul.mubr.bf16.gmra.mxu0 %v4327
      %v4461 = vpop.f32.mrf.mxu0
      %v4462 = vadd.f32 %v4165, %v4461
      %v4463 = vpop.f32.mrf.mxu0
      %v4464 = vpop.f32.mrf.mxu0
      %v4465 = vadd.f32 %v4168, %v4464
      %v4466 = vpop.f32.mrf.mxu0
      %4467 = vmatprep.mubr.bf16.mxu0 0
      %4468 = vmatmul.mubr.bf16.gmra.mxu0 %v4330
      %v4469 = vpop.f32.mrf.mxu0
      %v4470 = vadd.f32 %v4173, %v4469
      %v4471 = vpop.f32.mrf.mxu0
      %v4472 = vpop.f32.mrf.mxu0
      %v4473 = vadd.f32 %v4176, %v4472
      %v4474 = vpop.f32.mrf.mxu0
      %4475 = vmatprep.mubr.bf16.mxu0 0
      %4476 = vmatmul.mubr.bf16.gmra.mxu0 %v4333
      %v4477 = vpop.f32.mrf.mxu0
      %v4478 = vadd.f32 %v4181, %v4477
      %v4479 = vpop.f32.mrf.mxu0
      %v4480 = vpop.f32.mrf.mxu0
      %v4481 = vadd.f32 %v4184, %v4480
      %v4482 = vpop.f32.mrf.mxu0
      %4483 = vmatprep.mubr.bf16.mxu0 0
      %4484 = vmatmul.mubr.bf16.gmra.mxu0 %v4336
      %v4485 = vpop.f32.mrf.mxu0
      %v4486 = vadd.f32 %v4189, %v4485
      %v4487 = vpop.f32.mrf.mxu0
      %v4488 = vpop.f32.mrf.mxu0
      %v4489 = vadd.f32 %v4192, %v4488
      %v4490 = vpop.f32.mrf.mxu0
      %4491 = vmatprep.mubr.bf16.mxu0 0
      %4492 = vmatmul.mubr.bf16.gmra.mxu0 %v4339
      %v4493 = vpop.f32.mrf.mxu0
      %v4494 = vadd.f32 %v4197, %v4493
      %v4495 = vpop.f32.mrf.mxu0
      %v4496 = vpop.f32.mrf.mxu0
      %v4497 = vadd.f32 %v4200, %v4496
      %v4498 = vpop.f32.mrf.mxu0
      %4499 = vmatprep.mubr.bf16.mxu0 0
      %4500 = vmatmul.mubr.bf16.gmra.mxu0 %v4342
      %v4501 = vpop.f32.mrf.mxu0
      %v4502 = vadd.f32 %v4205, %v4501
      %v4503 = vpop.f32.mrf.mxu0
      %v4504 = vpop.f32.mrf.mxu0
      %v4505 = vadd.f32 %v4208, %v4504
      %v4506 = vpop.f32.mrf.mxu0
      %4507 = vdwg.mxu0
      %v4508 = vld [vmem:[%s1370] sm:$0xf]
      %v4509 = vld [vmem:[%s1370 + $0x4] sm:$0xf]
      %v4510 = vld [vmem:[%s1370 + $0x8] sm:$0xf]
      %v4511 = vld [vmem:[%s1370 + $0xc] sm:$0xf]
      %v4512 = vld [vmem:[%s1370 + $0x10] sm:$0xf]
      %v4513 = vld [vmem:[%s1370 + $0x14] sm:$0xf]
      %v4514 = vld [vmem:[%s1370 + $0x18] sm:$0xf]
      %v4515 = vld [vmem:[%s1370 + $0x1c] sm:$0xf]
      %v4516 = vld [vmem:[%s1370 + $0x20] sm:$0xf]
      %v4517 = vld [vmem:[%s1370 + $0x24] sm:$0xf]
      %v4518 = vld [vmem:[%s1370 + $0x28] sm:$0xf]
      %v4519 = vld [vmem:[%s1370 + $0x2c] sm:$0xf]
      %v4520 = vld [vmem:[%s1370 + $0x30] sm:$0xf]
      %v4521 = vld [vmem:[%s1370 + $0x34] sm:$0xf]
      %v4522 = vld [vmem:[%s1370 + $0x38] sm:$0xf]
      %v4523 = vld [vmem:[%s1370 + $0x3c] sm:$0xf]
      %v4524 = vld [vmem:[%s1370 + $0x40] sm:$0xf]
      %v4525 = vld [vmem:[%s1370 + $0x44] sm:$0xf]
      %v4526 = vld [vmem:[%s1370 + $0x48] sm:$0xf]
      %v4527 = vld [vmem:[%s1370 + $0x4c] sm:$0xf]
      %v4528 = vld [vmem:[%s1370 + $0x50] sm:$0xf]
      %v4529 = vld [vmem:[%s1370 + $0x54] sm:$0xf]
      %v4530 = vld [vmem:[%s1370 + $0x58] sm:$0xf]
      %v4531 = vld [vmem:[%s1370 + $0x5c] sm:$0xf]
      %v4532 = vld [vmem:[%s1370 + $0x60] sm:$0xf]
      %v4533 = vld [vmem:[%s1370 + $0x64] sm:$0xf]
      %v4534 = vld [vmem:[%s1370 + $0x68] sm:$0xf]
      %v4535 = vld [vmem:[%s1370 + $0x6c] sm:$0xf]
      %v4536 = vld [vmem:[%s1370 + $0x70] sm:$0xf]
      %v4537 = vld [vmem:[%s1370 + $0x74] sm:$0xf]
      %v4538 = vld [vmem:[%s1370 + $0x78] sm:$0xf]
      %v4539 = vld [vmem:[%s1370 + $0x7c] sm:$0xf]
      %s4540 = scalar_lea.vmem %s2, 16
      %v4541 = vld [vmem:[%s4540] sm:$0xf]
      %v4542 = vld [vmem:[%s4540 + $0x4] sm:$0x3]
      %v4575 = vunpack.c.l.b16 %v4508
      %v4576 = vunpack.c.l.b16 %v4509
      %v4577 = vunpack.c.l.b16 %v4510
      %v4578 = vunpack.c.l.b16 %v4511
      %v4579 = vunpack.c.l.b16 %v4512
      %v4580 = vunpack.c.l.b16 %v4513
      %v4581 = vunpack.c.l.b16 %v4514
      %v4582 = vunpack.c.l.b16 %v4515
      %v4583 = vunpack.c.l.b16 %v4516
      %v4584 = vunpack.c.l.b16 %v4517
      %v4585 = vunpack.c.l.b16 %v4518
      %v4586 = vunpack.c.l.b16 %v4519
      %v4587 = vunpack.c.l.b16 %v4520
      %v4588 = vunpack.c.l.b16 %v4521
      %v4589 = vunpack.c.l.b16 %v4522
      %v4590 = vunpack.c.l.b16 %v4523
      %v4591 = vunpack.c.l.b16 %v4524
      %v4592 = vunpack.c.l.b16 %v4525
      %v4593 = vunpack.c.l.b16 %v4526
      %v4594 = vunpack.c.l.b16 %v4527
      %v4595 = vunpack.c.l.b16 %v4528
      %v4596 = vunpack.c.l.b16 %v4529
      %v4597 = vunpack.c.l.b16 %v4530
      %v4598 = vunpack.c.l.b16 %v4531
      %v4599 = vunpack.c.l.b16 %v4532
      %v4600 = vunpack.c.l.b16 %v4533
      %v4601 = vunpack.c.l.b16 %v4534
      %v4602 = vunpack.c.l.b16 %v4535
      %v4603 = vunpack.c.l.b16 %v4536
      %v4604 = vunpack.c.l.b16 %v4537
      %v4605 = vunpack.c.l.b16 %v4538
      %v4606 = vunpack.c.l.b16 %v4539
      %v4607 = vpack.c.b16 %v4576, %v4575
      %v4608 = vpack.c.b16 %v4578, %v4577
      %v4609 = vpack.c.b16 %v4580, %v4579
      %v4610 = vpack.c.b16 %v4582, %v4581
      %v4611 = vpack.c.b16 %v4584, %v4583
      %v4612 = vpack.c.b16 %v4586, %v4585
      %v4613 = vpack.c.b16 %v4588, %v4587
      %v4614 = vpack.c.b16 %v4590, %v4589
      %v4615 = vpack.c.b16 %v4592, %v4591
      %v4616 = vpack.c.b16 %v4594, %v4593
      %v4617 = vpack.c.b16 %v4596, %v4595
      %v4618 = vpack.c.b16 %v4598, %v4597
      %v4619 = vpack.c.b16 %v4600, %v4599
      %v4620 = vpack.c.b16 %v4602, %v4601
      %v4621 = vpack.c.b16 %v4604, %v4603
      %v4622 = vpack.c.b16 %v4606, %v4605
      %v4625 = vunpack.c.l.b16 %v4541
      %v4626 = vunpack.c.l.b16 %v4542
      %v4627 = vpack.c.b16 %v4626, %v4625
      %v4629 = vsel %vm1536, %v4607, 0
      %v4632 = vsel %vm1536, %v4608, 0
      %v4635 = vsel %vm1536, %v4609, 0
      %v4638 = vsel %vm1536, %v4610, 0
      %v4641 = vsel %vm1536, %v4611, 0
      %v4644 = vsel %vm1536, %v4612, 0
      %v4647 = vsel %vm1536, %v4613, 0
      %v4650 = vsel %vm1536, %v4614, 0
      %v4653 = vsel %vm1536, %v4615, 0
      %v4656 = vsel %vm1536, %v4616, 0
      %v4659 = vsel %vm1536, %v4617, 0
      %v4662 = vsel %vm1536, %v4618, 0
      %v4665 = vsel %vm1536, %v4619, 0
      %v4668 = vsel %vm1536, %v4620, 0
      %v4671 = vsel %vm1536, %v4621, 0
      %v4674 = vsel %vm1536, %v4622, 0
      %v4677 = vsel %vm1585, %v4627, 0
      %4679 = vmatprep.subr.bf16.mxu0 0
      %4680 = vmatpush1.bf16.msra.mxu0 0
      %4681 = vmatprep.subr.bf16.mxu0 0
      %4682 = vmatpush1.bf16.msra.mxu0 0
      %4683 = vmatprep.subr.bf16.mxu0 0
      %4684 = vmatpush1.bf16.msra.mxu0 0
      %4685 = vmatprep.subr.bf16.mxu0 0
      %4686 = vmatpush1.bf16.msra.mxu0 0
      %4687 = vmatprep.subr.bf16.mxu0 0
      %4688 = vmatpush1.bf16.msra.mxu0 0
      %4689 = vmatprep.subr.bf16.mxu0 0
      %4690 = vmatpush1.bf16.msra.mxu0 0
      %4691 = vmatprep.subr.bf16.mxu0 0
      %4692 = vmatpush1.bf16.msra.mxu0 0
      %4693 = vmatprep.subr.bf16.mxu0 0
      %4694 = vmatpush1.bf16.msra.mxu0 %v4677
      %4695 = vmatprep.subr.bf16.mxu0 0
      %4696 = vmatpush2.bf16.msra.mxu0 0
      %4697 = vmatprep.subr.bf16.mxu0 0
      %4698 = vmatpush2.bf16.msra.mxu0 0
      %4699 = vmatprep.subr.bf16.mxu0 0
      %4700 = vmatpush2.bf16.msra.mxu0 0
      %4701 = vmatprep.subr.bf16.mxu0 0
      %4702 = vmatpush2.bf16.msra.mxu0 0
      %4703 = vmatprep.subr.bf16.mxu0 0
      %4704 = vmatpush2.bf16.msra.mxu0 0
      %4705 = vmatprep.subr.bf16.mxu0 0
      %4706 = vmatpush2.bf16.msra.mxu0 0
      %4707 = vmatprep.subr.bf16.mxu0 0
      %4708 = vmatpush2.bf16.msra.mxu0 0
      %4709 = vmatprep.subr.bf16.mxu0 0
      %4710 = vmatpush2.bf16.msra.mxu0 0
      %4711 = vmatprep.mubr.bf16.mxu0 0
      %4712 = vmatmul.mubr.bf16.gmra.mxu0 %v4629
      %v4713 = vpop.f32.mrf.mxu0
      %v4714 = vadd.f32 0.0, %v4713
      %v4715 = vpop.f32.mrf.mxu0
      %v4716 = vpop.f32.mrf.mxu0
      %v4717 = vadd.f32 0.0, %v4716
      %v4718 = vpop.f32.mrf.mxu0
      %4719 = vmatprep.mubr.bf16.mxu0 0
      %4720 = vmatmul.mubr.bf16.gmra.mxu0 %v4632
      %v4721 = vpop.f32.mrf.mxu0
      %v4722 = vadd.f32 0.0, %v4721
      %v4723 = vpop.f32.mrf.mxu0
      %v4724 = vpop.f32.mrf.mxu0
      %v4725 = vadd.f32 0.0, %v4724
      %v4726 = vpop.f32.mrf.mxu0
      %4727 = vmatprep.mubr.bf16.mxu0 0
      %4728 = vmatmul.mubr.bf16.gmra.mxu0 %v4635
      %v4729 = vpop.f32.mrf.mxu0
      %v4730 = vadd.f32 0.0, %v4729
      %v4731 = vpop.f32.mrf.mxu0
      %v4732 = vpop.f32.mrf.mxu0
      %v4733 = vadd.f32 0.0, %v4732
      %v4734 = vpop.f32.mrf.mxu0
      %4735 = vmatprep.mubr.bf16.mxu0 0
      %4736 = vmatmul.mubr.bf16.gmra.mxu0 %v4638
      %v4737 = vpop.f32.mrf.mxu0
      %v4738 = vadd.f32 0.0, %v4737
      %v4739 = vpop.f32.mrf.mxu0
      %v4740 = vpop.f32.mrf.mxu0
      %v4741 = vadd.f32 0.0, %v4740
      %v4742 = vpop.f32.mrf.mxu0
      %4743 = vmatprep.mubr.bf16.mxu0 0
      %4744 = vmatmul.mubr.bf16.gmra.mxu0 %v4641
      %v4745 = vpop.f32.mrf.mxu0
      %v4746 = vadd.f32 0.0, %v4745
      %v4747 = vpop.f32.mrf.mxu0
      %v4748 = vpop.f32.mrf.mxu0
      %v4749 = vadd.f32 0.0, %v4748
      %v4750 = vpop.f32.mrf.mxu0
      %4751 = vmatprep.mubr.bf16.mxu0 0
      %4752 = vmatmul.mubr.bf16.gmra.mxu0 %v4644
      %v4753 = vpop.f32.mrf.mxu0
      %v4754 = vadd.f32 0.0, %v4753
      %v4755 = vpop.f32.mrf.mxu0
      %v4756 = vpop.f32.mrf.mxu0
      %v4757 = vadd.f32 0.0, %v4756
      %v4758 = vpop.f32.mrf.mxu0
      %4759 = vmatprep.mubr.bf16.mxu0 0
      %4760 = vmatmul.mubr.bf16.gmra.mxu0 %v4647
      %v4761 = vpop.f32.mrf.mxu0
      %v4762 = vadd.f32 0.0, %v4761
      %v4763 = vpop.f32.mrf.mxu0
      %v4764 = vpop.f32.mrf.mxu0
      %v4765 = vadd.f32 0.0, %v4764
      %v4766 = vpop.f32.mrf.mxu0
      %4767 = vmatprep.mubr.bf16.mxu0 0
      %4768 = vmatmul.mubr.bf16.gmra.mxu0 %v4650
      %v4769 = vpop.f32.mrf.mxu0
      %v4770 = vadd.f32 0.0, %v4769
      %v4771 = vpop.f32.mrf.mxu0
      %v4772 = vpop.f32.mrf.mxu0
      %v4773 = vadd.f32 0.0, %v4772
      %v4774 = vpop.f32.mrf.mxu0
      %4775 = vmatprep.mubr.bf16.mxu0 0
      %4776 = vmatmul.mubr.bf16.gmra.mxu0 %v4653
      %v4777 = vpop.f32.mrf.mxu0
      %v4778 = vadd.f32 0.0, %v4777
      %v4779 = vpop.f32.mrf.mxu0
      %v4780 = vpop.f32.mrf.mxu0
      %v4781 = vadd.f32 0.0, %v4780
      %v4782 = vpop.f32.mrf.mxu0
      %4783 = vmatprep.mubr.bf16.mxu0 0
      %4784 = vmatmul.mubr.bf16.gmra.mxu0 %v4656
      %v4785 = vpop.f32.mrf.mxu0
      %v4786 = vadd.f32 0.0, %v4785
      %v4787 = vpop.f32.mrf.mxu0
      %v4788 = vpop.f32.mrf.mxu0
      %v4789 = vadd.f32 0.0, %v4788
      %v4790 = vpop.f32.mrf.mxu0
      %4791 = vmatprep.mubr.bf16.mxu0 0
      %4792 = vmatmul.mubr.bf16.gmra.mxu0 %v4659
      %v4793 = vpop.f32.mrf.mxu0
      %v4794 = vadd.f32 0.0, %v4793
      %v4795 = vpop.f32.mrf.mxu0
      %v4796 = vpop.f32.mrf.mxu0
      %v4797 = vadd.f32 0.0, %v4796
      %v4798 = vpop.f32.mrf.mxu0
      %4799 = vmatprep.mubr.bf16.mxu0 0
      %4800 = vmatmul.mubr.bf16.gmra.mxu0 %v4662
      %v4801 = vpop.f32.mrf.mxu0
      %v4802 = vadd.f32 0.0, %v4801
      %v4803 = vpop.f32.mrf.mxu0
      %v4804 = vpop.f32.mrf.mxu0
      %v4805 = vadd.f32 0.0, %v4804
      %v4806 = vpop.f32.mrf.mxu0
      %4807 = vmatprep.mubr.bf16.mxu0 0
      %4808 = vmatmul.mubr.bf16.gmra.mxu0 %v4665
      %v4809 = vpop.f32.mrf.mxu0
      %v4810 = vadd.f32 0.0, %v4809
      %v4811 = vpop.f32.mrf.mxu0
      %v4812 = vpop.f32.mrf.mxu0
      %v4813 = vadd.f32 0.0, %v4812
      %v4814 = vpop.f32.mrf.mxu0
      %4815 = vmatprep.mubr.bf16.mxu0 0
      %4816 = vmatmul.mubr.bf16.gmra.mxu0 %v4668
      %v4817 = vpop.f32.mrf.mxu0
      %v4818 = vadd.f32 0.0, %v4817
      %v4819 = vpop.f32.mrf.mxu0
      %v4820 = vpop.f32.mrf.mxu0
      %v4821 = vadd.f32 0.0, %v4820
      %v4822 = vpop.f32.mrf.mxu0
      %4823 = vmatprep.mubr.bf16.mxu0 0
      %4824 = vmatmul.mubr.bf16.gmra.mxu0 %v4671
      %v4825 = vpop.f32.mrf.mxu0
      %v4826 = vadd.f32 0.0, %v4825
      %v4827 = vpop.f32.mrf.mxu0
      %v4828 = vpop.f32.mrf.mxu0
      %v4829 = vadd.f32 0.0, %v4828
      %v4830 = vpop.f32.mrf.mxu0
      %4831 = vmatprep.mubr.bf16.mxu0 0
      %4832 = vmatmul.mubr.bf16.gmra.mxu0 %v4674
      %v4833 = vpop.f32.mrf.mxu0
      %v4834 = vadd.f32 0.0, %v4833
      %v4835 = vpop.f32.mrf.mxu0
      %v4836 = vpop.f32.mrf.mxu0
      %v4837 = vadd.f32 0.0, %v4836
      %v4838 = vpop.f32.mrf.mxu0
      %4839 = vdwg.mxu0
      %v4840 = vadd.f32 %v4382, %v4714
      %v4841 = vadd.f32 %v4385, %v4717
      %v4842 = vadd.f32 %v4390, %v4722
      %v4843 = vadd.f32 %v4393, %v4725
      %v4844 = vadd.f32 %v4398, %v4730
      %v4845 = vadd.f32 %v4401, %v4733
      %v4846 = vadd.f32 %v4406, %v4738
      %v4847 = vadd.f32 %v4409, %v4741
      %v4848 = vadd.f32 %v4414, %v4746
      %v4849 = vadd.f32 %v4417, %v4749
      %v4850 = vadd.f32 %v4422, %v4754
      %v4851 = vadd.f32 %v4425, %v4757
      %v4852 = vadd.f32 %v4430, %v4762
      %v4853 = vadd.f32 %v4433, %v4765
      %v4854 = vadd.f32 %v4438, %v4770
      %v4855 = vadd.f32 %v4441, %v4773
      %v4856 = vadd.f32 %v4446, %v4778
      %v4857 = vadd.f32 %v4449, %v4781
      %v4858 = vadd.f32 %v4454, %v4786
      %v4859 = vadd.f32 %v4457, %v4789
      %v4860 = vadd.f32 %v4462, %v4794
      %v4861 = vadd.f32 %v4465, %v4797
      %v4862 = vadd.f32 %v4470, %v4802
      %v4863 = vadd.f32 %v4473, %v4805
      %v4864 = vadd.f32 %v4478, %v4810
      %v4865 = vadd.f32 %v4481, %v4813
      %v4866 = vadd.f32 %v4486, %v4818
      %v4867 = vadd.f32 %v4489, %v4821
      %v4868 = vadd.f32 %v4494, %v4826
      %v4869 = vadd.f32 %v4497, %v4829
      %v4870 = vadd.f32 %v4502, %v4834
      %v4871 = vadd.f32 %v4505, %v4837
      %v4872 = vsel %vm2411, %v4840, 0.0
      %v4873 = vsel %vm2411, %v4841, 0.0
      %v4874 = vadd.f32 %v4872, %v4873
      %v4875 = vsel %vm2411, %v4842, 0.0
      %v4876 = vadd.f32 %v4874, %v4875
      %v4877 = vsel %vm2411, %v4843, 0.0
      %v4878 = vadd.f32 %v4876, %v4877
      %v4879 = vsel %vm2411, %v4844, 0.0
      %v4880 = vadd.f32 %v4878, %v4879
      %v4881 = vsel %vm2411, %v4845, 0.0
      %v4882 = vadd.f32 %v4880, %v4881
      %v4883 = vsel %vm2411, %v4846, 0.0
      %v4884 = vadd.f32 %v4882, %v4883
      %v4885 = vsel %vm2411, %v4847, 0.0
      %v4886 = vadd.f32 %v4884, %v4885
      %v4887 = vsel %vm2411, %v4848, 0.0
      %v4888 = vadd.f32 %v4886, %v4887
      %v4889 = vsel %vm2411, %v4849, 0.0
      %v4890 = vadd.f32 %v4888, %v4889
      %v4891 = vsel %vm2411, %v4850, 0.0
      %v4892 = vadd.f32 %v4890, %v4891
      %v4893 = vsel %vm2411, %v4851, 0.0
      %v4894 = vadd.f32 %v4892, %v4893
      %v4895 = vsel %vm2411, %v4852, 0.0
      %v4896 = vadd.f32 %v4894, %v4895
      %v4897 = vsel %vm2411, %v4853, 0.0
      %v4898 = vadd.f32 %v4896, %v4897
      %v4899 = vsel %vm2411, %v4854, 0.0
      %v4900 = vadd.f32 %v4898, %v4899
      %v4901 = vsel %vm2411, %v4855, 0.0
      %v4902 = vadd.f32 %v4900, %v4901
      %v4903 = vsel %vm2411, %v4856, 0.0
      %v4904 = vadd.f32 %v4902, %v4903
      %v4905 = vsel %vm2411, %v4857, 0.0
      %v4906 = vadd.f32 %v4904, %v4905
      %v4907 = vsel %vm2411, %v4858, 0.0
      %v4908 = vadd.f32 %v4906, %v4907
      %v4909 = vsel %vm2411, %v4859, 0.0
      %v4910 = vadd.f32 %v4908, %v4909
      %v4911 = vsel %vm2411, %v4860, 0.0
      %v4912 = vadd.f32 %v4910, %v4911
      %v4913 = vsel %vm2411, %v4861, 0.0
      %v4914 = vadd.f32 %v4912, %v4913
      %v4915 = vsel %vm2411, %v4862, 0.0
      %v4916 = vadd.f32 %v4914, %v4915
      %v4917 = vsel %vm2411, %v4863, 0.0
      %v4918 = vadd.f32 %v4916, %v4917
      %v4919 = vsel %vm2411, %v4864, 0.0
      %v4920 = vadd.f32 %v4918, %v4919
      %v4921 = vsel %vm2411, %v4865, 0.0
      %v4922 = vadd.f32 %v4920, %v4921
      %v4923 = vsel %vm2411, %v4866, 0.0
      %v4924 = vadd.f32 %v4922, %v4923
      %v4925 = vsel %vm2411, %v4867, 0.0
      %v4926 = vadd.f32 %v4924, %v4925
      %v4927 = vsel %vm2411, %v4868, 0.0
      %v4928 = vadd.f32 %v4926, %v4927
      %v4929 = vsel %vm2411, %v4869, 0.0
      %v4930 = vadd.f32 %v4928, %v4929
      %v4931 = vsel %vm2411, %v4870, 0.0
      %v4932 = vadd.f32 %v4930, %v4931
      %v4933 = vsel %vm2411, %v4871, 0.0
      %v4934 = vadd.f32 %v4932, %v4933
      %v4935 = vrot.slane %v4934, 4
      %v4936 = vadd.f32 %v4934, %v4935
      %v4937 = vrot.slane %v4936, 2
      %v4938 = vadd.f32 %v4936, %v4937
      %v4939 = vrot.slane %v4938, 1
      %v4940 = vadd.f32 %v4938, %v4939
      %v4941 = vmul.f32 %v4840, %v4840
      %v4942 = vmul.f32 %v4841, %v4841
      %v4943 = vmul.f32 %v4842, %v4842
      %v4944 = vmul.f32 %v4843, %v4843
      %v4945 = vmul.f32 %v4844, %v4844
      %v4946 = vmul.f32 %v4845, %v4845
      %v4947 = vmul.f32 %v4846, %v4846
      %v4948 = vmul.f32 %v4847, %v4847
      %v4949 = vmul.f32 %v4848, %v4848
      %v4950 = vmul.f32 %v4849, %v4849
      %v4951 = vmul.f32 %v4850, %v4850
      %v4952 = vmul.f32 %v4851, %v4851
      %v4953 = vmul.f32 %v4852, %v4852
      %v4954 = vmul.f32 %v4853, %v4853
      %v4955 = vmul.f32 %v4854, %v4854
      %v4956 = vmul.f32 %v4855, %v4855
      %v4957 = vmul.f32 %v4856, %v4856
      %v4958 = vmul.f32 %v4857, %v4857
      %v4959 = vmul.f32 %v4858, %v4858
      %v4960 = vmul.f32 %v4859, %v4859
      %v4961 = vmul.f32 %v4860, %v4860
      %v4962 = vmul.f32 %v4861, %v4861
      %v4963 = vmul.f32 %v4862, %v4862
      %v4964 = vmul.f32 %v4863, %v4863
      %v4965 = vmul.f32 %v4864, %v4864
      %v4966 = vmul.f32 %v4865, %v4865
      %v4967 = vmul.f32 %v4866, %v4866
      %v4968 = vmul.f32 %v4867, %v4867
      %v4969 = vmul.f32 %v4868, %v4868
      %v4970 = vmul.f32 %v4869, %v4869
      %v4971 = vmul.f32 %v4870, %v4870
      %v4972 = vmul.f32 %v4871, %v4871
      %v4973 = vsel %vm2411, %v4941, 0.0
      %v4974 = vsel %vm2411, %v4942, 0.0
      %v4975 = vadd.f32 %v4973, %v4974
      %v4976 = vsel %vm2411, %v4943, 0.0
      %v4977 = vadd.f32 %v4975, %v4976
      %v4978 = vsel %vm2411, %v4944, 0.0
      %v4979 = vadd.f32 %v4977, %v4978
      %v4980 = vsel %vm2411, %v4945, 0.0
      %v4981 = vadd.f32 %v4979, %v4980
      %v4982 = vsel %vm2411, %v4946, 0.0
      %v4983 = vadd.f32 %v4981, %v4982
      %v4984 = vsel %vm2411, %v4947, 0.0
      %v4985 = vadd.f32 %v4983, %v4984
      %v4986 = vsel %vm2411, %v4948, 0.0
      %v4987 = vadd.f32 %v4985, %v4986
      %v4988 = vsel %vm2411, %v4949, 0.0
      %v4989 = vadd.f32 %v4987, %v4988
      %v4990 = vsel %vm2411, %v4950, 0.0
      %v4991 = vadd.f32 %v4989, %v4990
      %v4992 = vsel %vm2411, %v4951, 0.0
      %v4993 = vadd.f32 %v4991, %v4992
      %v4994 = vsel %vm2411, %v4952, 0.0
      %v4995 = vadd.f32 %v4993, %v4994
      %v4996 = vsel %vm2411, %v4953, 0.0
      %v4997 = vadd.f32 %v4995, %v4996
      %v4998 = vsel %vm2411, %v4954, 0.0
      %v4999 = vadd.f32 %v4997, %v4998
      %v5000 = vsel %vm2411, %v4955, 0.0
      %v5001 = vadd.f32 %v4999, %v5000
      %v5002 = vsel %vm2411, %v4956, 0.0
      %v5003 = vadd.f32 %v5001, %v5002
      %v5004 = vsel %vm2411, %v4957, 0.0
      %v5005 = vadd.f32 %v5003, %v5004
      %v5006 = vsel %vm2411, %v4958, 0.0
      %v5007 = vadd.f32 %v5005, %v5006
      %v5008 = vsel %vm2411, %v4959, 0.0
      %v5009 = vadd.f32 %v5007, %v5008
      %v5010 = vsel %vm2411, %v4960, 0.0
      %v5011 = vadd.f32 %v5009, %v5010
      %v5012 = vsel %vm2411, %v4961, 0.0
      %v5013 = vadd.f32 %v5011, %v5012
      %v5014 = vsel %vm2411, %v4962, 0.0
      %v5015 = vadd.f32 %v5013, %v5014
      %v5016 = vsel %vm2411, %v4963, 0.0
      %v5017 = vadd.f32 %v5015, %v5016
      %v5018 = vsel %vm2411, %v4964, 0.0
      %v5019 = vadd.f32 %v5017, %v5018
      %v5020 = vsel %vm2411, %v4965, 0.0
      %v5021 = vadd.f32 %v5019, %v5020
      %v5022 = vsel %vm2411, %v4966, 0.0
      %v5023 = vadd.f32 %v5021, %v5022
      %v5024 = vsel %vm2411, %v4967, 0.0
      %v5025 = vadd.f32 %v5023, %v5024
      %v5026 = vsel %vm2411, %v4968, 0.0
      %v5027 = vadd.f32 %v5025, %v5026
      %v5028 = vsel %vm2411, %v4969, 0.0
      %v5029 = vadd.f32 %v5027, %v5028
      %v5030 = vsel %vm2411, %v4970, 0.0
      %v5031 = vadd.f32 %v5029, %v5030
      %v5032 = vsel %vm2411, %v4971, 0.0
      %v5033 = vadd.f32 %v5031, %v5032
      %v5034 = vsel %vm2411, %v4972, 0.0
      %v5035 = vadd.f32 %v5033, %v5034
      %v5036 = vrot.slane %v5035, 4
      %v5037 = vadd.f32 %v5035, %v5036
      %v5038 = vrot.slane %v5037, 2
      %v5039 = vadd.f32 %v5037, %v5038
      %v5040 = vrot.slane %v5039, 1
      %v5041 = vadd.f32 %v5039, %v5040
      %v5042 = vmul.f32 %v4940, 0.00390625
      %v5043 = vmul.f32 %v5041, 0.00390625
      %v5044 = vmul.f32 %v5042, %v5042
      %v5045 = vsub.f32 %v5043, %v5044
      %v5046 = vmax.f32 %v5045, 0.0
      %v5047 = vsub.f32 %v4840, %v5042
      %v5048 = vsub.f32 %v4841, %v5042
      %v5049 = vsub.f32 %v4842, %v5042
      %v5050 = vsub.f32 %v4843, %v5042
      %v5051 = vsub.f32 %v4844, %v5042
      %v5052 = vsub.f32 %v4845, %v5042
      %v5053 = vsub.f32 %v4846, %v5042
      %v5054 = vsub.f32 %v4847, %v5042
      %v5055 = vsub.f32 %v4848, %v5042
      %v5056 = vsub.f32 %v4849, %v5042
      %v5057 = vsub.f32 %v4850, %v5042
      %v5058 = vsub.f32 %v4851, %v5042
      %v5059 = vsub.f32 %v4852, %v5042
      %v5060 = vsub.f32 %v4853, %v5042
      %v5061 = vsub.f32 %v4854, %v5042
      %v5062 = vsub.f32 %v4855, %v5042
      %v5063 = vsub.f32 %v4856, %v5042
      %v5064 = vsub.f32 %v4857, %v5042
      %v5065 = vsub.f32 %v4858, %v5042
      %v5066 = vsub.f32 %v4859, %v5042
      %v5067 = vsub.f32 %v4860, %v5042
      %v5068 = vsub.f32 %v4861, %v5042
      %v5069 = vsub.f32 %v4862, %v5042
      %v5070 = vsub.f32 %v4863, %v5042
      %v5071 = vsub.f32 %v4864, %v5042
      %v5072 = vsub.f32 %v4865, %v5042
      %v5073 = vsub.f32 %v4866, %v5042
      %v5074 = vsub.f32 %v4867, %v5042
      %v5075 = vsub.f32 %v4868, %v5042
      %v5076 = vsub.f32 %v4869, %v5042
      %v5077 = vsub.f32 %v4870, %v5042
      %v5078 = vsub.f32 %v4871, %v5042
      %v5079 = vadd.f32 %v5046, 1e-05
      %v5080 = vrsqrt.pop %v5079
      %v5081 = vmul.f32 %v5047, %v5080
      %v5082 = vmul.f32 %v5048, %v5080
      %v5083 = vmul.f32 %v5049, %v5080
      %v5084 = vmul.f32 %v5050, %v5080
      %v5085 = vmul.f32 %v5051, %v5080
      %v5086 = vmul.f32 %v5052, %v5080
      %v5087 = vmul.f32 %v5053, %v5080
      %v5088 = vmul.f32 %v5054, %v5080
      %v5089 = vmul.f32 %v5055, %v5080
      %v5090 = vmul.f32 %v5056, %v5080
      %v5091 = vmul.f32 %v5057, %v5080
      %v5092 = vmul.f32 %v5058, %v5080
      %v5093 = vmul.f32 %v5059, %v5080
      %v5094 = vmul.f32 %v5060, %v5080
      %v5095 = vmul.f32 %v5061, %v5080
      %v5096 = vmul.f32 %v5062, %v5080
      %v5097 = vmul.f32 %v5063, %v5080
      %v5098 = vmul.f32 %v5064, %v5080
      %v5099 = vmul.f32 %v5065, %v5080
      %v5100 = vmul.f32 %v5066, %v5080
      %v5101 = vmul.f32 %v5067, %v5080
      %v5102 = vmul.f32 %v5068, %v5080
      %v5103 = vmul.f32 %v5069, %v5080
      %v5104 = vmul.f32 %v5070, %v5080
      %v5105 = vmul.f32 %v5071, %v5080
      %v5106 = vmul.f32 %v5072, %v5080
      %v5107 = vmul.f32 %v5073, %v5080
      %v5108 = vmul.f32 %v5074, %v5080
      %v5109 = vmul.f32 %v5075, %v5080
      %v5110 = vmul.f32 %v5076, %v5080
      %v5111 = vmul.f32 %v5077, %v5080
      %v5112 = vmul.f32 %v5078, %v5080
      %v5113 = vld [vmem:[%s165] sm:$0xff]
      %v5114 = vld [vmem:[%s165 + $0x8] sm:$0xff]
      %v5115 = vld [vmem:[%s165 + $0x10] sm:$0xff]
      %v5116 = vld [vmem:[%s165 + $0x18] sm:$0xff]
      %v5117 = vld [vmem:[%s165 + $0x20] sm:$0xff]
      %v5118 = vld [vmem:[%s165 + $0x28] sm:$0xff]
      %v5119 = vld [vmem:[%s165 + $0x30] sm:$0xff]
      %v5120 = vld [vmem:[%s165 + $0x38] sm:$0xff]
      %v5121 = vld [vmem:[%s165 + $0x40] sm:$0xff]
      %v5122 = vld [vmem:[%s165 + $0x48] sm:$0xff]
      %v5123 = vld [vmem:[%s165 + $0x50] sm:$0xff]
      %v5124 = vld [vmem:[%s165 + $0x58] sm:$0xff]
      %v5125 = vld [vmem:[%s165 + $0x60] sm:$0xff]
      %v5126 = vld [vmem:[%s165 + $0x68] sm:$0xff]
      %v5127 = vld [vmem:[%s165 + $0x70] sm:$0xff]
      %v5128 = vld [vmem:[%s165 + $0x78] sm:$0xff]
      %v5129 = vld [vmem:[%s165 + $0x80] sm:$0xff]
      %v5130 = vld [vmem:[%s165 + $0x88] sm:$0xff]
      %v5131 = vld [vmem:[%s165 + $0x90] sm:$0xff]
      %v5132 = vld [vmem:[%s165 + $0x98] sm:$0xff]
      %v5133 = vld [vmem:[%s165 + $0xa0] sm:$0xff]
      %v5134 = vld [vmem:[%s165 + $0xa8] sm:$0xff]
      %v5135 = vld [vmem:[%s165 + $0xb0] sm:$0xff]
      %v5136 = vld [vmem:[%s165 + $0xb8] sm:$0xff]
      %v5137 = vld [vmem:[%s165 + $0xc0] sm:$0xff]
      %v5138 = vld [vmem:[%s165 + $0xc8] sm:$0xff]
      %v5139 = vld [vmem:[%s165 + $0xd0] sm:$0xff]
      %v5140 = vld [vmem:[%s165 + $0xd8] sm:$0xff]
      %v5141 = vld [vmem:[%s165 + $0xe0] sm:$0xff]
      %v5142 = vld [vmem:[%s165 + $0xe8] sm:$0xff]
      %v5143 = vld [vmem:[%s165 + $0xf0] sm:$0xff]
      %v5144 = vld [vmem:[%s165 + $0xf8] sm:$0xff]
      %v5145 = vadd.f32 %v5113, %v5081
      %v5146 = vadd.f32 %v5114, %v5082
      %v5147 = vadd.f32 %v5115, %v5083
      %v5148 = vadd.f32 %v5116, %v5084
      %v5149 = vadd.f32 %v5117, %v5085
      %v5150 = vadd.f32 %v5118, %v5086
      %v5151 = vadd.f32 %v5119, %v5087
      %v5152 = vadd.f32 %v5120, %v5088
      %v5153 = vadd.f32 %v5121, %v5089
      %v5154 = vadd.f32 %v5122, %v5090
      %v5155 = vadd.f32 %v5123, %v5091
      %v5156 = vadd.f32 %v5124, %v5092
      %v5157 = vadd.f32 %v5125, %v5093
      %v5158 = vadd.f32 %v5126, %v5094
      %v5159 = vadd.f32 %v5127, %v5095
      %v5160 = vadd.f32 %v5128, %v5096
      %v5161 = vadd.f32 %v5129, %v5097
      %v5162 = vadd.f32 %v5130, %v5098
      %v5163 = vadd.f32 %v5131, %v5099
      %v5164 = vadd.f32 %v5132, %v5100
      %v5165 = vadd.f32 %v5133, %v5101
      %v5166 = vadd.f32 %v5134, %v5102
      %v5167 = vadd.f32 %v5135, %v5103
      %v5168 = vadd.f32 %v5136, %v5104
      %v5169 = vadd.f32 %v5137, %v5105
      %v5170 = vadd.f32 %v5138, %v5106
      %v5171 = vadd.f32 %v5139, %v5107
      %v5172 = vadd.f32 %v5140, %v5108
      %v5173 = vadd.f32 %v5141, %v5109
      %v5174 = vadd.f32 %v5142, %v5110
      %v5175 = vadd.f32 %v5143, %v5111
      %v5176 = vadd.f32 %v5144, %v5112
      %5177 = vst.msk [vmem:[%s170] sm:$0xff] %vm2411, %v5145
      %5178 = vst.msk [vmem:[%s170 + $0x8] sm:$0xff] %vm2411, %v5146
      %5179 = vst.msk [vmem:[%s170 + $0x10] sm:$0xff] %vm2411, %v5147
      %5180 = vst.msk [vmem:[%s170 + $0x18] sm:$0xff] %vm2411, %v5148
      %5181 = vst.msk [vmem:[%s170 + $0x20] sm:$0xff] %vm2411, %v5149
      %5182 = vst.msk [vmem:[%s170 + $0x28] sm:$0xff] %vm2411, %v5150
      %5183 = vst.msk [vmem:[%s170 + $0x30] sm:$0xff] %vm2411, %v5151
      %5184 = vst.msk [vmem:[%s170 + $0x38] sm:$0xff] %vm2411, %v5152
      %5185 = vst.msk [vmem:[%s170 + $0x40] sm:$0xff] %vm2411, %v5153
      %5186 = vst.msk [vmem:[%s170 + $0x48] sm:$0xff] %vm2411, %v5154
      %5187 = vst.msk [vmem:[%s170 + $0x50] sm:$0xff] %vm2411, %v5155
      %5188 = vst.msk [vmem:[%s170 + $0x58] sm:$0xff] %vm2411, %v5156
      %5189 = vst.msk [vmem:[%s170 + $0x60] sm:$0xff] %vm2411, %v5157
      %5190 = vst.msk [vmem:[%s170 + $0x68] sm:$0xff] %vm2411, %v5158
      %5191 = vst.msk [vmem:[%s170 + $0x70] sm:$0xff] %vm2411, %v5159
      %5192 = vst.msk [vmem:[%s170 + $0x78] sm:$0xff] %vm2411, %v5160
      %5193 = vst.msk [vmem:[%s170 + $0x80] sm:$0xff] %vm2411, %v5161
      %5194 = vst.msk [vmem:[%s170 + $0x88] sm:$0xff] %vm2411, %v5162
      %5195 = vst.msk [vmem:[%s170 + $0x90] sm:$0xff] %vm2411, %v5163
      %5196 = vst.msk [vmem:[%s170 + $0x98] sm:$0xff] %vm2411, %v5164
      %5197 = vst.msk [vmem:[%s170 + $0xa0] sm:$0xff] %vm2411, %v5165
      %5198 = vst.msk [vmem:[%s170 + $0xa8] sm:$0xff] %vm2411, %v5166
      %5199 = vst.msk [vmem:[%s170 + $0xb0] sm:$0xff] %vm2411, %v5167
      %5200 = vst.msk [vmem:[%s170 + $0xb8] sm:$0xff] %vm2411, %v5168
      %5201 = vst.msk [vmem:[%s170 + $0xc0] sm:$0xff] %vm2411, %v5169
      %5202 = vst.msk [vmem:[%s170 + $0xc8] sm:$0xff] %vm2411, %v5170
      %5203 = vst.msk [vmem:[%s170 + $0xd0] sm:$0xff] %vm2411, %v5171
      %5204 = vst.msk [vmem:[%s170 + $0xd8] sm:$0xff] %vm2411, %v5172
      %5205 = vst.msk [vmem:[%s170 + $0xe0] sm:$0xff] %vm2411, %v5173
      %5206 = vst.msk [vmem:[%s170 + $0xe8] sm:$0xff] %vm2411, %v5174
      %5207 = vst.msk [vmem:[%s170 + $0xf0] sm:$0xff] %vm2411, %v5175
      %5208 = vst.msk [vmem:[%s170 + $0xf8] sm:$0xff] %vm2411, %v5176
      %p5209 = scmp.lt.s32.totalorder %s14, 1
      %s5210 = scalar_select %p5209, %s14, 1
      %s5211 = smul.addr %s5210, 32
      %s5212 = smul.addr %s5211, 8
      %s5213 = scalar_lea.vmem %s3, %s5212
      // Predicated region
      $region33: #{tpu_custom_call.1} parent=31 // pred_check
        %p5214 = pneg %p100
      $region34: #{tpu_custom_call.1} parent=31 // pred_check_branch
        %5216 = sbr.rel (%p5214) target = $region36
      $region35: #{tpu_custom_call.1} parent=31 // pred_region
        _
      $region36: #{tpu_custom_call.1} parent=31 // pred_fallthru
        _
    $region32: #{tpu_custom_call.1} parent=5 // pred_fallthru
      _
    %p5217 = scmp.le.s32.totalorder 2, %s9
    // Predicated region
    $region37: #{tpu_custom_call.1} parent=5 // pred_check
      %p5218 = pneg %p5217
    $region38: #{tpu_custom_call.1} parent=5 // pred_check_branch
      %5220 = sbr.rel (%p5218) target = $region40
    $region39: #{tpu_custom_call.1} parent=5 // pred_region
      %s5221 = ssub.s32 %s9, 2
      // Predicated region
      $region41: #{tpu_custom_call.1} parent=39 // pred_check
        %p5222 = pneg %p106
      $region42: #{tpu_custom_call.1} parent=39 // pred_check_branch
        %5224 = sbr.rel (%p5222) target = $region44
      $region43: #{tpu_custom_call.1} parent=39 // pred_region
        %p5225 = scmp.lt.s32.totalorder %s15, 1
        %s5226 = scalar_select %p5225, %s15, 1
        %s5227 = smul.addr %s5226, 32
        %s5228 = smul.addr %s5227, 8
        %s5229 = scalar_lea.vmem %s3, %s5228
      $region44: #{tpu_custom_call.1} parent=39 // pred_fallthru
        _
    $region40: #{tpu_custom_call.1} parent=5 // pred_fallthru
      _
  $region6: #{tpu_custom_call.1} parent=0 // loop_footer
    %s13 = sadd.s32 1, %s9
  $region7: #{tpu_custom_call.1} parent=0 // loop_footer_branch
    %8 = sbr.rel target = $region3
  $region8: #{tpu_custom_call.1} parent=0 // loop_exit
    _

</llo_original>
